<compile_context>
chip_gen: v5e
topology: v5e:2x2
jax: 0.10.0
libtpu: 0.0.40
codegen_flags: <defaults>
</compile_context>

<pallas_src>
import functools

import jax
import jax.numpy as jnp
import numpy as np
from jax.experimental import pallas as pl
from jax.experimental.pallas import tpu as pltpu

_LANE = 128
_SUBLANE = 8
_VMEM_LIMIT = 48 * 1024 * 1024   # explicit scoped-VMEM budget, safe on v5e/v6e/v7x


def _round_up(x, m):
    return (x + m - 1) // m * m


# ----------------------------------------------------------------------------
# Pallas kernels
# ----------------------------------------------------------------------------
def _matmul_kernel(x_ref, w_ref, b_ref, o_ref, *, activation):
    """Row-tiled (rt, K) @ (K, N) + b, optional tanh.  Weight/bias stay resident."""
    acc = jnp.dot(x_ref[...], w_ref[...], preferred_element_type=jnp.float32)
    acc = acc + b_ref[...]
    if activation == "tanh":
        acc = jnp.tanh(acc)
    o_ref[...] = acc.astype(o_ref.dtype)


def _bilstm_kernel(lens_ref, gx_ref, whh_ref, out_ref, h_scr, c_scr, *, Tb, n_tb, Hp):
    """Bidirectional LSTM recurrence.

    grid = (2, n_tb): axis 0 = direction (parallel), axis 1 = time blocks (sequential).
    lens_ref: (Bp, 1) int32 sequence lengths (resident, loaded once).
    gx_ref  : (Tb, Bp, 4*Hp) precomputed x @ W_ih + b for this direction/time block.
    whh_ref : (Hp, 4*Hp) recurrent weights of this direction (resident per direction).
    out_ref : (Tb, Bp, Hp) slice of the (Tp, Bp, 2*Hp) output owned by this direction.
    """
    d = pl.program_id(0)          # 0 = forward, 1 = backward
    tb = pl.program_id(1)

    @pl.when(tb == 0)
    def _():
        h_scr[...] = jnp.zeros_like(h_scr)
        c_scr[...] = jnp.zeros_like(c_scr)

    lens = lens_ref[...]                      # (Bp, 1) int32
    # Global time-block index (walked in reverse for the backward direction).
    t_blk = tb + d * (n_tb - 1 - 2 * tb)

    def step(j, carry):
        # Local index inside the block; reversed traversal for the bwd direction.
        local = j + d * (Tb - 1 - 2 * j)
        t = t_blk * Tb + local                # global timestep

        h = h_scr[...]
        c = c_scr[...]
        gates = gx_ref[local] + jnp.dot(h, whh_ref[...],
                                        preferred_element_type=jnp.float32)
        i_g = jax.nn.sigmoid(gates[:, 0 * Hp:1 * Hp])   # 128-aligned gate slices
        f_g = jax.nn.sigmoid(gates[:, 1 * Hp:2 * Hp])
        g_g = jnp.tanh(gates[:, 2 * Hp:3 * Hp])
        o_g = jax.nn.sigmoid(gates[:, 3 * Hp:4 * Hp])
        c_new = f_g * c + i_g * g_g
        h_new = o_g * jnp.tanh(c_new)

        valid = lens > t                      # pack_padded_sequence semantics
        c_scr[...] = jnp.where(valid, c_new, c)
        h_scr[...] = jnp.where(valid, h_new, h)
        out_ref[local] = jnp.where(valid, h_new, 0.0)
        return carry

    jax.lax.fori_loop(0, Tb, step, 0, unroll=True)


# ----------------------------------------------------------------------------
# Pallas wrappers
# ----------------------------------------------------------------------------
def _pallas_matmul(x, w, b, *, activation=None, row_tile=256):
    """(R, K) @ (K, N) + b (+tanh), tiled over rows with a 1-D parallel grid."""
    R, K = x.shape
    N = w.shape[1]
    rt = row_tile if R >= row_tile else R     # R is always a multiple of 8 here
    Rp = _round_up(R, rt)
    if Rp != R:
        x = jnp.pad(x, ((0, Rp - R), (0, 0)))
    out = pl.pallas_call(
        functools.partial(_matmul_kernel, activation=activation),
        out_shape=jax.ShapeDtypeStruct((Rp, N), jnp.float32),
        grid_spec=pltpu.PrefetchScalarGridSpec(
            num_scalar_prefetch=0,
            grid=(Rp // rt,),
            in_specs=[
                pl.BlockSpec((rt, K), lambda i: (i, 0)),
                pl.BlockSpec((K, N), lambda i: (0, 0)),    # resident weight
                pl.BlockSpec((1, N), lambda i: (0, 0)),    # resident bias
            ],
            out_specs=pl.BlockSpec((rt, N), lambda i: (i, 0)),
        ),
        compiler_params=pltpu.CompilerParams(
            dimension_semantics=("parallel",),
            vmem_limit_bytes=_VMEM_LIMIT),
    )(x, w, b)
    return out if Rp == R else out[:R]


def _bilstm(lens_vec, gates_x, whh_cat, *, time_block):
    """Fused fwd+bwd LSTM over time-major gates_x: (Tp, Bp, 8*Hp) -> (Tp, Bp, 2*Hp)."""
    Tp, Bp, eight_hp = gates_x.shape
    Hp = eight_hp // 8
    Tb = time_block
    n_tb = Tp // Tb

    def t_map(d, tb):          # time-block index, reversed for the bwd direction
        return tb + d * (n_tb - 1 - 2 * tb)

    return pl.pallas_call(
        functools.partial(_bilstm_kernel, Tb=Tb, n_tb=n_tb, Hp=Hp),
        out_shape=jax.ShapeDtypeStruct((Tp, Bp, 2 * Hp), jnp.float32),
        grid_spec=pltpu.PrefetchScalarGridSpec(
            num_scalar_prefetch=0,
            grid=(2, n_tb),
            in_specs=[
                pl.BlockSpec((Bp, 1), lambda d, tb: (0, 0)),                    # ilens
                pl.BlockSpec((Tb, Bp, 4 * Hp), lambda d, tb: (t_map(d, tb), 0, d)),
                pl.BlockSpec((Hp, 4 * Hp), lambda d, tb: (0, d)),               # W_hh
            ],
            out_specs=pl.BlockSpec((Tb, Bp, Hp), lambda d, tb: (t_map(d, tb), 0, d)),
            scratch_shapes=[pltpu.VMEM((Bp, Hp), jnp.float32),   # h
                            pltpu.VMEM((Bp, Hp), jnp.float32)],  # c
        ),
        compiler_params=pltpu.CompilerParams(
            dimension_semantics=("parallel", "arbitrary"),
            vmem_limit_bytes=_VMEM_LIMIT),
    )(lens_vec, gates_x, whh_cat)


def encoder_forward(packed, xs, ilens, *, hdim, time_block=8):
    """Encoder.forward for etype='blstm'.  xs: (B, T, idim), ilens: (B,) int32."""
    B, T, _ = xs.shape
    Hp = packed["layers"][0]["whh"].shape[0]
    Bp = _round_up(B, _SUBLANE)
    Tb = time_block
    Tp = _round_up(T, Tb)

    x = jnp.transpose(xs.astype(jnp.float32), (1, 0, 2))         # (T, B, idim)
    x = jnp.pad(x, ((0, Tp - T), (0, Bp - B), (0, 0)))           # (Tp, Bp, idim)
    lens_vec = jnp.pad(ilens.astype(jnp.int32), (0, Bp - B)).reshape(Bp, 1)

    for layer in packed["layers"]:
        # Hoisted input projection for BOTH directions in one big matmul.
        gx = _pallas_matmul(x.reshape(Tp * Bp, x.shape[-1]), layer["wih"], layer["b"])
        gx = gx.reshape(Tp, Bp, 8 * Hp)
        # Recurrent part: only h @ W_hh remains in the time loop.
        x = _bilstm(lens_vec, gx, layer["whh"], time_block=Tb)   # (Tp, Bp, 2*Hp)

    proj = _pallas_matmul(x.reshape(Tp * Bp, 2 * Hp),
                          packed["proj_w"], packed["proj_b"], activation="tanh")
    proj = proj.reshape(Tp, Bp, -1).transpose(1, 0, 2)           # (Bp, Tp, Hout_p)
    return proj[:B, :T, :hdim], ilens


# ----------------------------------------------------------------------------
# Parameter preparation (done once): pad H to a multiple of 128 (gate-block
# aligned), pre-transpose, fold biases, and concatenate fwd/bwd weights.
# ----------------------------------------------------------------------------
def prepare_params(raw, idim, cdim, hdim):
    H = cdim
    Hp = _round_up(H, _LANE)
    Hout_p = _round_up(hdim, _LANE)

    def pad_gate_rows(w):                      # (4H, X) -> (4Hp, X), per-gate padding
        w4 = w.reshape(4, H, w.shape[-1])
        return jnp.pad(w4, ((0, 0), (0, Hp - H), (0, 0))).reshape(4 * Hp, -1)

    packed = {"layers": []}
    for l, layer in enumerate(raw["lstm"]):
        wih_l, whh_l, b_l = [], [], []
        for d in ("fwd", "bwd"):
            p = layer[d]
            w_ih = p["w_ih"]                                        # (4H, Din)
            if l > 0:                                               # Din = 2H -> 2Hp
                w_ih = w_ih.reshape(4 * H, 2, H)
                w_ih = jnp.pad(w_ih, ((0, 0), (0, 0), (0, Hp - H))).reshape(4 * H, 2 * Hp)
            w_ih = pad_gate_rows(w_ih)                              # (4Hp, Din_p)
            w_hh = jnp.pad(pad_gate_rows(p["w_hh"]), ((0, 0), (0, Hp - H)))  # (4Hp, Hp)
            bias = jnp.pad((p["b_ih"] + p["b_hh"]).reshape(4, H),
                           ((0, 0), (0, Hp - H))).reshape(4 * Hp)
            wih_l.append(w_ih.T)                                    # (Din_p, 4Hp)
            whh_l.append(w_hh.T)                                    # (Hp, 4Hp)
            b_l.append(bias)
        packed["layers"].append(dict(
            wih=jnp.concatenate(wih_l, axis=1),                     # (Din_p, 8Hp)
            whh=jnp.concatenate(whh_l, axis=1),                     # (Hp, 8Hp)
            b=jnp.concatenate(b_l)[None, :],                        # (1, 8Hp)
        ))

    w = raw["l_last"]["w"].reshape(hdim, 2, H)                      # (hdim, 2H)
    w = jnp.pad(w, ((0, 0), (0, 0), (0, Hp - H))).reshape(hdim, 2 * Hp)
    packed["proj_w"] = jnp.pad(w.T, ((0, 0), (0, Hout_p - hdim)))   # (2Hp, Hout_p)
    packed["proj_b"] = jnp.pad(raw["l_last"]["b"], (0, Hout_p - hdim))[None, :]
    return packed


# ----------------------------------------------------------------------------
# Deterministic raw parameters (same shapes as torch.nn.LSTM / Linear)
# ----------------------------------------------------------------------------
def init_params(key, idim, elayers, cdim, hdim):
    params = {"lstm": []}
    k = key
    for l in range(elayers):
        din = idim if l == 0 else 2 * cdim
        bound = 1.0 / np.sqrt(cdim)
        layer = {}
        for d in ("fwd", "bwd"):
            k, k1, k2, k3, k4 = jax.random.split(k, 5)
            layer[d] = dict(
                w_ih=jax.random.uniform(k1, (4 * cdim, din), jnp.float32, -bound, bound),
                w_hh=jax.random.uniform(k2, (4 * cdim, cdim), jnp.float32, -bound, bound),
                b_ih=jax.random.uniform(k3, (4 * cdim,), jnp.float32, -bound, bound),
                b_hh=jax.random.uniform(k4, (4 * cdim,), jnp.float32, -bound, bound),
            )
        params["lstm"].append(layer)
    k, k1, k2 = jax.random.split(k, 3)
    bound = 1.0 / np.sqrt(2 * cdim)
    params["l_last"] = dict(
        w=jax.random.uniform(k1, (hdim, 2 * cdim), jnp.float32, -bound, bound),
        b=jax.random.uniform(k2, (hdim,), jnp.float32, -bound, bound),
    )
    return params


# ----------------------------------------------------------------------------
# Pure-JAX reference (explicit python loop over time) for checking
# ----------------------------------------------------------------------------
def encoder_reference(params, xs, ilens):
    B, T, _ = xs.shape
    x = jnp.transpose(xs, (1, 0, 2)).astype(jnp.float32)
    mask = (jnp.arange(T)[:, None] < ilens[None, :]).astype(jnp.float32)[:, :, None]
    H = params["lstm"][0]["fwd"]["w_hh"].shape[1]

    def run_dir(xin, p, rev):
        order = range(T - 1, -1, -1) if rev else range(T)
        h = jnp.zeros((B, H)); c = jnp.zeros((B, H))
        out = [None] * T
        for t in order:
            gates = xin[t] @ p["w_ih"].T + h @ p["w_hh"].T + p["b_ih"] + p["b_hh"]
            i = jax.nn.sigmoid(gates[:, :H]); f = jax.nn.sigmoid(gates[:, H:2 * H])
            g = jnp.tanh(gates[:, 2 * H:3 * H]); o = jax.nn.sigmoid(gates[:, 3 * H:])
            c_new = f * c + i * g; h_new = o * jnp.tanh(c_new)
            m = mask[t]
            c = m * c_new + (1 - m) * c
            h = m * h_new + (1 - m) * h
            out[t] = m * h_new
        return jnp.stack(out, axis=0)

    for layer in params["lstm"]:
        x = jnp.concatenate([run_dir(x, layer["fwd"], False),
                             run_dir(x, layer["bwd"], True)], axis=-1)
    y = jnp.transpose(x, (1, 0, 2)).reshape(B * T, -1)
    proj = jnp.tanh(y @ params["l_last"]["w"].T + params["l_last"]["b"])
    return proj.reshape(B, T, -1), ilens


if __name__ == "__main__":
    # Encoder(etype='blstm', idim=8, elayers=2, eunits=16, eprojs=32, ...)
    # TODO(synk): only the etype='blstm' path is implemented (no CNN/VGG/BLSTMP front-ends).
    B, T, idim = 2, 8, 8
    elayers, eunits, eprojs = 2, 16, 32

    key = jax.random.PRNGKey(0)
    kp, kx = jax.random.split(key)
    raw = init_params(kp, idim, elayers, eunits, eprojs)
    xs = jax.random.normal(kx, (B, T, idim), jnp.float32)
    # pack_padded_sequence requires lengths sorted descending; max length == T.
    ilens = jnp.array([T, 6], dtype=jnp.int32)

    packed = prepare_params(raw, idim, eunits, eprojs)
    fwd = jax.jit(functools.partial(encoder_forward, hdim=eprojs, time_block=8))
    out, olens = fwd(packed, xs, ilens)
    out = jax.block_until_ready(out)

    ref, _ = encoder_reference(raw, xs, ilens)
    assert out.shape == (B, T, eprojs)
    np.testing.assert_allclose(np.asarray(out), np.asarray(ref), rtol=1e-4, atol=1e-4)
    print("KERNEL_OK")
</pallas_src>

<mosaic_0001>
module attributes {stable_mosaic.version = 11 : i64} {
  func.func @_bilstm_kernel(%arg0: i32, %arg1: i32, %arg2: memref<8x1xi32, #tpu.memory_space<vmem>>, %arg3: memref<8x8x512xf32, #tpu.memory_space<vmem>>, %arg4: memref<128x512xf32, #tpu.memory_space<vmem>>, %arg5: memref<8x8x128xf32, #tpu.memory_space<vmem>>, %arg6: memref<8x128xf32, #tpu.memory_space<vmem>>, %arg7: memref<8x128xf32, #tpu.memory_space<vmem>>) attributes {dimension_semantics = [#tpu.dimension_semantics<parallel>, #tpu.dimension_semantics<arbitrary>], iteration_bounds = array<i64: 2, 1>, scalar_prefetch = 0 : i64, scratch_operands = 2 : i64, tpu.core_type = #tpu.core_type<tc>, window_params = [{pipeline_mode = #tpu.pipeline_mode<synchronous>, transform_indices = @transform_0, window_bounds = array<i64: 8, 1>}, {transform_indices = @transform_1, window_bounds = array<i64: 8, 8, 512>}, {transform_indices = @transform_2, window_bounds = array<i64: 128, 512>}, {transform_indices = @transform_3, window_bounds = array<i64: 8, 8, 128>}]} {
    %c0_i32 = arith.constant 0 : i32
    %0 = arith.cmpi eq, %arg1, %c0_i32 : i32
    %1 = arith.extui %0 : i1 to i32
    %c0_i32_0 = arith.constant 0 : i32
    %2 = arith.cmpi ne, %1, %c0_i32_0 : i32
    scf.if %2 {
      %cst_180 = arith.constant 0.000000e+00 : f32
      %464 = vector.broadcast %cst_180 : f32 to vector<8x128xf32>
      %c0_181 = arith.constant 0 : index
      %c0_182 = arith.constant 0 : index
      %465 = vector.load %arg6[%c0_181, %c0_182] : memref<8x128xf32, #tpu.memory_space<vmem>>, vector<8x128xf32>
      tpu.vector_store %arg6[%c0_181, %c0_182], %464 {strides = array<i32>} : memref<8x128xf32, #tpu.memory_space<vmem>>, vector<8x128xf32>,
      %cst_183 = arith.constant 0.000000e+00 : f32
      %466 = vector.broadcast %cst_183 : f32 to vector<8x128xf32>
      %c0_184 = arith.constant 0 : index
      %c0_185 = arith.constant 0 : index
      %467 = vector.load %arg7[%c0_184, %c0_185] : memref<8x128xf32, #tpu.memory_space<vmem>>, vector<8x128xf32>
      tpu.vector_store %arg7[%c0_184, %c0_185], %466 {strides = array<i32>} : memref<8x128xf32, #tpu.memory_space<vmem>>, vector<8x128xf32>,
    } else {
    }
    %c0 = arith.constant 0 : index
    %c0_1 = arith.constant 0 : index
    %3 = vector.load %arg2[%c0, %c0_1] : memref<8x1xi32, #tpu.memory_space<vmem>>, vector<8x1xi32>
    %c2_i32 = arith.constant 2 : i32
    %4 = arith.muli %c2_i32, %arg1 : i32
    %c0_i32_2 = arith.constant 0 : i32
    %5 = arith.subi %c0_i32_2, %4 : i32
    %6 = arith.muli %arg0, %5 : i32
    %7 = arith.addi %arg1, %6 : i32
    %c0_i32_3 = arith.constant 0 : i32
    %c2_i32_4 = arith.constant 2 : i32
    %8 = arith.muli %c2_i32_4, %c0_i32_3 : i32
    %c7_i32 = arith.constant 7 : i32
    %9 = arith.subi %c7_i32, %8 : i32
    %10 = arith.muli %arg0, %9 : i32
    %11 = arith.addi %c0_i32_3, %10 : i32
    %c8_i32 = arith.constant 8 : i32
    %12 = arith.muli %7, %c8_i32 : i32
    %13 = arith.addi %12, %11 : i32
    %c0_5 = arith.constant 0 : index
    %c0_6 = arith.constant 0 : index
    %14 = vector.load %arg6[%c0_5, %c0_6] : memref<8x128xf32, #tpu.memory_space<vmem>>, vector<8x128xf32>
    %c0_7 = arith.constant 0 : index
    %c0_8 = arith.constant 0 : index
    %15 = vector.load %arg7[%c0_7, %c0_8] : memref<8x128xf32, #tpu.memory_space<vmem>>, vector<8x128xf32>
    %16 = arith.index_cast %11 : i32 to index
    %c0_9 = arith.constant 0 : index
    %c0_10 = arith.constant 0 : index
    %17 = vector.load %arg3[%16, %c0_9, %c0_10] : memref<8x8x512xf32, #tpu.memory_space<vmem>>, vector<1x8x512xf32>
    %18 = vector.shape_cast %17 : vector<1x8x512xf32> to vector<8x512xf32>
    %c0_11 = arith.constant 0 : index
    %c0_12 = arith.constant 0 : index
    %19 = vector.load %arg4[%c0_11, %c0_12] : memref<128x512xf32, #tpu.memory_space<vmem>>, vector<128x512xf32>
    %cst = arith.constant dense<0.000000e+00> : vector<8x512xf32>
    %20 = tpu.matmul %14, %19, %cst {dimension_numbers = #tpu.dot_dimension_numbers<[1], [0], [0], [1], [0, 0, 1, 1], [], []>} : vector<8x128xf32>, vector<128x512xf32>, vector<8x512xf32> -> vector<8x512xf32>
    %21 = arith.addf %18, %20 : vector<8x512xf32>
    %22 = vector.extract_strided_slice %21 {offsets = [0, 0], sizes = [8, 128], strides = [1, 1]} : vector<8x512xf32> to vector<8x128xf32>
    %23 = arith.negf %22 : vector<8x128xf32>
    %24 = math.exp %23 : vector<8x128xf32>
    %cst_13 = arith.constant 1.000000e+00 : f32
    %25 = vector.broadcast %cst_13 : f32 to vector<8x128xf32>
    %26 = arith.addf %25, %24 : vector<8x128xf32>
    %27 = arith.divf %25, %26 : vector<8x128xf32>
    %28 = vector.extract_strided_slice %21 {offsets = [0, 128], sizes = [8, 128], strides = [1, 1]} : vector<8x512xf32> to vector<8x128xf32>
    %29 = arith.negf %28 : vector<8x128xf32>
    %30 = math.exp %29 : vector<8x128xf32>
    %cst_14 = arith.constant 1.000000e+00 : f32
    %31 = vector.broadcast %cst_14 : f32 to vector<8x128xf32>
    %32 = arith.addf %31, %30 : vector<8x128xf32>
    %33 = arith.divf %31, %32 : vector<8x128xf32>
    %34 = vector.extract_strided_slice %21 {offsets = [0, 256], sizes = [8, 128], strides = [1, 1]} : vector<8x512xf32> to vector<8x128xf32>
    %35 = math.tanh %34 : vector<8x128xf32>
    %36 = vector.extract_strided_slice %21 {offsets = [0, 384], sizes = [8, 128], strides = [1, 1]} : vector<8x512xf32> to vector<8x128xf32>
    %37 = arith.negf %36 : vector<8x128xf32>
    %38 = math.exp %37 : vector<8x128xf32>
    %cst_15 = arith.constant 1.000000e+00 : f32
    %39 = vector.broadcast %cst_15 : f32 to vector<8x128xf32>
    %40 = arith.addf %39, %38 : vector<8x128xf32>
    %41 = arith.divf %39, %40 : vector<8x128xf32>
    %42 = arith.mulf %33, %15 : vector<8x128xf32>
    %43 = arith.mulf %27, %35 : vector<8x128xf32>
    %44 = arith.addf %42, %43 : vector<8x128xf32>
    %45 = math.tanh %44 : vector<8x128xf32>
    %46 = arith.mulf %41, %45 : vector<8x128xf32>
    %47 = vector.broadcast %13 : i32 to vector<8x1xi32>
    %48 = arith.cmpi sgt, %3, %47 : vector<8x1xi32>
    %49 = vector.shape_cast %48 : vector<8x1xi1> to vector<8x1xi1>
    %50 = vector.broadcast %49 : vector<8x1xi1> to vector<8x128xi1>
    %51 = arith.select %50, %44, %15 : vector<8x128xi1>, vector<8x128xf32>
    %c0_16 = arith.constant 0 : index
    %c0_17 = arith.constant 0 : index
    %52 = vector.load %arg7[%c0_16, %c0_17] : memref<8x128xf32, #tpu.memory_space<vmem>>, vector<8x128xf32>
    tpu.vector_store %arg7[%c0_16, %c0_17], %51 {strides = array<i32>} : memref<8x128xf32, #tpu.memory_space<vmem>>, vector<8x128xf32>,
    %53 = vector.shape_cast %48 : vector<8x1xi1> to vector<8x1xi1>
    %54 = vector.broadcast %53 : vector<8x1xi1> to vector<8x128xi1>
    %55 = arith.select %54, %46, %14 : vector<8x128xi1>, vector<8x128xf32>
    %c0_18 = arith.constant 0 : index
    %c0_19 = arith.constant 0 : index
    %56 = vector.load %arg6[%c0_18, %c0_19] : memref<8x128xf32, #tpu.memory_space<vmem>>, vector<8x128xf32>
    tpu.vector_store %arg6[%c0_18, %c0_19], %55 {strides = array<i32>} : memref<8x128xf32, #tpu.memory_space<vmem>>, vector<8x128xf32>,
    %cst_20 = arith.constant 0.000000e+00 : f32
    %57 = vector.shape_cast %48 : vector<8x1xi1> to vector<8x1xi1>
    %58 = vector.broadcast %57 : vector<8x1xi1> to vector<8x128xi1>
    %59 = vector.broadcast %cst_20 : f32 to vector<8x128xf32>
    %60 = arith.select %58, %46, %59 : vector<8x128xi1>, vector<8x128xf32>
    %61 = arith.index_cast %11 : i32 to index
    %c0_21 = arith.constant 0 : index
    %c0_22 = arith.constant 0 : index
    %62 = vector.load %arg5[%61, %c0_21, %c0_22] : memref<8x8x128xf32, #tpu.memory_space<vmem>>, vector<1x8x128xf32>
    %63 = vector.shape_cast %62 : vector<1x8x128xf32> to vector<8x128xf32>
    %64 = vector.shape_cast %60 : vector<8x128xf32> to vector<1x8x128xf32>
    tpu.vector_store %arg5[%61, %c0_21, %c0_22], %64 {strides = array<i32>} : memref<8x8x128xf32, #tpu.memory_space<vmem>>, vector<1x8x128xf32>,
    %c1_i32 = arith.constant 1 : i32
    %c2_i32_23 = arith.constant 2 : i32
    %65 = arith.muli %c2_i32_23, %c1_i32 : i32
    %c7_i32_24 = arith.constant 7 : i32
    %66 = arith.subi %c7_i32_24, %65 : i32
    %67 = arith.muli %arg0, %66 : i32
    %68 = arith.addi %c1_i32, %67 : i32
    %c8_i32_25 = arith.constant 8 : i32
    %69 = arith.muli %7, %c8_i32_25 : i32
    %70 = arith.addi %69, %68 : i32
    %c0_26 = arith.constant 0 : index
    %c0_27 = arith.constant 0 : index
    %71 = vector.load %arg6[%c0_26, %c0_27] : memref<8x128xf32, #tpu.memory_space<vmem>>, vector<8x128xf32>
    %c0_28 = arith.constant 0 : index
    %c0_29 = arith.constant 0 : index
    %72 = vector.load %arg7[%c0_28, %c0_29] : memref<8x128xf32, #tpu.memory_space<vmem>>, vector<8x128xf32>
    %73 = arith.index_cast %68 : i32 to index
    %c0_30 = arith.constant 0 : index
    %c0_31 = arith.constant 0 : index
    %74 = vector.load %arg3[%73, %c0_30, %c0_31] : memref<8x8x512xf32, #tpu.memory_space<vmem>>, vector<1x8x512xf32>
    %75 = vector.shape_cast %74 : vector<1x8x512xf32> to vector<8x512xf32>
    %c0_32 = arith.constant 0 : index
    %c0_33 = arith.constant 0 : index
    %76 = vector.load %arg4[%c0_32, %c0_33] : memref<128x512xf32, #tpu.memory_space<vmem>>, vector<128x512xf32>
    %cst_34 = arith.constant dense<0.000000e+00> : vector<8x512xf32>
    %77 = tpu.matmul %71, %76, %cst_34 {dimension_numbers = #tpu.dot_dimension_numbers<[1], [0], [0], [1], [0, 0, 1, 1], [], []>} : vector<8x128xf32>, vector<128x512xf32>, vector<8x512xf32> -> vector<8x512xf32>
    %78 = arith.addf %75, %77 : vector<8x512xf32>
    %79 = vector.extract_strided_slice %78 {offsets = [0, 0], sizes = [8, 128], strides = [1, 1]} : vector<8x512xf32> to vector<8x128xf32>
    %80 = arith.negf %79 : vector<8x128xf32>
    %81 = math.exp %80 : vector<8x128xf32>
    %cst_35 = arith.constant 1.000000e+00 : f32
    %82 = vector.broadcast %cst_35 : f32 to vector<8x128xf32>
    %83 = arith.addf %82, %81 : vector<8x128xf32>
    %84 = arith.divf %82, %83 : vector<8x128xf32>
    %85 = vector.extract_strided_slice %78 {offsets = [0, 128], sizes = [8, 128], strides = [1, 1]} : vector<8x512xf32> to vector<8x128xf32>
    %86 = arith.negf %85 : vector<8x128xf32>
    %87 = math.exp %86 : vector<8x128xf32>
    %cst_36 = arith.constant 1.000000e+00 : f32
    %88 = vector.broadcast %cst_36 : f32 to vector<8x128xf32>
    %89 = arith.addf %88, %87 : vector<8x128xf32>
    %90 = arith.divf %88, %89 : vector<8x128xf32>
    %91 = vector.extract_strided_slice %78 {offsets = [0, 256], sizes = [8, 128], strides = [1, 1]} : vector<8x512xf32> to vector<8x128xf32>
    %92 = math.tanh %91 : vector<8x128xf32>
    %93 = vector.extract_strided_slice %78 {offsets = [0, 384], sizes = [8, 128], strides = [1, 1]} : vector<8x512xf32> to vector<8x128xf32>
    %94 = arith.negf %93 : vector<8x128xf32>
    %95 = math.exp %94 : vector<8x128xf32>
    %cst_37 = arith.constant 1.000000e+00 : f32
    %96 = vector.broadcast %cst_37 : f32 to vector<8x128xf32>
    %97 = arith.addf %96, %95 : vector<8x128xf32>
    %98 = arith.divf %96, %97 : vector<8x128xf32>
    %99 = arith.mulf %90, %72 : vector<8x128xf32>
    %100 = arith.mulf %84, %92 : vector<8x128xf32>
    %101 = arith.addf %99, %100 : vector<8x128xf32>
    %102 = math.tanh %101 : vector<8x128xf32>
    %103 = arith.mulf %98, %102 : vector<8x128xf32>
    %104 = vector.broadcast %70 : i32 to vector<8x1xi32>
    %105 = arith.cmpi sgt, %3, %104 : vector<8x1xi32>
    %106 = vector.shape_cast %105 : vector<8x1xi1> to vector<8x1xi1>
    %107 = vector.broadcast %106 : vector<8x1xi1> to vector<8x128xi1>
    %108 = arith.select %107, %101, %72 : vector<8x128xi1>, vector<8x128xf32>
    %c0_38 = arith.constant 0 : index
    %c0_39 = arith.constant 0 : index
    %109 = vector.load %arg7[%c0_38, %c0_39] : memref<8x128xf32, #tpu.memory_space<vmem>>, vector<8x128xf32>
    tpu.vector_store %arg7[%c0_38, %c0_39], %108 {strides = array<i32>} : memref<8x128xf32, #tpu.memory_space<vmem>>, vector<8x128xf32>,
    %110 = vector.shape_cast %105 : vector<8x1xi1> to vector<8x1xi1>
    %111 = vector.broadcast %110 : vector<8x1xi1> to vector<8x128xi1>
    %112 = arith.select %111, %103, %71 : vector<8x128xi1>, vector<8x128xf32>
    %c0_40 = arith.constant 0 : index
    %c0_41 = arith.constant 0 : index
    %113 = vector.load %arg6[%c0_40, %c0_41] : memref<8x128xf32, #tpu.memory_space<vmem>>, vector<8x128xf32>
    tpu.vector_store %arg6[%c0_40, %c0_41], %112 {strides = array<i32>} : memref<8x128xf32, #tpu.memory_space<vmem>>, vector<8x128xf32>,
    %cst_42 = arith.constant 0.000000e+00 : f32
    %114 = vector.shape_cast %105 : vector<8x1xi1> to vector<8x1xi1>
    %115 = vector.broadcast %114 : vector<8x1xi1> to vector<8x128xi1>
    %116 = vector.broadcast %cst_42 : f32 to vector<8x128xf32>
    %117 = arith.select %115, %103, %116 : vector<8x128xi1>, vector<8x128xf32>
    %118 = arith.index_cast %68 : i32 to index
    %c0_43 = arith.constant 0 : index
    %c0_44 = arith.constant 0 : index
    %119 = vector.load %arg5[%118, %c0_43, %c0_44] : memref<8x8x128xf32, #tpu.memory_space<vmem>>, vector<1x8x128xf32>
    %120 = vector.shape_cast %119 : vector<1x8x128xf32> to vector<8x128xf32>
    %121 = vector.shape_cast %117 : vector<8x128xf32> to vector<1x8x128xf32>
    tpu.vector_store %arg5[%118, %c0_43, %c0_44], %121 {strides = array<i32>} : memref<8x8x128xf32, #tpu.memory_space<vmem>>, vector<1x8x128xf32>,
    %c2_i32_45 = arith.constant 2 : i32
    %c2_i32_46 = arith.constant 2 : i32
    %122 = arith.muli %c2_i32_46, %c2_i32_45 : i32
    %c7_i32_47 = arith.constant 7 : i32
    %123 = arith.subi %c7_i32_47, %122 : i32
    %124 = arith.muli %arg0, %123 : i32
    %125 = arith.addi %c2_i32_45, %124 : i32
    %c8_i32_48 = arith.constant 8 : i32
    %126 = arith.muli %7, %c8_i32_48 : i32
    %127 = arith.addi %126, %125 : i32
    %c0_49 = arith.constant 0 : index
    %c0_50 = arith.constant 0 : index
    %128 = vector.load %arg6[%c0_49, %c0_50] : memref<8x128xf32, #tpu.memory_space<vmem>>, vector<8x128xf32>
    %c0_51 = arith.constant 0 : index
    %c0_52 = arith.constant 0 : index
    %129 = vector.load %arg7[%c0_51, %c0_52] : memref<8x128xf32, #tpu.memory_space<vmem>>, vector<8x128xf32>
    %130 = arith.index_cast %125 : i32 to index
    %c0_53 = arith.constant 0 : index
    %c0_54 = arith.constant 0 : index
    %131 = vector.load %arg3[%130, %c0_53, %c0_54] : memref<8x8x512xf32, #tpu.memory_space<vmem>>, vector<1x8x512xf32>
    %132 = vector.shape_cast %131 : vector<1x8x512xf32> to vector<8x512xf32>
    %c0_55 = arith.constant 0 : index
    %c0_56 = arith.constant 0 : index
    %133 = vector.load %arg4[%c0_55, %c0_56] : memref<128x512xf32, #tpu.memory_space<vmem>>, vector<128x512xf32>
    %cst_57 = arith.constant dense<0.000000e+00> : vector<8x512xf32>
    %134 = tpu.matmul %128, %133, %cst_57 {dimension_numbers = #tpu.dot_dimension_numbers<[1], [0], [0], [1], [0, 0, 1, 1], [], []>} : vector<8x128xf32>, vector<128x512xf32>, vector<8x512xf32> -> vector<8x512xf32>
    %135 = arith.addf %132, %134 : vector<8x512xf32>
    %136 = vector.extract_strided_slice %135 {offsets = [0, 0], sizes = [8, 128], strides = [1, 1]} : vector<8x512xf32> to vector<8x128xf32>
    %137 = arith.negf %136 : vector<8x128xf32>
    %138 = math.exp %137 : vector<8x128xf32>
    %cst_58 = arith.constant 1.000000e+00 : f32
    %139 = vector.broadcast %cst_58 : f32 to vector<8x128xf32>
    %140 = arith.addf %139, %138 : vector<8x128xf32>
    %141 = arith.divf %139, %140 : vector<8x128xf32>
    %142 = vector.extract_strided_slice %135 {offsets = [0, 128], sizes = [8, 128], strides = [1, 1]} : vector<8x512xf32> to vector<8x128xf32>
    %143 = arith.negf %142 : vector<8x128xf32>
    %144 = math.exp %143 : vector<8x128xf32>
    %cst_59 = arith.constant 1.000000e+00 : f32
    %145 = vector.broadcast %cst_59 : f32 to vector<8x128xf32>
    %146 = arith.addf %145, %144 : vector<8x128xf32>
    %147 = arith.divf %145, %146 : vector<8x128xf32>
    %148 = vector.extract_strided_slice %135 {offsets = [0, 256], sizes = [8, 128], strides = [1, 1]} : vector<8x512xf32> to vector<8x128xf32>
    %149 = math.tanh %148 : vector<8x128xf32>
    %150 = vector.extract_strided_slice %135 {offsets = [0, 384], sizes = [8, 128], strides = [1, 1]} : vector<8x512xf32> to vector<8x128xf32>
    %151 = arith.negf %150 : vector<8x128xf32>
    %152 = math.exp %151 : vector<8x128xf32>
    %cst_60 = arith.constant 1.000000e+00 : f32
    %153 = vector.broadcast %cst_60 : f32 to vector<8x128xf32>
    %154 = arith.addf %153, %152 : vector<8x128xf32>
    %155 = arith.divf %153, %154 : vector<8x128xf32>
    %156 = arith.mulf %147, %129 : vector<8x128xf32>
    %157 = arith.mulf %141, %149 : vector<8x128xf32>
    %158 = arith.addf %156, %157 : vector<8x128xf32>
    %159 = math.tanh %158 : vector<8x128xf32>
    %160 = arith.mulf %155, %159 : vector<8x128xf32>
    %161 = vector.broadcast %127 : i32 to vector<8x1xi32>
    %162 = arith.cmpi sgt, %3, %161 : vector<8x1xi32>
    %163 = vector.shape_cast %162 : vector<8x1xi1> to vector<8x1xi1>
    %164 = vector.broadcast %163 : vector<8x1xi1> to vector<8x128xi1>
    %165 = arith.select %164, %158, %129 : vector<8x128xi1>, vector<8x128xf32>
    %c0_61 = arith.constant 0 : index
    %c0_62 = arith.constant 0 : index
    %166 = vector.load %arg7[%c0_61, %c0_62] : memref<8x128xf32, #tpu.memory_space<vmem>>, vector<8x128xf32>
    tpu.vector_store %arg7[%c0_61, %c0_62], %165 {strides = array<i32>} : memref<8x128xf32, #tpu.memory_space<vmem>>, vector<8x128xf32>,
    %167 = vector.shape_cast %162 : vector<8x1xi1> to vector<8x1xi1>
    %168 = vector.broadcast %167 : vector<8x1xi1> to vector<8x128xi1>
    %169 = arith.select %168, %160, %128 : vector<8x128xi1>, vector<8x128xf32>
    %c0_63 = arith.constant 0 : index
    %c0_64 = arith.constant 0 : index
    %170 = vector.load %arg6[%c0_63, %c0_64] : memref<8x128xf32, #tpu.memory_space<vmem>>, vector<8x128xf32>
    tpu.vector_store %arg6[%c0_63, %c0_64], %169 {strides = array<i32>} : memref<8x128xf32, #tpu.memory_space<vmem>>, vector<8x128xf32>,
    %cst_65 = arith.constant 0.000000e+00 : f32
    %171 = vector.shape_cast %162 : vector<8x1xi1> to vector<8x1xi1>
    %172 = vector.broadcast %171 : vector<8x1xi1> to vector<8x128xi1>
    %173 = vector.broadcast %cst_65 : f32 to vector<8x128xf32>
    %174 = arith.select %172, %160, %173 : vector<8x128xi1>, vector<8x128xf32>
    %175 = arith.index_cast %125 : i32 to index
    %c0_66 = arith.constant 0 : index
    %c0_67 = arith.constant 0 : index
    %176 = vector.load %arg5[%175, %c0_66, %c0_67] : memref<8x8x128xf32, #tpu.memory_space<vmem>>, vector<1x8x128xf32>
    %177 = vector.shape_cast %176 : vector<1x8x128xf32> to vector<8x128xf32>
    %178 = vector.shape_cast %174 : vector<8x128xf32> to vector<1x8x128xf32>
    tpu.vector_store %arg5[%175, %c0_66, %c0_67], %178 {strides = array<i32>} : memref<8x8x128xf32, #tpu.memory_space<vmem>>, vector<1x8x128xf32>,
    %c3_i32 = arith.constant 3 : i32
    %c2_i32_68 = arith.constant 2 : i32
    %179 = arith.muli %c2_i32_68, %c3_i32 : i32
    %c7_i32_69 = arith.constant 7 : i32
    %180 = arith.subi %c7_i32_69, %179 : i32
    %181 = arith.muli %arg0, %180 : i32
    %182 = arith.addi %c3_i32, %181 : i32
    %c8_i32_70 = arith.constant 8 : i32
    %183 = arith.muli %7, %c8_i32_70 : i32
    %184 = arith.addi %183, %182 : i32
    %c0_71 = arith.constant 0 : index
    %c0_72 = arith.constant 0 : index
    %185 = vector.load %arg6[%c0_71, %c0_72] : memref<8x128xf32, #tpu.memory_space<vmem>>, vector<8x128xf32>
    %c0_73 = arith.constant 0 : index
    %c0_74 = arith.constant 0 : index
    %186 = vector.load %arg7[%c0_73, %c0_74] : memref<8x128xf32, #tpu.memory_space<vmem>>, vector<8x128xf32>
    %187 = arith.index_cast %182 : i32 to index
    %c0_75 = arith.constant 0 : index
    %c0_76 = arith.constant 0 : index
    %188 = vector.load %arg3[%187, %c0_75, %c0_76] : memref<8x8x512xf32, #tpu.memory_space<vmem>>, vector<1x8x512xf32>
    %189 = vector.shape_cast %188 : vector<1x8x512xf32> to vector<8x512xf32>
    %c0_77 = arith.constant 0 : index
    %c0_78 = arith.constant 0 : index
    %190 = vector.load %arg4[%c0_77, %c0_78] : memref<128x512xf32, #tpu.memory_space<vmem>>, vector<128x512xf32>
    %cst_79 = arith.constant dense<0.000000e+00> : vector<8x512xf32>
    %191 = tpu.matmul %185, %190, %cst_79 {dimension_numbers = #tpu.dot_dimension_numbers<[1], [0], [0], [1], [0, 0, 1, 1], [], []>} : vector<8x128xf32>, vector<128x512xf32>, vector<8x512xf32> -> vector<8x512xf32>
    %192 = arith.addf %189, %191 : vector<8x512xf32>
    %193 = vector.extract_strided_slice %192 {offsets = [0, 0], sizes = [8, 128], strides = [1, 1]} : vector<8x512xf32> to vector<8x128xf32>
    %194 = arith.negf %193 : vector<8x128xf32>
    %195 = math.exp %194 : vector<8x128xf32>
    %cst_80 = arith.constant 1.000000e+00 : f32
    %196 = vector.broadcast %cst_80 : f32 to vector<8x128xf32>
    %197 = arith.addf %196, %195 : vector<8x128xf32>
    %198 = arith.divf %196, %197 : vector<8x128xf32>
    %199 = vector.extract_strided_slice %192 {offsets = [0, 128], sizes = [8, 128], strides = [1, 1]} : vector<8x512xf32> to vector<8x128xf32>
    %200 = arith.negf %199 : vector<8x128xf32>
    %201 = math.exp %200 : vector<8x128xf32>
    %cst_81 = arith.constant 1.000000e+00 : f32
    %202 = vector.broadcast %cst_81 : f32 to vector<8x128xf32>
    %203 = arith.addf %202, %201 : vector<8x128xf32>
    %204 = arith.divf %202, %203 : vector<8x128xf32>
    %205 = vector.extract_strided_slice %192 {offsets = [0, 256], sizes = [8, 128], strides = [1, 1]} : vector<8x512xf32> to vector<8x128xf32>
    %206 = math.tanh %205 : vector<8x128xf32>
    %207 = vector.extract_strided_slice %192 {offsets = [0, 384], sizes = [8, 128], strides = [1, 1]} : vector<8x512xf32> to vector<8x128xf32>
    %208 = arith.negf %207 : vector<8x128xf32>
    %209 = math.exp %208 : vector<8x128xf32>
    %cst_82 = arith.constant 1.000000e+00 : f32
    %210 = vector.broadcast %cst_82 : f32 to vector<8x128xf32>
    %211 = arith.addf %210, %209 : vector<8x128xf32>
    %212 = arith.divf %210, %211 : vector<8x128xf32>
    %213 = arith.mulf %204, %186 : vector<8x128xf32>
    %214 = arith.mulf %198, %206 : vector<8x128xf32>
    %215 = arith.addf %213, %214 : vector<8x128xf32>
    %216 = math.tanh %215 : vector<8x128xf32>
    %217 = arith.mulf %212, %216 : vector<8x128xf32>
    %218 = vector.broadcast %184 : i32 to vector<8x1xi32>
    %219 = arith.cmpi sgt, %3, %218 : vector<8x1xi32>
    %220 = vector.shape_cast %219 : vector<8x1xi1> to vector<8x1xi1>
    %221 = vector.broadcast %220 : vector<8x1xi1> to vector<8x128xi1>
    %222 = arith.select %221, %215, %186 : vector<8x128xi1>, vector<8x128xf32>
    %c0_83 = arith.constant 0 : index
    %c0_84 = arith.constant 0 : index
    %223 = vector.load %arg7[%c0_83, %c0_84] : memref<8x128xf32, #tpu.memory_space<vmem>>, vector<8x128xf32>
    tpu.vector_store %arg7[%c0_83, %c0_84], %222 {strides = array<i32>} : memref<8x128xf32, #tpu.memory_space<vmem>>, vector<8x128xf32>,
    %224 = vector.shape_cast %219 : vector<8x1xi1> to vector<8x1xi1>
    %225 = vector.broadcast %224 : vector<8x1xi1> to vector<8x128xi1>
    %226 = arith.select %225, %217, %185 : vector<8x128xi1>, vector<8x128xf32>
    %c0_85 = arith.constant 0 : index
    %c0_86 = arith.constant 0 : index
    %227 = vector.load %arg6[%c0_85, %c0_86] : memref<8x128xf32, #tpu.memory_space<vmem>>, vector<8x128xf32>
    tpu.vector_store %arg6[%c0_85, %c0_86], %226 {strides = array<i32>} : memref<8x128xf32, #tpu.memory_space<vmem>>, vector<8x128xf32>,
    %cst_87 = arith.constant 0.000000e+00 : f32
    %228 = vector.shape_cast %219 : vector<8x1xi1> to vector<8x1xi1>
    %229 = vector.broadcast %228 : vector<8x1xi1> to vector<8x128xi1>
    %230 = vector.broadcast %cst_87 : f32 to vector<8x128xf32>
    %231 = arith.select %229, %217, %230 : vector<8x128xi1>, vector<8x128xf32>
    %232 = arith.index_cast %182 : i32 to index
    %c0_88 = arith.constant 0 : index
    %c0_89 = arith.constant 0 : index
    %233 = vector.load %arg5[%232, %c0_88, %c0_89] : memref<8x8x128xf32, #tpu.memory_space<vmem>>, vector<1x8x128xf32>
    %234 = vector.shape_cast %233 : vector<1x8x128xf32> to vector<8x128xf32>
    %235 = vector.shape_cast %231 : vector<8x128xf32> to vector<1x8x128xf32>
    tpu.vector_store %arg5[%232, %c0_88, %c0_89], %235 {strides = array<i32>} : memref<8x8x128xf32, #tpu.memory_space<vmem>>, vector<1x8x128xf32>,
    %c4_i32 = arith.constant 4 : i32
    %c2_i32_90 = arith.constant 2 : i32
    %236 = arith.muli %c2_i32_90, %c4_i32 : i32
    %c7_i32_91 = arith.constant 7 : i32
    %237 = arith.subi %c7_i32_91, %236 : i32
    %238 = arith.muli %arg0, %237 : i32
    %239 = arith.addi %c4_i32, %238 : i32
    %c8_i32_92 = arith.constant 8 : i32
    %240 = arith.muli %7, %c8_i32_92 : i32
    %241 = arith.addi %240, %239 : i32
    %c0_93 = arith.constant 0 : index
    %c0_94 = arith.constant 0 : index
    %242 = vector.load %arg6[%c0_93, %c0_94] : memref<8x128xf32, #tpu.memory_space<vmem>>, vector<8x128xf32>
    %c0_95 = arith.constant 0 : index
    %c0_96 = arith.constant 0 : index
    %243 = vector.load %arg7[%c0_95, %c0_96] : memref<8x128xf32, #tpu.memory_space<vmem>>, vector<8x128xf32>
    %244 = arith.index_cast %239 : i32 to index
    %c0_97 = arith.constant 0 : index
    %c0_98 = arith.constant 0 : index
    %245 = vector.load %arg3[%244, %c0_97, %c0_98] : memref<8x8x512xf32, #tpu.memory_space<vmem>>, vector<1x8x512xf32>
    %246 = vector.shape_cast %245 : vector<1x8x512xf32> to vector<8x512xf32>
    %c0_99 = arith.constant 0 : index
    %c0_100 = arith.constant 0 : index
    %247 = vector.load %arg4[%c0_99, %c0_100] : memref<128x512xf32, #tpu.memory_space<vmem>>, vector<128x512xf32>
    %cst_101 = arith.constant dense<0.000000e+00> : vector<8x512xf32>
    %248 = tpu.matmul %242, %247, %cst_101 {dimension_numbers = #tpu.dot_dimension_numbers<[1], [0], [0], [1], [0, 0, 1, 1], [], []>} : vector<8x128xf32>, vector<128x512xf32>, vector<8x512xf32> -> vector<8x512xf32>
    %249 = arith.addf %246, %248 : vector<8x512xf32>
    %250 = vector.extract_strided_slice %249 {offsets = [0, 0], sizes = [8, 128], strides = [1, 1]} : vector<8x512xf32> to vector<8x128xf32>
    %251 = arith.negf %250 : vector<8x128xf32>
    %252 = math.exp %251 : vector<8x128xf32>
    %cst_102 = arith.constant 1.000000e+00 : f32
    %253 = vector.broadcast %cst_102 : f32 to vector<8x128xf32>
    %254 = arith.addf %253, %252 : vector<8x128xf32>
    %255 = arith.divf %253, %254 : vector<8x128xf32>
    %256 = vector.extract_strided_slice %249 {offsets = [0, 128], sizes = [8, 128], strides = [1, 1]} : vector<8x512xf32> to vector<8x128xf32>
    %257 = arith.negf %256 : vector<8x128xf32>
    %258 = math.exp %257 : vector<8x128xf32>
    %cst_103 = arith.constant 1.000000e+00 : f32
    %259 = vector.broadcast %cst_103 : f32 to vector<8x128xf32>
    %260 = arith.addf %259, %258 : vector<8x128xf32>
    %261 = arith.divf %259, %260 : vector<8x128xf32>
    %262 = vector.extract_strided_slice %249 {offsets = [0, 256], sizes = [8, 128], strides = [1, 1]} : vector<8x512xf32> to vector<8x128xf32>
    %263 = math.tanh %262 : vector<8x128xf32>
    %264 = vector.extract_strided_slice %249 {offsets = [0, 384], sizes = [8, 128], strides = [1, 1]} : vector<8x512xf32> to vector<8x128xf32>
    %265 = arith.negf %264 : vector<8x128xf32>
    %266 = math.exp %265 : vector<8x128xf32>
    %cst_104 = arith.constant 1.000000e+00 : f32
    %267 = vector.broadcast %cst_104 : f32 to vector<8x128xf32>
    %268 = arith.addf %267, %266 : vector<8x128xf32>
    %269 = arith.divf %267, %268 : vector<8x128xf32>
    %270 = arith.mulf %261, %243 : vector<8x128xf32>
    %271 = arith.mulf %255, %263 : vector<8x128xf32>
    %272 = arith.addf %270, %271 : vector<8x128xf32>
    %273 = math.tanh %272 : vector<8x128xf32>
    %274 = arith.mulf %269, %273 : vector<8x128xf32>
    %275 = vector.broadcast %241 : i32 to vector<8x1xi32>
    %276 = arith.cmpi sgt, %3, %275 : vector<8x1xi32>
    %277 = vector.shape_cast %276 : vector<8x1xi1> to vector<8x1xi1>
    %278 = vector.broadcast %277 : vector<8x1xi1> to vector<8x128xi1>
    %279 = arith.select %278, %272, %243 : vector<8x128xi1>, vector<8x128xf32>
    %c0_105 = arith.constant 0 : index
    %c0_106 = arith.constant 0 : index
    %280 = vector.load %arg7[%c0_105, %c0_106] : memref<8x128xf32, #tpu.memory_space<vmem>>, vector<8x128xf32>
    tpu.vector_store %arg7[%c0_105, %c0_106], %279 {strides = array<i32>} : memref<8x128xf32, #tpu.memory_space<vmem>>, vector<8x128xf32>,
    %281 = vector.shape_cast %276 : vector<8x1xi1> to vector<8x1xi1>
    %282 = vector.broadcast %281 : vector<8x1xi1> to vector<8x128xi1>
    %283 = arith.select %282, %274, %242 : vector<8x128xi1>, vector<8x128xf32>
    %c0_107 = arith.constant 0 : index
    %c0_108 = arith.constant 0 : index
    %284 = vector.load %arg6[%c0_107, %c0_108] : memref<8x128xf32, #tpu.memory_space<vmem>>, vector<8x128xf32>
    tpu.vector_store %arg6[%c0_107, %c0_108], %283 {strides = array<i32>} : memref<8x128xf32, #tpu.memory_space<vmem>>, vector<8x128xf32>,
    %cst_109 = arith.constant 0.000000e+00 : f32
    %285 = vector.shape_cast %276 : vector<8x1xi1> to vector<8x1xi1>
    %286 = vector.broadcast %285 : vector<8x1xi1> to vector<8x128xi1>
    %287 = vector.broadcast %cst_109 : f32 to vector<8x128xf32>
    %288 = arith.select %286, %274, %287 : vector<8x128xi1>, vector<8x128xf32>
    %289 = arith.index_cast %239 : i32 to index
    %c0_110 = arith.constant 0 : index
    %c0_111 = arith.constant 0 : index
    %290 = vector.load %arg5[%289, %c0_110, %c0_111] : memref<8x8x128xf32, #tpu.memory_space<vmem>>, vector<1x8x128xf32>
    %291 = vector.shape_cast %290 : vector<1x8x128xf32> to vector<8x128xf32>
    %292 = vector.shape_cast %288 : vector<8x128xf32> to vector<1x8x128xf32>
    tpu.vector_store %arg5[%289, %c0_110, %c0_111], %292 {strides = array<i32>} : memref<8x8x128xf32, #tpu.memory_space<vmem>>, vector<1x8x128xf32>,
    %c5_i32 = arith.constant 5 : i32
    %c2_i32_112 = arith.constant 2 : i32
    %293 = arith.muli %c2_i32_112, %c5_i32 : i32
    %c7_i32_113 = arith.constant 7 : i32
    %294 = arith.subi %c7_i32_113, %293 : i32
    %295 = arith.muli %arg0, %294 : i32
    %296 = arith.addi %c5_i32, %295 : i32
    %c8_i32_114 = arith.constant 8 : i32
    %297 = arith.muli %7, %c8_i32_114 : i32
    %298 = arith.addi %297, %296 : i32
    %c0_115 = arith.constant 0 : index
    %c0_116 = arith.constant 0 : index
    %299 = vector.load %arg6[%c0_115, %c0_116] : memref<8x128xf32, #tpu.memory_space<vmem>>, vector<8x128xf32>
    %c0_117 = arith.constant 0 : index
    %c0_118 = arith.constant 0 : index
    %300 = vector.load %arg7[%c0_117, %c0_118] : memref<8x128xf32, #tpu.memory_space<vmem>>, vector<8x128xf32>
    %301 = arith.index_cast %296 : i32 to index
    %c0_119 = arith.constant 0 : index
    %c0_120 = arith.constant 0 : index
    %302 = vector.load %arg3[%301, %c0_119, %c0_120] : memref<8x8x512xf32, #tpu.memory_space<vmem>>, vector<1x8x512xf32>
    %303 = vector.shape_cast %302 : vector<1x8x512xf32> to vector<8x512xf32>
    %c0_121 = arith.constant 0 : index
    %c0_122 = arith.constant 0 : index
    %304 = vector.load %arg4[%c0_121, %c0_122] : memref<128x512xf32, #tpu.memory_space<vmem>>, vector<128x512xf32>
    %cst_123 = arith.constant dense<0.000000e+00> : vector<8x512xf32>
    %305 = tpu.matmul %299, %304, %cst_123 {dimension_numbers = #tpu.dot_dimension_numbers<[1], [0], [0], [1], [0, 0, 1, 1], [], []>} : vector<8x128xf32>, vector<128x512xf32>, vector<8x512xf32> -> vector<8x512xf32>
    %306 = arith.addf %303, %305 : vector<8x512xf32>
    %307 = vector.extract_strided_slice %306 {offsets = [0, 0], sizes = [8, 128], strides = [1, 1]} : vector<8x512xf32> to vector<8x128xf32>
    %308 = arith.negf %307 : vector<8x128xf32>
    %309 = math.exp %308 : vector<8x128xf32>
    %cst_124 = arith.constant 1.000000e+00 : f32
    %310 = vector.broadcast %cst_124 : f32 to vector<8x128xf32>
    %311 = arith.addf %310, %309 : vector<8x128xf32>
    %312 = arith.divf %310, %311 : vector<8x128xf32>
    %313 = vector.extract_strided_slice %306 {offsets = [0, 128], sizes = [8, 128], strides = [1, 1]} : vector<8x512xf32> to vector<8x128xf32>
    %314 = arith.negf %313 : vector<8x128xf32>
    %315 = math.exp %314 : vector<8x128xf32>
    %cst_125 = arith.constant 1.000000e+00 : f32
    %316 = vector.broadcast %cst_125 : f32 to vector<8x128xf32>
    %317 = arith.addf %316, %315 : vector<8x128xf32>
    %318 = arith.divf %316, %317 : vector<8x128xf32>
    %319 = vector.extract_strided_slice %306 {offsets = [0, 256], sizes = [8, 128], strides = [1, 1]} : vector<8x512xf32> to vector<8x128xf32>
    %320 = math.tanh %319 : vector<8x128xf32>
    %321 = vector.extract_strided_slice %306 {offsets = [0, 384], sizes = [8, 128], strides = [1, 1]} : vector<8x512xf32> to vector<8x128xf32>
    %322 = arith.negf %321 : vector<8x128xf32>
    %323 = math.exp %322 : vector<8x128xf32>
    %cst_126 = arith.constant 1.000000e+00 : f32
    %324 = vector.broadcast %cst_126 : f32 to vector<8x128xf32>
    %325 = arith.addf %324, %323 : vector<8x128xf32>
    %326 = arith.divf %324, %325 : vector<8x128xf32>
    %327 = arith.mulf %318, %300 : vector<8x128xf32>
    %328 = arith.mulf %312, %320 : vector<8x128xf32>
    %329 = arith.addf %327, %328 : vector<8x128xf32>
    %330 = math.tanh %329 : vector<8x128xf32>
    %331 = arith.mulf %326, %330 : vector<8x128xf32>
    %332 = vector.broadcast %298 : i32 to vector<8x1xi32>
    %333 = arith.cmpi sgt, %3, %332 : vector<8x1xi32>
    %334 = vector.shape_cast %333 : vector<8x1xi1> to vector<8x1xi1>
    %335 = vector.broadcast %334 : vector<8x1xi1> to vector<8x128xi1>
    %336 = arith.select %335, %329, %300 : vector<8x128xi1>, vector<8x128xf32>
    %c0_127 = arith.constant 0 : index
    %c0_128 = arith.constant 0 : index
    %337 = vector.load %arg7[%c0_127, %c0_128] : memref<8x128xf32, #tpu.memory_space<vmem>>, vector<8x128xf32>
    tpu.vector_store %arg7[%c0_127, %c0_128], %336 {strides = array<i32>} : memref<8x128xf32, #tpu.memory_space<vmem>>, vector<8x128xf32>,
    %338 = vector.shape_cast %333 : vector<8x1xi1> to vector<8x1xi1>
    %339 = vector.broadcast %338 : vector<8x1xi1> to vector<8x128xi1>
    %340 = arith.select %339, %331, %299 : vector<8x128xi1>, vector<8x128xf32>
    %c0_129 = arith.constant 0 : index
    %c0_130 = arith.constant 0 : index
    %341 = vector.load %arg6[%c0_129, %c0_130] : memref<8x128xf32, #tpu.memory_space<vmem>>, vector<8x128xf32>
    tpu.vector_store %arg6[%c0_129, %c0_130], %340 {strides = array<i32>} : memref<8x128xf32, #tpu.memory_space<vmem>>, vector<8x128xf32>,
    %cst_131 = arith.constant 0.000000e+00 : f32
    %342 = vector.shape_cast %333 : vector<8x1xi1> to vector<8x1xi1>
    %343 = vector.broadcast %342 : vector<8x1xi1> to vector<8x128xi1>
    %344 = vector.broadcast %cst_131 : f32 to vector<8x128xf32>
    %345 = arith.select %343, %331, %344 : vector<8x128xi1>, vector<8x128xf32>
    %346 = arith.index_cast %296 : i32 to index
    %c0_132 = arith.constant 0 : index
    %c0_133 = arith.constant 0 : index
    %347 = vector.load %arg5[%346, %c0_132, %c0_133] : memref<8x8x128xf32, #tpu.memory_space<vmem>>, vector<1x8x128xf32>
    %348 = vector.shape_cast %347 : vector<1x8x128xf32> to vector<8x128xf32>
    %349 = vector.shape_cast %345 : vector<8x128xf32> to vector<1x8x128xf32>
    tpu.vector_store %arg5[%346, %c0_132, %c0_133], %349 {strides = array<i32>} : memref<8x8x128xf32, #tpu.memory_space<vmem>>, vector<1x8x128xf32>,
    %c6_i32 = arith.constant 6 : i32
    %c2_i32_134 = arith.constant 2 : i32
    %350 = arith.muli %c2_i32_134, %c6_i32 : i32
    %c7_i32_135 = arith.constant 7 : i32
    %351 = arith.subi %c7_i32_135, %350 : i32
    %352 = arith.muli %arg0, %351 : i32
    %353 = arith.addi %c6_i32, %352 : i32
    %c8_i32_136 = arith.constant 8 : i32
    %354 = arith.muli %7, %c8_i32_136 : i32
    %355 = arith.addi %354, %353 : i32
    %c0_137 = arith.constant 0 : index
    %c0_138 = arith.constant 0 : index
    %356 = vector.load %arg6[%c0_137, %c0_138] : memref<8x128xf32, #tpu.memory_space<vmem>>, vector<8x128xf32>
    %c0_139 = arith.constant 0 : index
    %c0_140 = arith.constant 0 : index
    %357 = vector.load %arg7[%c0_139, %c0_140] : memref<8x128xf32, #tpu.memory_space<vmem>>, vector<8x128xf32>
    %358 = arith.index_cast %353 : i32 to index
    %c0_141 = arith.constant 0 : index
    %c0_142 = arith.constant 0 : index
    %359 = vector.load %arg3[%358, %c0_141, %c0_142] : memref<8x8x512xf32, #tpu.memory_space<vmem>>, vector<1x8x512xf32>
    %360 = vector.shape_cast %359 : vector<1x8x512xf32> to vector<8x512xf32>
    %c0_143 = arith.constant 0 : index
    %c0_144 = arith.constant 0 : index
    %361 = vector.load %arg4[%c0_143, %c0_144] : memref<128x512xf32, #tpu.memory_space<vmem>>, vector<128x512xf32>
    %cst_145 = arith.constant dense<0.000000e+00> : vector<8x512xf32>
    %362 = tpu.matmul %356, %361, %cst_145 {dimension_numbers = #tpu.dot_dimension_numbers<[1], [0], [0], [1], [0, 0, 1, 1], [], []>} : vector<8x128xf32>, vector<128x512xf32>, vector<8x512xf32> -> vector<8x512xf32>
    %363 = arith.addf %360, %362 : vector<8x512xf32>
    %364 = vector.extract_strided_slice %363 {offsets = [0, 0], sizes = [8, 128], strides = [1, 1]} : vector<8x512xf32> to vector<8x128xf32>
    %365 = arith.negf %364 : vector<8x128xf32>
    %366 = math.exp %365 : vector<8x128xf32>
    %cst_146 = arith.constant 1.000000e+00 : f32
    %367 = vector.broadcast %cst_146 : f32 to vector<8x128xf32>
    %368 = arith.addf %367, %366 : vector<8x128xf32>
    %369 = arith.divf %367, %368 : vector<8x128xf32>
    %370 = vector.extract_strided_slice %363 {offsets = [0, 128], sizes = [8, 128], strides = [1, 1]} : vector<8x512xf32> to vector<8x128xf32>
    %371 = arith.negf %370 : vector<8x128xf32>
    %372 = math.exp %371 : vector<8x128xf32>
    %cst_147 = arith.constant 1.000000e+00 : f32
    %373 = vector.broadcast %cst_147 : f32 to vector<8x128xf32>
    %374 = arith.addf %373, %372 : vector<8x128xf32>
    %375 = arith.divf %373, %374 : vector<8x128xf32>
    %376 = vector.extract_strided_slice %363 {offsets = [0, 256], sizes = [8, 128], strides = [1, 1]} : vector<8x512xf32> to vector<8x128xf32>
    %377 = math.tanh %376 : vector<8x128xf32>
    %378 = vector.extract_strided_slice %363 {offsets = [0, 384], sizes = [8, 128], strides = [1, 1]} : vector<8x512xf32> to vector<8x128xf32>
    %379 = arith.negf %378 : vector<8x128xf32>
    %380 = math.exp %379 : vector<8x128xf32>
    %cst_148 = arith.constant 1.000000e+00 : f32
    %381 = vector.broadcast %cst_148 : f32 to vector<8x128xf32>
    %382 = arith.addf %381, %380 : vector<8x128xf32>
    %383 = arith.divf %381, %382 : vector<8x128xf32>
    %384 = arith.mulf %375, %357 : vector<8x128xf32>
    %385 = arith.mulf %369, %377 : vector<8x128xf32>
    %386 = arith.addf %384, %385 : vector<8x128xf32>
    %387 = math.tanh %386 : vector<8x128xf32>
    %388 = arith.mulf %383, %387 : vector<8x128xf32>
    %389 = vector.broadcast %355 : i32 to vector<8x1xi32>
    %390 = arith.cmpi sgt, %3, %389 : vector<8x1xi32>
    %391 = vector.shape_cast %390 : vector<8x1xi1> to vector<8x1xi1>
    %392 = vector.broadcast %391 : vector<8x1xi1> to vector<8x128xi1>
    %393 = arith.select %392, %386, %357 : vector<8x128xi1>, vector<8x128xf32>
    %c0_149 = arith.constant 0 : index
    %c0_150 = arith.constant 0 : index
    %394 = vector.load %arg7[%c0_149, %c0_150] : memref<8x128xf32, #tpu.memory_space<vmem>>, vector<8x128xf32>
    tpu.vector_store %arg7[%c0_149, %c0_150], %393 {strides = array<i32>} : memref<8x128xf32, #tpu.memory_space<vmem>>, vector<8x128xf32>,
    %395 = vector.shape_cast %390 : vector<8x1xi1> to vector<8x1xi1>
    %396 = vector.broadcast %395 : vector<8x1xi1> to vector<8x128xi1>
    %397 = arith.select %396, %388, %356 : vector<8x128xi1>, vector<8x128xf32>
    %c0_151 = arith.constant 0 : index
    %c0_152 = arith.constant 0 : index
    %398 = vector.load %arg6[%c0_151, %c0_152] : memref<8x128xf32, #tpu.memory_space<vmem>>, vector<8x128xf32>
    tpu.vector_store %arg6[%c0_151, %c0_152], %397 {strides = array<i32>} : memref<8x128xf32, #tpu.memory_space<vmem>>, vector<8x128xf32>,
    %cst_153 = arith.constant 0.000000e+00 : f32
    %399 = vector.shape_cast %390 : vector<8x1xi1> to vector<8x1xi1>
    %400 = vector.broadcast %399 : vector<8x1xi1> to vector<8x128xi1>
    %401 = vector.broadcast %cst_153 : f32 to vector<8x128xf32>
    %402 = arith.select %400, %388, %401 : vector<8x128xi1>, vector<8x128xf32>
    %403 = arith.index_cast %353 : i32 to index
    %c0_154 = arith.constant 0 : index
    %c0_155 = arith.constant 0 : index
    %404 = vector.load %arg5[%403, %c0_154, %c0_155] : memref<8x8x128xf32, #tpu.memory_space<vmem>>, vector<1x8x128xf32>
    %405 = vector.shape_cast %404 : vector<1x8x128xf32> to vector<8x128xf32>
    %406 = vector.shape_cast %402 : vector<8x128xf32> to vector<1x8x128xf32>
    tpu.vector_store %arg5[%403, %c0_154, %c0_155], %406 {strides = array<i32>} : memref<8x8x128xf32, #tpu.memory_space<vmem>>, vector<1x8x128xf32>,
    %c7_i32_156 = arith.constant 7 : i32
    %c2_i32_157 = arith.constant 2 : i32
    %407 = arith.muli %c2_i32_157, %c7_i32_156 : i32
    %c7_i32_158 = arith.constant 7 : i32
    %408 = arith.subi %c7_i32_158, %407 : i32
    %409 = arith.muli %arg0, %408 : i32
    %410 = arith.addi %c7_i32_156, %409 : i32
    %c8_i32_159 = arith.constant 8 : i32
    %411 = arith.muli %7, %c8_i32_159 : i32
    %412 = arith.addi %411, %410 : i32
    %c0_160 = arith.constant 0 : index
    %c0_161 = arith.constant 0 : index
    %413 = vector.load %arg6[%c0_160, %c0_161] : memref<8x128xf32, #tpu.memory_space<vmem>>, vector<8x128xf32>
    %c0_162 = arith.constant 0 : index
    %c0_163 = arith.constant 0 : index
    %414 = vector.load %arg7[%c0_162, %c0_163] : memref<8x128xf32, #tpu.memory_space<vmem>>, vector<8x128xf32>
    %415 = arith.index_cast %410 : i32 to index
    %c0_164 = arith.constant 0 : index
    %c0_165 = arith.constant 0 : index
    %416 = vector.load %arg3[%415, %c0_164, %c0_165] : memref<8x8x512xf32, #tpu.memory_space<vmem>>, vector<1x8x512xf32>
    %417 = vector.shape_cast %416 : vector<1x8x512xf32> to vector<8x512xf32>
    %c0_166 = arith.constant 0 : index
    %c0_167 = arith.constant 0 : index
    %418 = vector.load %arg4[%c0_166, %c0_167] : memref<128x512xf32, #tpu.memory_space<vmem>>, vector<128x512xf32>
    %cst_168 = arith.constant dense<0.000000e+00> : vector<8x512xf32>
    %419 = tpu.matmul %413, %418, %cst_168 {dimension_numbers = #tpu.dot_dimension_numbers<[1], [0], [0], [1], [0, 0, 1, 1], [], []>} : vector<8x128xf32>, vector<128x512xf32>, vector<8x512xf32> -> vector<8x512xf32>
    %420 = arith.addf %417, %419 : vector<8x512xf32>
    %421 = vector.extract_strided_slice %420 {offsets = [0, 0], sizes = [8, 128], strides = [1, 1]} : vector<8x512xf32> to vector<8x128xf32>
    %422 = arith.negf %421 : vector<8x128xf32>
    %423 = math.exp %422 : vector<8x128xf32>
    %cst_169 = arith.constant 1.000000e+00 : f32
    %424 = vector.broadcast %cst_169 : f32 to vector<8x128xf32>
    %425 = arith.addf %424, %423 : vector<8x128xf32>
    %426 = arith.divf %424, %425 : vector<8x128xf32>
    %427 = vector.extract_strided_slice %420 {offsets = [0, 128], sizes = [8, 128], strides = [1, 1]} : vector<8x512xf32> to vector<8x128xf32>
    %428 = arith.negf %427 : vector<8x128xf32>
    %429 = math.exp %428 : vector<8x128xf32>
    %cst_170 = arith.constant 1.000000e+00 : f32
    %430 = vector.broadcast %cst_170 : f32 to vector<8x128xf32>
    %431 = arith.addf %430, %429 : vector<8x128xf32>
    %432 = arith.divf %430, %431 : vector<8x128xf32>
    %433 = vector.extract_strided_slice %420 {offsets = [0, 256], sizes = [8, 128], strides = [1, 1]} : vector<8x512xf32> to vector<8x128xf32>
    %434 = math.tanh %433 : vector<8x128xf32>
    %435 = vector.extract_strided_slice %420 {offsets = [0, 384], sizes = [8, 128], strides = [1, 1]} : vector<8x512xf32> to vector<8x128xf32>
    %436 = arith.negf %435 : vector<8x128xf32>
    %437 = math.exp %436 : vector<8x128xf32>
    %cst_171 = arith.constant 1.000000e+00 : f32
    %438 = vector.broadcast %cst_171 : f32 to vector<8x128xf32>
    %439 = arith.addf %438, %437 : vector<8x128xf32>
    %440 = arith.divf %438, %439 : vector<8x128xf32>
    %441 = arith.mulf %432, %414 : vector<8x128xf32>
    %442 = arith.mulf %426, %434 : vector<8x128xf32>
    %443 = arith.addf %441, %442 : vector<8x128xf32>
    %444 = math.tanh %443 : vector<8x128xf32>
    %445 = arith.mulf %440, %444 : vector<8x128xf32>
    %446 = vector.broadcast %412 : i32 to vector<8x1xi32>
    %447 = arith.cmpi sgt, %3, %446 : vector<8x1xi32>
    %448 = vector.shape_cast %447 : vector<8x1xi1> to vector<8x1xi1>
    %449 = vector.broadcast %448 : vector<8x1xi1> to vector<8x128xi1>
    %450 = arith.select %449, %443, %414 : vector<8x128xi1>, vector<8x128xf32>
    %c0_172 = arith.constant 0 : index
    %c0_173 = arith.constant 0 : index
    %451 = vector.load %arg7[%c0_172, %c0_173] : memref<8x128xf32, #tpu.memory_space<vmem>>, vector<8x128xf32>
    tpu.vector_store %arg7[%c0_172, %c0_173], %450 {strides = array<i32>} : memref<8x128xf32, #tpu.memory_space<vmem>>, vector<8x128xf32>,
    %452 = vector.shape_cast %447 : vector<8x1xi1> to vector<8x1xi1>
    %453 = vector.broadcast %452 : vector<8x1xi1> to vector<8x128xi1>
    %454 = arith.select %453, %445, %413 : vector<8x128xi1>, vector<8x128xf32>
    %c0_174 = arith.constant 0 : index
    %c0_175 = arith.constant 0 : index
    %455 = vector.load %arg6[%c0_174, %c0_175] : memref<8x128xf32, #tpu.memory_space<vmem>>, vector<8x128xf32>
    tpu.vector_store %arg6[%c0_174, %c0_175], %454 {strides = array<i32>} : memref<8x128xf32, #tpu.memory_space<vmem>>, vector<8x128xf32>,
    %cst_176 = arith.constant 0.000000e+00 : f32
    %456 = vector.shape_cast %447 : vector<8x1xi1> to vector<8x1xi1>
    %457 = vector.broadcast %456 : vector<8x1xi1> to vector<8x128xi1>
    %458 = vector.broadcast %cst_176 : f32 to vector<8x128xf32>
    %459 = arith.select %457, %445, %458 : vector<8x128xi1>, vector<8x128xf32>
    %460 = arith.index_cast %410 : i32 to index
    %c0_177 = arith.constant 0 : index
    %c0_178 = arith.constant 0 : index
    %461 = vector.load %arg5[%460, %c0_177, %c0_178] : memref<8x8x128xf32, #tpu.memory_space<vmem>>, vector<1x8x128xf32>
    %462 = vector.shape_cast %461 : vector<1x8x128xf32> to vector<8x128xf32>
    %463 = vector.shape_cast %459 : vector<8x128xf32> to vector<1x8x128xf32>
    tpu.vector_store %arg5[%460, %c0_177, %c0_178], %463 {strides = array<i32>} : memref<8x8x128xf32, #tpu.memory_space<vmem>>, vector<1x8x128xf32>,
    %c8_i32_179 = arith.constant 8 : i32
    return
  }
  func.func @transform_0(%arg0: i32, %arg1: i32) -> (i32, i32) {
    %c0_i32 = arith.constant 0 : i32
    %c0_i32_0 = arith.constant 0 : i32
    %c0_i32_1 = arith.constant 0 : i32
    return %c0_i32, %c0_i32_0 : i32, i32
  }
  func.func @transform_1(%arg0: i32, %arg1: i32) -> (i32, i32, i32) {
    %c2_i32 = arith.constant 2 : i32
    %0 = arith.muli %c2_i32, %arg1 : i32
    %c0_i32 = arith.constant 0 : i32
    %1 = arith.subi %c0_i32, %0 : i32
    %2 = arith.muli %arg0, %1 : i32
    %3 = arith.addi %arg1, %2 : i32
    %c0_i32_0 = arith.constant 0 : i32
    %c0_i32_1 = arith.constant 0 : i32
    return %3, %c0_i32_0, %arg0 : i32, i32, i32
  }
  func.func @transform_2(%arg0: i32, %arg1: i32) -> (i32, i32) {
    %c0_i32 = arith.constant 0 : i32
    %c0_i32_0 = arith.constant 0 : i32
    return %c0_i32, %arg0 : i32, i32
  }
  func.func @transform_3(%arg0: i32, %arg1: i32) -> (i32, i32, i32) {
    %c2_i32 = arith.constant 2 : i32
    %0 = arith.muli %c2_i32, %arg1 : i32
    %c0_i32 = arith.constant 0 : i32
    %1 = arith.subi %c0_i32, %0 : i32
    %2 = arith.muli %arg0, %1 : i32
    %3 = arith.addi %arg1, %2 : i32
    %c0_i32_0 = arith.constant 0 : i32
    %c0_i32_1 = arith.constant 0 : i32
    return %3, %c0_i32_0, %arg0 : i32, i32, i32
  }
}

module attributes {stable_mosaic.version = 11 : i64} {
  func.func @_matmul_kernel(%arg0: i32, %arg1: memref<64x8xf32, #tpu.memory_space<vmem>>, %arg2: memref<8x1024xf32, #tpu.memory_space<vmem>>, %arg3: memref<1x1024xf32, #tpu.memory_space<vmem>>, %arg4: memref<64x1024xf32, #tpu.memory_space<vmem>>) attributes {dimension_semantics = [#tpu.dimension_semantics<parallel>], iteration_bounds = array<i64: 1>, scalar_prefetch = 0 : i64, scratch_operands = 0 : i64, tpu.core_type = #tpu.core_type<tc>, window_params = [{transform_indices = @transform_0, window_bounds = array<i64: 64, 8>}, {pipeline_mode = #tpu.pipeline_mode<synchronous>, transform_indices = @transform_1, window_bounds = array<i64: 8, 1024>}, {pipeline_mode = #tpu.pipeline_mode<synchronous>, transform_indices = @transform_2, window_bounds = array<i64: 1, 1024>}, {transform_indices = @transform_3, window_bounds = array<i64: 64, 1024>}]} {
    %c0 = arith.constant 0 : index
    %c0_0 = arith.constant 0 : index
    %0 = vector.load %arg1[%c0, %c0_0] : memref<64x8xf32, #tpu.memory_space<vmem>>, vector<64x8xf32>
    %c0_1 = arith.constant 0 : index
    %c0_2 = arith.constant 0 : index
    %1 = vector.load %arg2[%c0_1, %c0_2] : memref<8x1024xf32, #tpu.memory_space<vmem>>, vector<8x1024xf32>
    %cst = arith.constant dense<0.000000e+00> : vector<64x1024xf32>
    %2 = tpu.matmul %0, %1, %cst {dimension_numbers = #tpu.dot_dimension_numbers<[1], [0], [0], [1], [0, 0, 1, 1], [], []>} : vector<64x8xf32>, vector<8x1024xf32>, vector<64x1024xf32> -> vector<64x1024xf32>
    %c0_3 = arith.constant 0 : index
    %c0_4 = arith.constant 0 : index
    %3 = vector.load %arg3[%c0_3, %c0_4] : memref<1x1024xf32, #tpu.memory_space<vmem>>, vector<1x1024xf32>
    %4 = vector.broadcast %3 : vector<1x1024xf32> to vector<64x1024xf32>
    %5 = arith.addf %2, %4 : vector<64x1024xf32>
    %c0_5 = arith.constant 0 : index
    %c0_6 = arith.constant 0 : index
    %6 = vector.load %arg4[%c0_5, %c0_6] : memref<64x1024xf32, #tpu.memory_space<vmem>>, vector<64x1024xf32>
    tpu.vector_store %arg4[%c0_5, %c0_6], %5 {strides = array<i32>} : memref<64x1024xf32, #tpu.memory_space<vmem>>, vector<64x1024xf32>,
    return
  }
  func.func @transform_0(%arg0: i32) -> (i32, i32) {
    %c0_i32 = arith.constant 0 : i32
    %c0_i32_0 = arith.constant 0 : i32
    return %arg0, %c0_i32 : i32, i32
  }
  func.func @transform_1(%arg0: i32) -> (i32, i32) {
    %c0_i32 = arith.constant 0 : i32
    %c0_i32_0 = arith.constant 0 : i32
    %c0_i32_1 = arith.constant 0 : i32
    return %c0_i32, %c0_i32_0 : i32, i32
  }
  func.func @transform_2(%arg0: i32) -> (i32, i32) {
    %c0_i32 = arith.constant 0 : i32
    %c0_i32_0 = arith.constant 0 : i32
    %c0_i32_1 = arith.constant 0 : i32
    return %c0_i32, %c0_i32_0 : i32, i32
  }
  func.func @transform_3(%arg0: i32) -> (i32, i32) {
    %c0_i32 = arith.constant 0 : i32
    %c0_i32_0 = arith.constant 0 : i32
    return %arg0, %c0_i32 : i32, i32
  }
}

module attributes {stable_mosaic.version = 11 : i64} {
  func.func @_matmul_kernel(%arg0: i32, %arg1: memref<64x256xf32, #tpu.memory_space<vmem>>, %arg2: memref<256x1024xf32, #tpu.memory_space<vmem>>, %arg3: memref<1x1024xf32, #tpu.memory_space<vmem>>, %arg4: memref<64x1024xf32, #tpu.memory_space<vmem>>) attributes {dimension_semantics = [#tpu.dimension_semantics<parallel>], iteration_bounds = array<i64: 1>, scalar_prefetch = 0 : i64, scratch_operands = 0 : i64, tpu.core_type = #tpu.core_type<tc>, window_params = [{transform_indices = @transform_0, window_bounds = array<i64: 64, 256>}, {pipeline_mode = #tpu.pipeline_mode<synchronous>, transform_indices = @transform_1, window_bounds = array<i64: 256, 1024>}, {pipeline_mode = #tpu.pipeline_mode<synchronous>, transform_indices = @transform_2, window_bounds = array<i64: 1, 1024>}, {transform_indices = @transform_3, window_bounds = array<i64: 64, 1024>}]} {
    %c0 = arith.constant 0 : index
    %c0_0 = arith.constant 0 : index
    %0 = vector.load %arg1[%c0, %c0_0] : memref<64x256xf32, #tpu.memory_space<vmem>>, vector<64x256xf32>
    %c0_1 = arith.constant 0 : index
    %c0_2 = arith.constant 0 : index
    %1 = vector.load %arg2[%c0_1, %c0_2] : memref<256x1024xf32, #tpu.memory_space<vmem>>, vector<256x1024xf32>
    %cst = arith.constant dense<0.000000e+00> : vector<64x1024xf32>
    %2 = tpu.matmul %0, %1, %cst {dimension_numbers = #tpu.dot_dimension_numbers<[1], [0], [0], [1], [0, 0, 1, 1], [], []>} : vector<64x256xf32>, vector<256x1024xf32>, vector<64x1024xf32> -> vector<64x1024xf32>
    %c0_3 = arith.constant 0 : index
    %c0_4 = arith.constant 0 : index
    %3 = vector.load %arg3[%c0_3, %c0_4] : memref<1x1024xf32, #tpu.memory_space<vmem>>, vector<1x1024xf32>
    %4 = vector.broadcast %3 : vector<1x1024xf32> to vector<64x1024xf32>
    %5 = arith.addf %2, %4 : vector<64x1024xf32>
    %c0_5 = arith.constant 0 : index
    %c0_6 = arith.constant 0 : index
    %6 = vector.load %arg4[%c0_5, %c0_6] : memref<64x1024xf32, #tpu.memory_space<vmem>>, vector<64x1024xf32>
    tpu.vector_store %arg4[%c0_5, %c0_6], %5 {strides = array<i32>} : memref<64x1024xf32, #tpu.memory_space<vmem>>, vector<64x1024xf32>,
    return
  }
  func.func @transform_0(%arg0: i32) -> (i32, i32) {
    %c0_i32 = arith.constant 0 : i32
    %c0_i32_0 = arith.constant 0 : i32
    return %arg0, %c0_i32 : i32, i32
  }
  func.func @transform_1(%arg0: i32) -> (i32, i32) {
    %c0_i32 = arith.constant 0 : i32
    %c0_i32_0 = arith.constant 0 : i32
    %c0_i32_1 = arith.constant 0 : i32
    return %c0_i32, %c0_i32_0 : i32, i32
  }
  func.func @transform_2(%arg0: i32) -> (i32, i32) {
    %c0_i32 = arith.constant 0 : i32
    %c0_i32_0 = arith.constant 0 : i32
    %c0_i32_1 = arith.constant 0 : i32
    return %c0_i32, %c0_i32_0 : i32, i32
  }
  func.func @transform_3(%arg0: i32) -> (i32, i32) {
    %c0_i32 = arith.constant 0 : i32
    %c0_i32_0 = arith.constant 0 : i32
    return %arg0, %c0_i32 : i32, i32
  }
}

module attributes {stable_mosaic.version = 11 : i64} {
  func.func @_matmul_kernel(%arg0: i32, %arg1: memref<64x256xf32, #tpu.memory_space<vmem>>, %arg2: memref<256x128xf32, #tpu.memory_space<vmem>>, %arg3: memref<1x128xf32, #tpu.memory_space<vmem>>, %arg4: memref<64x128xf32, #tpu.memory_space<vmem>>) attributes {dimension_semantics = [#tpu.dimension_semantics<parallel>], iteration_bounds = array<i64: 1>, scalar_prefetch = 0 : i64, scratch_operands = 0 : i64, tpu.core_type = #tpu.core_type<tc>, window_params = [{transform_indices = @transform_0, window_bounds = array<i64: 64, 256>}, {pipeline_mode = #tpu.pipeline_mode<synchronous>, transform_indices = @transform_1, window_bounds = array<i64: 256, 128>}, {pipeline_mode = #tpu.pipeline_mode<synchronous>, transform_indices = @transform_2, window_bounds = array<i64: 1, 128>}, {transform_indices = @transform_3, window_bounds = array<i64: 64, 128>}]} {
    %c0 = arith.constant 0 : index
    %c0_0 = arith.constant 0 : index
    %0 = vector.load %arg1[%c0, %c0_0] : memref<64x256xf32, #tpu.memory_space<vmem>>, vector<64x256xf32>
    %c0_1 = arith.constant 0 : index
    %c0_2 = arith.constant 0 : index
    %1 = vector.load %arg2[%c0_1, %c0_2] : memref<256x128xf32, #tpu.memory_space<vmem>>, vector<256x128xf32>
    %cst = arith.constant dense<0.000000e+00> : vector<64x128xf32>
    %2 = tpu.matmul %0, %1, %cst {dimension_numbers = #tpu.dot_dimension_numbers<[1], [0], [0], [1], [0, 0, 1, 1], [], []>} : vector<64x256xf32>, vector<256x128xf32>, vector<64x128xf32> -> vector<64x128xf32>
    %c0_3 = arith.constant 0 : index
    %c0_4 = arith.constant 0 : index
    %3 = vector.load %arg3[%c0_3, %c0_4] : memref<1x128xf32, #tpu.memory_space<vmem>>, vector<1x128xf32>
    %4 = vector.broadcast %3 : vector<1x128xf32> to vector<64x128xf32>
    %5 = arith.addf %2, %4 : vector<64x128xf32>
    %6 = math.tanh %5 : vector<64x128xf32>
    %c0_5 = arith.constant 0 : index
    %c0_6 = arith.constant 0 : index
    %7 = vector.load %arg4[%c0_5, %c0_6] : memref<64x128xf32, #tpu.memory_space<vmem>>, vector<64x128xf32>
    tpu.vector_store %arg4[%c0_5, %c0_6], %6 {strides = array<i32>} : memref<64x128xf32, #tpu.memory_space<vmem>>, vector<64x128xf32>,
    return
  }
  func.func @transform_0(%arg0: i32) -> (i32, i32) {
    %c0_i32 = arith.constant 0 : i32
    %c0_i32_0 = arith.constant 0 : i32
    return %arg0, %c0_i32 : i32, i32
  }
  func.func @transform_1(%arg0: i32) -> (i32, i32) {
    %c0_i32 = arith.constant 0 : i32
    %c0_i32_0 = arith.constant 0 : i32
    %c0_i32_1 = arith.constant 0 : i32
    return %c0_i32, %c0_i32_0 : i32, i32
  }
  func.func @transform_2(%arg0: i32) -> (i32, i32) {
    %c0_i32 = arith.constant 0 : i32
    %c0_i32_0 = arith.constant 0 : i32
    %c0_i32_1 = arith.constant 0 : i32
    return %c0_i32, %c0_i32_0 : i32, i32
  }
  func.func @transform_3(%arg0: i32) -> (i32, i32) {
    %c0_i32 = arith.constant 0 : i32
    %c0_i32_0 = arith.constant 0 : i32
    return %arg0, %c0_i32 : i32, i32
  }
}

</mosaic_0001>

<llo_original>
// kernel: encoder_forward.9
$region0: #{encoder_forward.9}
  #allocation0 [shape = 'u32[]', space=smem, size = 0x4, offset = 0x4, fixed_abs, tag = 'smem constant byte address 0x4 - core index']
  #allocation1 [shape = 'u32[72,128]{1,0:T(1,128)}', space=vmem, size = 0x9000, scoped, tag = 'internal scratch']
  %s0 = inlined_call_operand.vmem [shape: f32[64,256], index: 0, kind: input, shape index: {}]
  %s1 = inlined_call_operand.hbm [shape: f32[256,128], index: 1, kind: input, shape index: {}]
  %s2 = inlined_call_operand.vmem [shape: f32[1,128], index: 2, kind: input, shape index: {}]
  %s3 = inlined_call_operand.vmem [shape: f32[64,128], index: 3, kind: output, shape index: {}]
  %s4 = sld [smem:[#allocation0]]
  $region26: #{encoder_forward.9} parent=0
    _
  %s6 = ssub.s32 1, %s4
  %s7 = scalar_select 0, %s6, %s4
  $region1: #{encoder_forward.9} parent=0
    #allocation2 [shape = 'u8[131072]{0}', space=vmem, size = 0x20000, scoped, tag = 'input window, operand 1, single buffered']
    #allocation3 [shape = 's32[1]{0}', space=sflag, size = 0x4, scoped, tag = 'scoped memory for encoder_forward.9']
    %8 = vsyncpa [#allocation3], 0
    // Predicated region
    $region2: #{encoder_forward.9} parent=1 // pred_check
      _
    $region3: #{encoder_forward.9} parent=1 // pred_check_branch
      %10 = sbr.rel (0) target = $region5
    $region4: #{encoder_forward.9} parent=1 // pred_region
      _
    $region5: #{encoder_forward.9} parent=1 // pred_fallthru
      _
    // Predicated region
    $region6: #{encoder_forward.9} parent=1 // pred_check
      _
    $region7: #{encoder_forward.9} parent=1 // pred_check_branch
      %12 = sbr.rel (0) target = $region9
    $region8: #{encoder_forward.9} parent=1 // pred_region
      %14 = vsyncadd [#allocation3], 0
      %s15 = sshll.u32 %s1, 4
      %s16 = int_to_ptr.hbm [resolvable:$true] %s15
      %s17 = sshll.u32 [#allocation2], 4
      %s18 = int_to_ptr.vmem [resolvable:$true] %s17
      %23 = dma.hbm_to_vmem [thread:$0]  %s16, 4096, %s18, [#allocation3], 128, 128, 8
    $region9: #{encoder_forward.9} parent=1 // pred_fallthru
      _
    // Predicated region
    $region10: #{encoder_forward.9} parent=1 // pred_check
      _
    $region11: #{encoder_forward.9} parent=1 // pred_check_branch
      %25 = sbr.rel (0) target = $region13
    $region12: #{encoder_forward.9} parent=1 // pred_region
      _
    $region13: #{encoder_forward.9} parent=1 // pred_fallthru
      _
    // Predicated region
    $region14: #{encoder_forward.9} parent=1 // pred_check
      _
    $region15: #{encoder_forward.9} parent=1 // pred_check_branch
      %27 = sbr.rel (0) target = $region17
    $region16: #{encoder_forward.9} parent=1 // pred_region
      %29 = dma.done [#allocation3], 4096
    $region17: #{encoder_forward.9} parent=1 // pred_fallthru
      _
    %v30 = vld [vmem:[%s0] sm:$0xff]
    %v31 = vld [vmem:[%s0 + $0x8] sm:$0xff]
    %v32 = vld [vmem:[%s0 + $0x10] sm:$0xff]
    %v33 = vld [vmem:[%s0 + $0x18] sm:$0xff]
    %v34 = vld [vmem:[%s0 + $0x20] sm:$0xff]
    %v35 = vld [vmem:[%s0 + $0x28] sm:$0xff]
    %v36 = vld [vmem:[%s0 + $0x30] sm:$0xff]
    %v37 = vld [vmem:[%s0 + $0x38] sm:$0xff]
    %v38 = vld [vmem:[%s0 + $0x40] sm:$0xff]
    %v39 = vld [vmem:[%s0 + $0x48] sm:$0xff]
    %v40 = vld [vmem:[%s0 + $0x50] sm:$0xff]
    %v41 = vld [vmem:[%s0 + $0x58] sm:$0xff]
    %v42 = vld [vmem:[%s0 + $0x60] sm:$0xff]
    %v43 = vld [vmem:[%s0 + $0x68] sm:$0xff]
    %v44 = vld [vmem:[%s0 + $0x70] sm:$0xff]
    %v45 = vld [vmem:[%s0 + $0x78] sm:$0xff]
    %v46 = vld [vmem:[#allocation2] sm:$0xff]
    %v47 = vld [vmem:[#allocation2 + $0x8] sm:$0xff]
    %v48 = vld [vmem:[#allocation2 + $0x10] sm:$0xff]
    %v49 = vld [vmem:[#allocation2 + $0x18] sm:$0xff]
    %v50 = vld [vmem:[#allocation2 + $0x20] sm:$0xff]
    %v51 = vld [vmem:[#allocation2 + $0x28] sm:$0xff]
    %v52 = vld [vmem:[#allocation2 + $0x30] sm:$0xff]
    %v53 = vld [vmem:[#allocation2 + $0x38] sm:$0xff]
    %v54 = vld [vmem:[#allocation2 + $0x40] sm:$0xff]
    %v55 = vld [vmem:[#allocation2 + $0x48] sm:$0xff]
    %v56 = vld [vmem:[#allocation2 + $0x50] sm:$0xff]
    %v57 = vld [vmem:[#allocation2 + $0x58] sm:$0xff]
    %v58 = vld [vmem:[#allocation2 + $0x60] sm:$0xff]
    %v59 = vld [vmem:[#allocation2 + $0x68] sm:$0xff]
    %v60 = vld [vmem:[#allocation2 + $0x70] sm:$0xff]
    %v61 = vld [vmem:[#allocation2 + $0x78] sm:$0xff]
    %v62 = vld [vmem:[#allocation2 + $0x80] sm:$0xff]
    %v63 = vld [vmem:[#allocation2 + $0x88] sm:$0xff]
    %v64 = vld [vmem:[#allocation2 + $0x90] sm:$0xff]
    %v65 = vld [vmem:[#allocation2 + $0x98] sm:$0xff]
    %v66 = vld [vmem:[#allocation2 + $0xa0] sm:$0xff]
    %v67 = vld [vmem:[#allocation2 + $0xa8] sm:$0xff]
    %v68 = vld [vmem:[#allocation2 + $0xb0] sm:$0xff]
    %v69 = vld [vmem:[#allocation2 + $0xb8] sm:$0xff]
    %v70 = vld [vmem:[#allocation2 + $0xc0] sm:$0xff]
    %v71 = vld [vmem:[#allocation2 + $0xc8] sm:$0xff]
    %v72 = vld [vmem:[#allocation2 + $0xd0] sm:$0xff]
    %v73 = vld [vmem:[#allocation2 + $0xd8] sm:$0xff]
    %v74 = vld [vmem:[#allocation2 + $0xe0] sm:$0xff]
    %v75 = vld [vmem:[#allocation2 + $0xe8] sm:$0xff]
    %v76 = vld [vmem:[#allocation2 + $0xf0] sm:$0xff]
    %v77 = vld [vmem:[#allocation2 + $0xf8] sm:$0xff]
    %v78 = vld [vmem:[%s2] sm:$0x1]
    %v80 = vperm.slane %v78, 0
    %82 = vmatpush.msra.mxu0 %v61
    %83 = vmatpush.msra.mxu0 %v60
    %84 = vmatpush.msra.mxu0 %v59
    %85 = vmatpush.msra.mxu0 %v58
    %86 = vmatpush.msra.mxu0 %v57
    %87 = vmatpush.msra.mxu0 %v56
    %88 = vmatpush.msra.mxu0 %v55
    %89 = vmatpush.msra.mxu0 %v54
    %90 = vmatpush.msra.mxu0 %v53
    %91 = vmatpush.msra.mxu0 %v52
    %92 = vmatpush.msra.mxu0 %v51
    %93 = vmatpush.msra.mxu0 %v50
    %94 = vmatpush.msra.mxu0 %v49
    %95 = vmatpush.msra.mxu0 %v48
    %96 = vmatpush.msra.mxu0 %v47
    %97 = vmatpush.msra.mxu0 %v46
    %98 = vmatmul.f32.gmra.mxu0 %v30
    %v99 = vpop.f32.mrf.mxu0
    %v100 = vadd.f32 %v80, %v99
    %101 = vmatmul.f32.gmra.mxu0 %v32
    %v102 = vpop.f32.mrf.mxu0
    %v103 = vadd.f32 %v80, %v102
    %104 = vmatmul.f32.gmra.mxu0 %v34
    %v105 = vpop.f32.mrf.mxu0
    %v106 = vadd.f32 %v80, %v105
    %107 = vmatmul.f32.gmra.mxu0 %v36
    %v108 = vpop.f32.mrf.mxu0
    %v109 = vadd.f32 %v80, %v108
    %110 = vmatmul.f32.gmra.mxu0 %v38
    %v111 = vpop.f32.mrf.mxu0
    %v112 = vadd.f32 %v80, %v111
    %113 = vmatmul.f32.gmra.mxu0 %v40
    %v114 = vpop.f32.mrf.mxu0
    %v115 = vadd.f32 %v80, %v114
    %116 = vmatmul.f32.gmra.mxu0 %v42
    %v117 = vpop.f32.mrf.mxu0
    %v118 = vadd.f32 %v80, %v117
    %119 = vmatmul.f32.gmra.mxu0 %v44
    %v120 = vpop.f32.mrf.mxu0
    %v121 = vadd.f32 %v80, %v120
    %122 = vdwg.mxu0
    %123 = vmatpush.msra.mxu0 %v77
    %124 = vmatpush.msra.mxu0 %v76
    %125 = vmatpush.msra.mxu0 %v75
    %126 = vmatpush.msra.mxu0 %v74
    %127 = vmatpush.msra.mxu0 %v73
    %128 = vmatpush.msra.mxu0 %v72
    %129 = vmatpush.msra.mxu0 %v71
    %130 = vmatpush.msra.mxu0 %v70
    %131 = vmatpush.msra.mxu0 %v69
    %132 = vmatpush.msra.mxu0 %v68
    %133 = vmatpush.msra.mxu0 %v67
    %134 = vmatpush.msra.mxu0 %v66
    %135 = vmatpush.msra.mxu0 %v65
    %136 = vmatpush.msra.mxu0 %v64
    %137 = vmatpush.msra.mxu0 %v63
    %138 = vmatpush.msra.mxu0 %v62
    %139 = vmatmul.f32.gmra.mxu0 %v31
    %v140 = vpop.f32.mrf.mxu0
    %v141 = vadd.f32 %v100, %v140
    %142 = vmatmul.f32.gmra.mxu0 %v33
    %v143 = vpop.f32.mrf.mxu0
    %v144 = vadd.f32 %v103, %v143
    %145 = vmatmul.f32.gmra.mxu0 %v35
    %v146 = vpop.f32.mrf.mxu0
    %v147 = vadd.f32 %v106, %v146
    %148 = vmatmul.f32.gmra.mxu0 %v37
    %v149 = vpop.f32.mrf.mxu0
    %v150 = vadd.f32 %v109, %v149
    %151 = vmatmul.f32.gmra.mxu0 %v39
    %v152 = vpop.f32.mrf.mxu0
    %v153 = vadd.f32 %v112, %v152
    %154 = vmatmul.f32.gmra.mxu0 %v41
    %v155 = vpop.f32.mrf.mxu0
    %v156 = vadd.f32 %v115, %v155
    %157 = vmatmul.f32.gmra.mxu0 %v43
    %v158 = vpop.f32.mrf.mxu0
    %v159 = vadd.f32 %v118, %v158
    %160 = vmatmul.f32.gmra.mxu0 %v45
    %v161 = vpop.f32.mrf.mxu0
    %v162 = vadd.f32 %v121, %v161
    %163 = vdwg.mxu0
    %v164 = vtanh.pop %v141
    %v165 = vtanh.pop %v144
    %v166 = vtanh.pop %v147
    %v167 = vtanh.pop %v150
    %v168 = vtanh.pop %v153
    %v169 = vtanh.pop %v156
    %v170 = vtanh.pop %v159
    %v171 = vtanh.pop %v162
    %172 = vst [vmem:[%s3] sm:$0xff] %v164
    %173 = vst [vmem:[%s3 + $0x8] sm:$0xff] %v165
    %174 = vst [vmem:[%s3 + $0x10] sm:$0xff] %v166
    %175 = vst [vmem:[%s3 + $0x18] sm:$0xff] %v167
    %176 = vst [vmem:[%s3 + $0x20] sm:$0xff] %v168
    %177 = vst [vmem:[%s3 + $0x28] sm:$0xff] %v169
    %178 = vst [vmem:[%s3 + $0x30] sm:$0xff] %v170
    %179 = vst [vmem:[%s3 + $0x38] sm:$0xff] %v171
    // Predicated region
    $region18: #{encoder_forward.9} parent=1 // pred_check
      _
    $region19: #{encoder_forward.9} parent=1 // pred_check_branch
      %181 = sbr.rel (0) target = $region21
    $region20: #{encoder_forward.9} parent=1 // pred_region
      _
    $region21: #{encoder_forward.9} parent=1 // pred_fallthru
      _
    // Predicated region
    $region22: #{encoder_forward.9} parent=1 // pred_check
      _
    $region23: #{encoder_forward.9} parent=1 // pred_check_branch
      %183 = sbr.rel (0) target = $region25
    $region24: #{encoder_forward.9} parent=1 // pred_region
      _
    $region25: #{encoder_forward.9} parent=1 // pred_fallthru
      _
    %184 = vsyncpa [#allocation3], 1

// kernel: encoder_forward.5
$region0: #{encoder_forward.5}
  #allocation0 [shape = 'u32[]', space=smem, size = 0x4, offset = 0x4, fixed_abs, tag = 'smem constant byte address 0x4 - core index']
  #allocation1 [shape = 'u32[72,128]{1,0:T(1,128)}', space=vmem, size = 0x9000, scoped, tag = 'internal scratch']
  %s0 = inlined_call_operand.vmem [shape: f32[64,8], index: 0, kind: input, shape index: {}]
  %s1 = inlined_call_operand.vmem [shape: f32[8,1024], index: 1, kind: input, shape index: {}]
  %s2 = inlined_call_operand.vmem [shape: f32[1,1024], index: 2, kind: input, shape index: {}]
  %s3 = inlined_call_operand.vmem [shape: f32[64,1024], index: 3, kind: output, shape index: {}]
  %s4 = sld [smem:[#allocation0]]
  $region22: #{encoder_forward.5} parent=0
    _
  %s6 = ssub.s32 1, %s4
  %s7 = scalar_select 0, %s6, %s4
  // Predicated region
  $region2: #{encoder_forward.5} parent=0 // pred_check
    _
  $region3: #{encoder_forward.5} parent=0 // pred_check_branch
    %9 = sbr.rel (0) target = $region5
  $region4: #{encoder_forward.5} parent=0 // pred_region
    _
  $region5: #{encoder_forward.5} parent=0 // pred_fallthru
    _
  // Predicated region
  $region6: #{encoder_forward.5} parent=0 // pred_check
    _
  $region7: #{encoder_forward.5} parent=0 // pred_check_branch
    %11 = sbr.rel (0) target = $region9
  $region8: #{encoder_forward.5} parent=0 // pred_region
    _
  $region9: #{encoder_forward.5} parent=0 // pred_fallthru
    _
  // Predicated region
  $region10: #{encoder_forward.5} parent=0 // pred_check
    _
  $region11: #{encoder_forward.5} parent=0 // pred_check_branch
    %13 = sbr.rel (0) target = $region13
  $region12: #{encoder_forward.5} parent=0 // pred_region
    _
  $region13: #{encoder_forward.5} parent=0 // pred_fallthru
    _
  %v14 = vld [vmem:[%s0] sm:$0xff]
  %v15 = vld [vmem:[%s0 + $0x8] sm:$0xff]
  %v16 = vld [vmem:[%s0 + $0x10] sm:$0xff]
  %v17 = vld [vmem:[%s0 + $0x18] sm:$0xff]
  %v18 = vld [vmem:[%s0 + $0x20] sm:$0xff]
  %v19 = vld [vmem:[%s0 + $0x28] sm:$0xff]
  %v20 = vld [vmem:[%s0 + $0x30] sm:$0xff]
  %v21 = vld [vmem:[%s0 + $0x38] sm:$0xff]
  %v22 = vld [vmem:[%s1] sm:$0xff]
  %v23 = vld [vmem:[%s1 + $0x8] sm:$0xff]
  %v24 = vld [vmem:[%s1 + $0x10] sm:$0xff]
  %v25 = vld [vmem:[%s1 + $0x18] sm:$0xff]
  %v26 = vld [vmem:[%s1 + $0x20] sm:$0xff]
  %v27 = vld [vmem:[%s1 + $0x28] sm:$0xff]
  %v28 = vld [vmem:[%s1 + $0x30] sm:$0xff]
  %v29 = vld [vmem:[%s1 + $0x38] sm:$0xff]
  %v30 = vld [vmem:[%s2] sm:$0xff]
  %v32 = vperm.slane %v30, 0
  %v33 = vperm.slane %v30, 1
  %v34 = vperm.slane %v30, 2
  %v35 = vperm.slane %v30, 3
  %v36 = vperm.slane %v30, 4
  %v37 = vperm.slane %v30, 5
  %v38 = vperm.slane %v30, 6
  %v39 = vperm.slane %v30, 7
  %vm48 = vcmask 64512
  %v50 = vsel %vm48, %v14, 0
  %v53 = vsel %vm48, %v15, 0
  %v56 = vsel %vm48, %v16, 0
  %v59 = vsel %vm48, %v17, 0
  %v62 = vsel %vm48, %v18, 0
  %v65 = vsel %vm48, %v19, 0
  %v68 = vsel %vm48, %v20, 0
  %v71 = vsel %vm48, %v21, 0
  %73 = vmatpush.msra.mxu0 0.0
  %74 = vmatpush.msra.mxu0 0.0
  %75 = vmatpush.msra.mxu0 0.0
  %76 = vmatpush.msra.mxu0 0.0
  %77 = vmatpush.msra.mxu0 0.0
  %78 = vmatpush.msra.mxu0 0.0
  %79 = vmatpush.msra.mxu0 0.0
  %80 = vmatpush.msra.mxu0 0.0
  %81 = vmatpush.msra.mxu0 0.0
  %82 = vmatpush.msra.mxu0 0.0
  %83 = vmatpush.msra.mxu0 0.0
  %84 = vmatpush.msra.mxu0 0.0
  %85 = vmatpush.msra.mxu0 0.0
  %86 = vmatpush.msra.mxu0 0.0
  %87 = vmatpush.msra.mxu0 0.0
  %88 = vmatpush.msra.mxu0 %v22
  %89 = vmatmul.f32.gmra.mxu0 %v50
  %v90 = vpop.f32.mrf.mxu0
  %v91 = vadd.f32 %v32, %v90
  %92 = vmatmul.f32.gmra.mxu0 %v53
  %v93 = vpop.f32.mrf.mxu0
  %v94 = vadd.f32 %v32, %v93
  %95 = vmatmul.f32.gmra.mxu0 %v56
  %v96 = vpop.f32.mrf.mxu0
  %v97 = vadd.f32 %v32, %v96
  %98 = vmatmul.f32.gmra.mxu0 %v59
  %v99 = vpop.f32.mrf.mxu0
  %v100 = vadd.f32 %v32, %v99
  %101 = vmatmul.f32.gmra.mxu0 %v62
  %v102 = vpop.f32.mrf.mxu0
  %v103 = vadd.f32 %v32, %v102
  %104 = vmatmul.f32.gmra.mxu0 %v65
  %v105 = vpop.f32.mrf.mxu0
  %v106 = vadd.f32 %v32, %v105
  %107 = vmatmul.f32.gmra.mxu0 %v68
  %v108 = vpop.f32.mrf.mxu0
  %v109 = vadd.f32 %v32, %v108
  %110 = vmatmul.f32.gmra.mxu0 %v71
  %v111 = vpop.f32.mrf.mxu0
  %v112 = vadd.f32 %v32, %v111
  %113 = vdwg.mxu0
  %114 = vmatpush.msra.mxu0 0.0
  %115 = vmatpush.msra.mxu0 0.0
  %116 = vmatpush.msra.mxu0 0.0
  %117 = vmatpush.msra.mxu0 0.0
  %118 = vmatpush.msra.mxu0 0.0
  %119 = vmatpush.msra.mxu0 0.0
  %120 = vmatpush.msra.mxu0 0.0
  %121 = vmatpush.msra.mxu0 0.0
  %122 = vmatpush.msra.mxu0 0.0
  %123 = vmatpush.msra.mxu0 0.0
  %124 = vmatpush.msra.mxu0 0.0
  %125 = vmatpush.msra.mxu0 0.0
  %126 = vmatpush.msra.mxu0 0.0
  %127 = vmatpush.msra.mxu0 0.0
  %128 = vmatpush.msra.mxu0 0.0
  %129 = vmatpush.msra.mxu0 %v23
  %130 = vmatmul.f32.gmra.mxu0 %v50
  %v131 = vpop.f32.mrf.mxu0
  %v132 = vadd.f32 %v33, %v131
  %133 = vmatmul.f32.gmra.mxu0 %v53
  %v134 = vpop.f32.mrf.mxu0
  %v135 = vadd.f32 %v33, %v134
  %136 = vmatmul.f32.gmra.mxu0 %v56
  %v137 = vpop.f32.mrf.mxu0
  %v138 = vadd.f32 %v33, %v137
  %139 = vmatmul.f32.gmra.mxu0 %v59
  %v140 = vpop.f32.mrf.mxu0
  %v141 = vadd.f32 %v33, %v140
  %142 = vmatmul.f32.gmra.mxu0 %v62
  %v143 = vpop.f32.mrf.mxu0
  %v144 = vadd.f32 %v33, %v143
  %145 = vmatmul.f32.gmra.mxu0 %v65
  %v146 = vpop.f32.mrf.mxu0
  %v147 = vadd.f32 %v33, %v146
  %148 = vmatmul.f32.gmra.mxu0 %v68
  %v149 = vpop.f32.mrf.mxu0
  %v150 = vadd.f32 %v33, %v149
  %151 = vmatmul.f32.gmra.mxu0 %v71
  %v152 = vpop.f32.mrf.mxu0
  %v153 = vadd.f32 %v33, %v152
  %154 = vdwg.mxu0
  %155 = vmatpush.msra.mxu0 0.0
  %156 = vmatpush.msra.mxu0 0.0
  %157 = vmatpush.msra.mxu0 0.0
  %158 = vmatpush.msra.mxu0 0.0
  %159 = vmatpush.msra.mxu0 0.0
  %160 = vmatpush.msra.mxu0 0.0
  %161 = vmatpush.msra.mxu0 0.0
  %162 = vmatpush.msra.mxu0 0.0
  %163 = vmatpush.msra.mxu0 0.0
  %164 = vmatpush.msra.mxu0 0.0
  %165 = vmatpush.msra.mxu0 0.0
  %166 = vmatpush.msra.mxu0 0.0
  %167 = vmatpush.msra.mxu0 0.0
  %168 = vmatpush.msra.mxu0 0.0
  %169 = vmatpush.msra.mxu0 0.0
  %170 = vmatpush.msra.mxu0 %v24
  %171 = vmatmul.f32.gmra.mxu0 %v50
  %v172 = vpop.f32.mrf.mxu0
  %v173 = vadd.f32 %v34, %v172
  %174 = vmatmul.f32.gmra.mxu0 %v53
  %v175 = vpop.f32.mrf.mxu0
  %v176 = vadd.f32 %v34, %v175
  %177 = vmatmul.f32.gmra.mxu0 %v56
  %v178 = vpop.f32.mrf.mxu0
  %v179 = vadd.f32 %v34, %v178
  %180 = vmatmul.f32.gmra.mxu0 %v59
  %v181 = vpop.f32.mrf.mxu0
  %v182 = vadd.f32 %v34, %v181
  %183 = vmatmul.f32.gmra.mxu0 %v62
  %v184 = vpop.f32.mrf.mxu0
  %v185 = vadd.f32 %v34, %v184
  %186 = vmatmul.f32.gmra.mxu0 %v65
  %v187 = vpop.f32.mrf.mxu0
  %v188 = vadd.f32 %v34, %v187
  %189 = vmatmul.f32.gmra.mxu0 %v68
  %v190 = vpop.f32.mrf.mxu0
  %v191 = vadd.f32 %v34, %v190
  %192 = vmatmul.f32.gmra.mxu0 %v71
  %v193 = vpop.f32.mrf.mxu0
  %v194 = vadd.f32 %v34, %v193
  %195 = vdwg.mxu0
  %196 = vmatpush.msra.mxu0 0.0
  %197 = vmatpush.msra.mxu0 0.0
  %198 = vmatpush.msra.mxu0 0.0
  %199 = vmatpush.msra.mxu0 0.0
  %200 = vmatpush.msra.mxu0 0.0
  %201 = vmatpush.msra.mxu0 0.0
  %202 = vmatpush.msra.mxu0 0.0
  %203 = vmatpush.msra.mxu0 0.0
  %204 = vmatpush.msra.mxu0 0.0
  %205 = vmatpush.msra.mxu0 0.0
  %206 = vmatpush.msra.mxu0 0.0
  %207 = vmatpush.msra.mxu0 0.0
  %208 = vmatpush.msra.mxu0 0.0
  %209 = vmatpush.msra.mxu0 0.0
  %210 = vmatpush.msra.mxu0 0.0
  %211 = vmatpush.msra.mxu0 %v25
  %212 = vmatmul.f32.gmra.mxu0 %v50
  %v213 = vpop.f32.mrf.mxu0
  %v214 = vadd.f32 %v35, %v213
  %215 = vmatmul.f32.gmra.mxu0 %v53
  %v216 = vpop.f32.mrf.mxu0
  %v217 = vadd.f32 %v35, %v216
  %218 = vmatmul.f32.gmra.mxu0 %v56
  %v219 = vpop.f32.mrf.mxu0
  %v220 = vadd.f32 %v35, %v219
  %221 = vmatmul.f32.gmra.mxu0 %v59
  %v222 = vpop.f32.mrf.mxu0
  %v223 = vadd.f32 %v35, %v222
  %224 = vmatmul.f32.gmra.mxu0 %v62
  %v225 = vpop.f32.mrf.mxu0
  %v226 = vadd.f32 %v35, %v225
  %227 = vmatmul.f32.gmra.mxu0 %v65
  %v228 = vpop.f32.mrf.mxu0
  %v229 = vadd.f32 %v35, %v228
  %230 = vmatmul.f32.gmra.mxu0 %v68
  %v231 = vpop.f32.mrf.mxu0
  %v232 = vadd.f32 %v35, %v231
  %233 = vmatmul.f32.gmra.mxu0 %v71
  %v234 = vpop.f32.mrf.mxu0
  %v235 = vadd.f32 %v35, %v234
  %236 = vdwg.mxu0
  %237 = vmatpush.msra.mxu0 0.0
  %238 = vmatpush.msra.mxu0 0.0
  %239 = vmatpush.msra.mxu0 0.0
  %240 = vmatpush.msra.mxu0 0.0
  %241 = vmatpush.msra.mxu0 0.0
  %242 = vmatpush.msra.mxu0 0.0
  %243 = vmatpush.msra.mxu0 0.0
  %244 = vmatpush.msra.mxu0 0.0
  %245 = vmatpush.msra.mxu0 0.0
  %246 = vmatpush.msra.mxu0 0.0
  %247 = vmatpush.msra.mxu0 0.0
  %248 = vmatpush.msra.mxu0 0.0
  %249 = vmatpush.msra.mxu0 0.0
  %250 = vmatpush.msra.mxu0 0.0
  %251 = vmatpush.msra.mxu0 0.0
  %252 = vmatpush.msra.mxu0 %v26
  %253 = vmatmul.f32.gmra.mxu0 %v50
  %v254 = vpop.f32.mrf.mxu0
  %v255 = vadd.f32 %v36, %v254
  %256 = vmatmul.f32.gmra.mxu0 %v53
  %v257 = vpop.f32.mrf.mxu0
  %v258 = vadd.f32 %v36, %v257
  %259 = vmatmul.f32.gmra.mxu0 %v56
  %v260 = vpop.f32.mrf.mxu0
  %v261 = vadd.f32 %v36, %v260
  %262 = vmatmul.f32.gmra.mxu0 %v59
  %v263 = vpop.f32.mrf.mxu0
  %v264 = vadd.f32 %v36, %v263
  %265 = vmatmul.f32.gmra.mxu0 %v62
  %v266 = vpop.f32.mrf.mxu0
  %v267 = vadd.f32 %v36, %v266
  %268 = vmatmul.f32.gmra.mxu0 %v65
  %v269 = vpop.f32.mrf.mxu0
  %v270 = vadd.f32 %v36, %v269
  %271 = vmatmul.f32.gmra.mxu0 %v68
  %v272 = vpop.f32.mrf.mxu0
  %v273 = vadd.f32 %v36, %v272
  %274 = vmatmul.f32.gmra.mxu0 %v71
  %v275 = vpop.f32.mrf.mxu0
  %v276 = vadd.f32 %v36, %v275
  %277 = vdwg.mxu0
  %278 = vmatpush.msra.mxu0 0.0
  %279 = vmatpush.msra.mxu0 0.0
  %280 = vmatpush.msra.mxu0 0.0
  %281 = vmatpush.msra.mxu0 0.0
  %282 = vmatpush.msra.mxu0 0.0
  %283 = vmatpush.msra.mxu0 0.0
  %284 = vmatpush.msra.mxu0 0.0
  %285 = vmatpush.msra.mxu0 0.0
  %286 = vmatpush.msra.mxu0 0.0
  %287 = vmatpush.msra.mxu0 0.0
  %288 = vmatpush.msra.mxu0 0.0
  %289 = vmatpush.msra.mxu0 0.0
  %290 = vmatpush.msra.mxu0 0.0
  %291 = vmatpush.msra.mxu0 0.0
  %292 = vmatpush.msra.mxu0 0.0
  %293 = vmatpush.msra.mxu0 %v27
  %294 = vmatmul.f32.gmra.mxu0 %v50
  %v295 = vpop.f32.mrf.mxu0
  %v296 = vadd.f32 %v37, %v295
  %297 = vmatmul.f32.gmra.mxu0 %v53
  %v298 = vpop.f32.mrf.mxu0
  %v299 = vadd.f32 %v37, %v298
  %300 = vmatmul.f32.gmra.mxu0 %v56
  %v301 = vpop.f32.mrf.mxu0
  %v302 = vadd.f32 %v37, %v301
  %303 = vmatmul.f32.gmra.mxu0 %v59
  %v304 = vpop.f32.mrf.mxu0
  %v305 = vadd.f32 %v37, %v304
  %306 = vmatmul.f32.gmra.mxu0 %v62
  %v307 = vpop.f32.mrf.mxu0
  %v308 = vadd.f32 %v37, %v307
  %309 = vmatmul.f32.gmra.mxu0 %v65
  %v310 = vpop.f32.mrf.mxu0
  %v311 = vadd.f32 %v37, %v310
  %312 = vmatmul.f32.gmra.mxu0 %v68
  %v313 = vpop.f32.mrf.mxu0
  %v314 = vadd.f32 %v37, %v313
  %315 = vmatmul.f32.gmra.mxu0 %v71
  %v316 = vpop.f32.mrf.mxu0
  %v317 = vadd.f32 %v37, %v316
  %318 = vdwg.mxu0
  %319 = vmatpush.msra.mxu0 0.0
  %320 = vmatpush.msra.mxu0 0.0
  %321 = vmatpush.msra.mxu0 0.0
  %322 = vmatpush.msra.mxu0 0.0
  %323 = vmatpush.msra.mxu0 0.0
  %324 = vmatpush.msra.mxu0 0.0
  %325 = vmatpush.msra.mxu0 0.0
  %326 = vmatpush.msra.mxu0 0.0
  %327 = vmatpush.msra.mxu0 0.0
  %328 = vmatpush.msra.mxu0 0.0
  %329 = vmatpush.msra.mxu0 0.0
  %330 = vmatpush.msra.mxu0 0.0
  %331 = vmatpush.msra.mxu0 0.0
  %332 = vmatpush.msra.mxu0 0.0
  %333 = vmatpush.msra.mxu0 0.0
  %334 = vmatpush.msra.mxu0 %v28
  %335 = vmatmul.f32.gmra.mxu0 %v50
  %v336 = vpop.f32.mrf.mxu0
  %v337 = vadd.f32 %v38, %v336
  %338 = vmatmul.f32.gmra.mxu0 %v53
  %v339 = vpop.f32.mrf.mxu0
  %v340 = vadd.f32 %v38, %v339
  %341 = vmatmul.f32.gmra.mxu0 %v56
  %v342 = vpop.f32.mrf.mxu0
  %v343 = vadd.f32 %v38, %v342
  %344 = vmatmul.f32.gmra.mxu0 %v59
  %v345 = vpop.f32.mrf.mxu0
  %v346 = vadd.f32 %v38, %v345
  %347 = vmatmul.f32.gmra.mxu0 %v62
  %v348 = vpop.f32.mrf.mxu0
  %v349 = vadd.f32 %v38, %v348
  %350 = vmatmul.f32.gmra.mxu0 %v65
  %v351 = vpop.f32.mrf.mxu0
  %v352 = vadd.f32 %v38, %v351
  %353 = vmatmul.f32.gmra.mxu0 %v68
  %v354 = vpop.f32.mrf.mxu0
  %v355 = vadd.f32 %v38, %v354
  %356 = vmatmul.f32.gmra.mxu0 %v71
  %v357 = vpop.f32.mrf.mxu0
  %v358 = vadd.f32 %v38, %v357
  %359 = vdwg.mxu0
  %360 = vmatpush.msra.mxu0 0.0
  %361 = vmatpush.msra.mxu0 0.0
  %362 = vmatpush.msra.mxu0 0.0
  %363 = vmatpush.msra.mxu0 0.0
  %364 = vmatpush.msra.mxu0 0.0
  %365 = vmatpush.msra.mxu0 0.0
  %366 = vmatpush.msra.mxu0 0.0
  %367 = vmatpush.msra.mxu0 0.0
  %368 = vmatpush.msra.mxu0 0.0
  %369 = vmatpush.msra.mxu0 0.0
  %370 = vmatpush.msra.mxu0 0.0
  %371 = vmatpush.msra.mxu0 0.0
  %372 = vmatpush.msra.mxu0 0.0
  %373 = vmatpush.msra.mxu0 0.0
  %374 = vmatpush.msra.mxu0 0.0
  %375 = vmatpush.msra.mxu0 %v29
  %376 = vmatmul.f32.gmra.mxu0 %v50
  %v377 = vpop.f32.mrf.mxu0
  %v378 = vadd.f32 %v39, %v377
  %379 = vmatmul.f32.gmra.mxu0 %v53
  %v380 = vpop.f32.mrf.mxu0
  %v381 = vadd.f32 %v39, %v380
  %382 = vmatmul.f32.gmra.mxu0 %v56
  %v383 = vpop.f32.mrf.mxu0
  %v384 = vadd.f32 %v39, %v383
  %385 = vmatmul.f32.gmra.mxu0 %v59
  %v386 = vpop.f32.mrf.mxu0
  %v387 = vadd.f32 %v39, %v386
  %388 = vmatmul.f32.gmra.mxu0 %v62
  %v389 = vpop.f32.mrf.mxu0
  %v390 = vadd.f32 %v39, %v389
  %391 = vmatmul.f32.gmra.mxu0 %v65
  %v392 = vpop.f32.mrf.mxu0
  %v393 = vadd.f32 %v39, %v392
  %394 = vmatmul.f32.gmra.mxu0 %v68
  %v395 = vpop.f32.mrf.mxu0
  %v396 = vadd.f32 %v39, %v395
  %397 = vmatmul.f32.gmra.mxu0 %v71
  %v398 = vpop.f32.mrf.mxu0
  %v399 = vadd.f32 %v39, %v398
  %400 = vdwg.mxu0
  %401 = vst [vmem:[%s3] sm:$0xff] %v91
  %402 = vst [vmem:[%s3 + $0x8] sm:$0xff] %v132
  %403 = vst [vmem:[%s3 + $0x10] sm:$0xff] %v173
  %404 = vst [vmem:[%s3 + $0x18] sm:$0xff] %v214
  %405 = vst [vmem:[%s3 + $0x20] sm:$0xff] %v255
  %406 = vst [vmem:[%s3 + $0x28] sm:$0xff] %v296
  %407 = vst [vmem:[%s3 + $0x30] sm:$0xff] %v337
  %408 = vst [vmem:[%s3 + $0x38] sm:$0xff] %v378
  %409 = vst [vmem:[%s3 + $0x40] sm:$0xff] %v94
  %410 = vst [vmem:[%s3 + $0x48] sm:$0xff] %v135
  %411 = vst [vmem:[%s3 + $0x50] sm:$0xff] %v176
  %412 = vst [vmem:[%s3 + $0x58] sm:$0xff] %v217
  %413 = vst [vmem:[%s3 + $0x60] sm:$0xff] %v258
  %414 = vst [vmem:[%s3 + $0x68] sm:$0xff] %v299
  %415 = vst [vmem:[%s3 + $0x70] sm:$0xff] %v340
  %416 = vst [vmem:[%s3 + $0x78] sm:$0xff] %v381
  %417 = vst [vmem:[%s3 + $0x80] sm:$0xff] %v97
  %418 = vst [vmem:[%s3 + $0x88] sm:$0xff] %v138
  %419 = vst [vmem:[%s3 + $0x90] sm:$0xff] %v179
  %420 = vst [vmem:[%s3 + $0x98] sm:$0xff] %v220
  %421 = vst [vmem:[%s3 + $0xa0] sm:$0xff] %v261
  %422 = vst [vmem:[%s3 + $0xa8] sm:$0xff] %v302
  %423 = vst [vmem:[%s3 + $0xb0] sm:$0xff] %v343
  %424 = vst [vmem:[%s3 + $0xb8] sm:$0xff] %v384
  %425 = vst [vmem:[%s3 + $0xc0] sm:$0xff] %v100
  %426 = vst [vmem:[%s3 + $0xc8] sm:$0xff] %v141
  %427 = vst [vmem:[%s3 + $0xd0] sm:$0xff] %v182
  %428 = vst [vmem:[%s3 + $0xd8] sm:$0xff] %v223
  %429 = vst [vmem:[%s3 + $0xe0] sm:$0xff] %v264
  %430 = vst [vmem:[%s3 + $0xe8] sm:$0xff] %v305
  %431 = vst [vmem:[%s3 + $0xf0] sm:$0xff] %v346
  %432 = vst [vmem:[%s3 + $0xf8] sm:$0xff] %v387
  %433 = vst [vmem:[%s3 + $0x100] sm:$0xff] %v103
  %434 = vst [vmem:[%s3 + $0x108] sm:$0xff] %v144
  %435 = vst [vmem:[%s3 + $0x110] sm:$0xff] %v185
  %436 = vst [vmem:[%s3 + $0x118] sm:$0xff] %v226
  %437 = vst [vmem:[%s3 + $0x120] sm:$0xff] %v267
  %438 = vst [vmem:[%s3 + $0x128] sm:$0xff] %v308
  %439 = vst [vmem:[%s3 + $0x130] sm:$0xff] %v349
  %440 = vst [vmem:[%s3 + $0x138] sm:$0xff] %v390
  %441 = vst [vmem:[%s3 + $0x140] sm:$0xff] %v106
  %442 = vst [vmem:[%s3 + $0x148] sm:$0xff] %v147
  %443 = vst [vmem:[%s3 + $0x150] sm:$0xff] %v188
  %444 = vst [vmem:[%s3 + $0x158] sm:$0xff] %v229
  %445 = vst [vmem:[%s3 + $0x160] sm:$0xff] %v270
  %446 = vst [vmem:[%s3 + $0x168] sm:$0xff] %v311
  %447 = vst [vmem:[%s3 + $0x170] sm:$0xff] %v352
  %448 = vst [vmem:[%s3 + $0x178] sm:$0xff] %v393
  %449 = vst [vmem:[%s3 + $0x180] sm:$0xff] %v109
  %450 = vst [vmem:[%s3 + $0x188] sm:$0xff] %v150
  %451 = vst [vmem:[%s3 + $0x190] sm:$0xff] %v191
  %452 = vst [vmem:[%s3 + $0x198] sm:$0xff] %v232
  %453 = vst [vmem:[%s3 + $0x1a0] sm:$0xff] %v273
  %454 = vst [vmem:[%s3 + $0x1a8] sm:$0xff] %v314
  %455 = vst [vmem:[%s3 + $0x1b0] sm:$0xff] %v355
  %456 = vst [vmem:[%s3 + $0x1b8] sm:$0xff] %v396
  %457 = vst [vmem:[%s3 + $0x1c0] sm:$0xff] %v112
  %458 = vst [vmem:[%s3 + $0x1c8] sm:$0xff] %v153
  %459 = vst [vmem:[%s3 + $0x1d0] sm:$0xff] %v194
  %460 = vst [vmem:[%s3 + $0x1d8] sm:$0xff] %v235
  %461 = vst [vmem:[%s3 + $0x1e0] sm:$0xff] %v276
  %462 = vst [vmem:[%s3 + $0x1e8] sm:$0xff] %v317
  %463 = vst [vmem:[%s3 + $0x1f0] sm:$0xff] %v358
  %464 = vst [vmem:[%s3 + $0x1f8] sm:$0xff] %v399
  // Predicated region
  $region14: #{encoder_forward.5} parent=0 // pred_check
    _
  $region15: #{encoder_forward.5} parent=0 // pred_check_branch
    %466 = sbr.rel (0) target = $region17
  $region16: #{encoder_forward.5} parent=0 // pred_region
    _
  $region17: #{encoder_forward.5} parent=0 // pred_fallthru
    _
  // Predicated region
  $region18: #{encoder_forward.5} parent=0 // pred_check
    _
  $region19: #{encoder_forward.5} parent=0 // pred_check_branch
    %468 = sbr.rel (0) target = $region21
  $region20: #{encoder_forward.5} parent=0 // pred_region
    _
  $region21: #{encoder_forward.5} parent=0 // pred_fallthru
    _

// kernel: encoder_forward.7
$region0: #{encoder_forward.7}
  #allocation0 [shape = 'u32[]', space=smem, size = 0x4, offset = 0x4, fixed_abs, tag = 'smem constant byte address 0x4 - core index']
  #allocation1 [shape = 'u32[72,128]{1,0:T(1,128)}', space=vmem, size = 0x9000, scoped, tag = 'internal scratch']
  %s0 = inlined_call_operand.vmem [shape: f32[64,256], index: 0, kind: input, shape index: {}]
  %s1 = inlined_call_operand.hbm [shape: f32[256,1024], index: 1, kind: input, shape index: {}]
  %s2 = inlined_call_operand.vmem [shape: f32[1,1024], index: 2, kind: input, shape index: {}]
  %s3 = inlined_call_operand.vmem [shape: f32[64,1024], index: 3, kind: output, shape index: {}]
  %s4 = sld [smem:[#allocation0]]
  $region26: #{encoder_forward.7} parent=0
    _
  %s6 = ssub.s32 1, %s4
  %s7 = scalar_select 0, %s6, %s4
  $region1: #{encoder_forward.7} parent=0
    #allocation2 [shape = 'u8[1048576]{0}', space=vmem, size = 0x100000, scoped, tag = 'input window, operand 1, single buffered']
    #allocation3 [shape = 's32[1]{0}', space=sflag, size = 0x4, scoped, tag = 'scoped memory for encoder_forward.7']
    %8 = vsyncpa [#allocation3], 0
    // Predicated region
    $region2: #{encoder_forward.7} parent=1 // pred_check
      _
    $region3: #{encoder_forward.7} parent=1 // pred_check_branch
      %10 = sbr.rel (0) target = $region5
    $region4: #{encoder_forward.7} parent=1 // pred_region
      _
    $region5: #{encoder_forward.7} parent=1 // pred_fallthru
      _
    // Predicated region
    $region6: #{encoder_forward.7} parent=1 // pred_check
      _
    $region7: #{encoder_forward.7} parent=1 // pred_check_branch
      %12 = sbr.rel (0) target = $region9
    $region8: #{encoder_forward.7} parent=1 // pred_region
      %14 = vsyncadd [#allocation3], 0
      %s15 = sshll.u32 %s1, 4
      %s16 = int_to_ptr.hbm [resolvable:$true] %s15
      %s17 = sshll.u32 [#allocation2], 4
      %s18 = int_to_ptr.vmem [resolvable:$true] %s17
      %23 = dma.hbm_to_vmem [thread:$0]  %s16, 32768, %s18, [#allocation3], 1024, 1024, 64
    $region9: #{encoder_forward.7} parent=1 // pred_fallthru
      _
    // Predicated region
    $region10: #{encoder_forward.7} parent=1 // pred_check
      _
    $region11: #{encoder_forward.7} parent=1 // pred_check_branch
      %25 = sbr.rel (0) target = $region13
    $region12: #{encoder_forward.7} parent=1 // pred_region
      _
    $region13: #{encoder_forward.7} parent=1 // pred_fallthru
      _
    // Predicated region
    $region14: #{encoder_forward.7} parent=1 // pred_check
      _
    $region15: #{encoder_forward.7} parent=1 // pred_check_branch
      %27 = sbr.rel (0) target = $region17
    $region16: #{encoder_forward.7} parent=1 // pred_region
      %29 = dma.done [#allocation3], 32768
    $region17: #{encoder_forward.7} parent=1 // pred_fallthru
      _
    %v30 = vld [vmem:[%s0] sm:$0xff]
    %v31 = vld [vmem:[%s0 + $0x8] sm:$0xff]
    %v32 = vld [vmem:[%s0 + $0x10] sm:$0xff]
    %v33 = vld [vmem:[%s0 + $0x18] sm:$0xff]
    %v34 = vld [vmem:[%s0 + $0x20] sm:$0xff]
    %v35 = vld [vmem:[%s0 + $0x28] sm:$0xff]
    %v36 = vld [vmem:[%s0 + $0x30] sm:$0xff]
    %v37 = vld [vmem:[%s0 + $0x38] sm:$0xff]
    %v38 = vld [vmem:[%s0 + $0x40] sm:$0xff]
    %v39 = vld [vmem:[%s0 + $0x48] sm:$0xff]
    %v40 = vld [vmem:[%s0 + $0x50] sm:$0xff]
    %v41 = vld [vmem:[%s0 + $0x58] sm:$0xff]
    %v42 = vld [vmem:[%s0 + $0x60] sm:$0xff]
    %v43 = vld [vmem:[%s0 + $0x68] sm:$0xff]
    %v44 = vld [vmem:[%s0 + $0x70] sm:$0xff]
    %v45 = vld [vmem:[%s0 + $0x78] sm:$0xff]
    %v46 = vld [vmem:[#allocation2] sm:$0xff]
    %v47 = vld [vmem:[#allocation2 + $0x8] sm:$0xff]
    %v48 = vld [vmem:[#allocation2 + $0x10] sm:$0xff]
    %v49 = vld [vmem:[#allocation2 + $0x18] sm:$0xff]
    %v50 = vld [vmem:[#allocation2 + $0x20] sm:$0xff]
    %v51 = vld [vmem:[#allocation2 + $0x28] sm:$0xff]
    %v52 = vld [vmem:[#allocation2 + $0x30] sm:$0xff]
    %v53 = vld [vmem:[#allocation2 + $0x38] sm:$0xff]
    %v54 = vld [vmem:[#allocation2 + $0x40] sm:$0xff]
    %v55 = vld [vmem:[#allocation2 + $0x48] sm:$0xff]
    %v56 = vld [vmem:[#allocation2 + $0x50] sm:$0xff]
    %v57 = vld [vmem:[#allocation2 + $0x58] sm:$0xff]
    %v58 = vld [vmem:[#allocation2 + $0x60] sm:$0xff]
    %v59 = vld [vmem:[#allocation2 + $0x68] sm:$0xff]
    %v60 = vld [vmem:[#allocation2 + $0x70] sm:$0xff]
    %v61 = vld [vmem:[#allocation2 + $0x78] sm:$0xff]
    %v62 = vld [vmem:[#allocation2 + $0x80] sm:$0xff]
    %v63 = vld [vmem:[#allocation2 + $0x88] sm:$0xff]
    %v64 = vld [vmem:[#allocation2 + $0x90] sm:$0xff]
    %v65 = vld [vmem:[#allocation2 + $0x98] sm:$0xff]
    %v66 = vld [vmem:[#allocation2 + $0xa0] sm:$0xff]
    %v67 = vld [vmem:[#allocation2 + $0xa8] sm:$0xff]
    %v68 = vld [vmem:[#allocation2 + $0xb0] sm:$0xff]
    %v69 = vld [vmem:[#allocation2 + $0xb8] sm:$0xff]
    %v70 = vld [vmem:[#allocation2 + $0xc0] sm:$0xff]
    %v71 = vld [vmem:[#allocation2 + $0xc8] sm:$0xff]
    %v72 = vld [vmem:[#allocation2 + $0xd0] sm:$0xff]
    %v73 = vld [vmem:[#allocation2 + $0xd8] sm:$0xff]
    %v74 = vld [vmem:[#allocation2 + $0xe0] sm:$0xff]
    %v75 = vld [vmem:[#allocation2 + $0xe8] sm:$0xff]
    %v76 = vld [vmem:[#allocation2 + $0xf0] sm:$0xff]
    %v77 = vld [vmem:[#allocation2 + $0xf8] sm:$0xff]
    %v78 = vld [vmem:[#allocation2 + $0x100] sm:$0xff]
    %v79 = vld [vmem:[#allocation2 + $0x108] sm:$0xff]
    %v80 = vld [vmem:[#allocation2 + $0x110] sm:$0xff]
    %v81 = vld [vmem:[#allocation2 + $0x118] sm:$0xff]
    %v82 = vld [vmem:[#allocation2 + $0x120] sm:$0xff]
    %v83 = vld [vmem:[#allocation2 + $0x128] sm:$0xff]
    %v84 = vld [vmem:[#allocation2 + $0x130] sm:$0xff]
    %v85 = vld [vmem:[#allocation2 + $0x138] sm:$0xff]
    %v86 = vld [vmem:[#allocation2 + $0x140] sm:$0xff]
    %v87 = vld [vmem:[#allocation2 + $0x148] sm:$0xff]
    %v88 = vld [vmem:[#allocation2 + $0x150] sm:$0xff]
    %v89 = vld [vmem:[#allocation2 + $0x158] sm:$0xff]
    %v90 = vld [vmem:[#allocation2 + $0x160] sm:$0xff]
    %v91 = vld [vmem:[#allocation2 + $0x168] sm:$0xff]
    %v92 = vld [vmem:[#allocation2 + $0x170] sm:$0xff]
    %v93 = vld [vmem:[#allocation2 + $0x178] sm:$0xff]
    %v94 = vld [vmem:[#allocation2 + $0x180] sm:$0xff]
    %v95 = vld [vmem:[#allocation2 + $0x188] sm:$0xff]
    %v96 = vld [vmem:[#allocation2 + $0x190] sm:$0xff]
    %v97 = vld [vmem:[#allocation2 + $0x198] sm:$0xff]
    %v98 = vld [vmem:[#allocation2 + $0x1a0] sm:$0xff]
    %v99 = vld [vmem:[#allocation2 + $0x1a8] sm:$0xff]
    %v100 = vld [vmem:[#allocation2 + $0x1b0] sm:$0xff]
    %v101 = vld [vmem:[#allocation2 + $0x1b8] sm:$0xff]
    %v102 = vld [vmem:[#allocation2 + $0x1c0] sm:$0xff]
    %v103 = vld [vmem:[#allocation2 + $0x1c8] sm:$0xff]
    %v104 = vld [vmem:[#allocation2 + $0x1d0] sm:$0xff]
    %v105 = vld [vmem:[#allocation2 + $0x1d8] sm:$0xff]
    %v106 = vld [vmem:[#allocation2 + $0x1e0] sm:$0xff]
    %v107 = vld [vmem:[#allocation2 + $0x1e8] sm:$0xff]
    %v108 = vld [vmem:[#allocation2 + $0x1f0] sm:$0xff]
    %v109 = vld [vmem:[#allocation2 + $0x1f8] sm:$0xff]
    %v110 = vld [vmem:[#allocation2 + $0x200] sm:$0xff]
    %v111 = vld [vmem:[#allocation2 + $0x208] sm:$0xff]
    %v112 = vld [vmem:[#allocation2 + $0x210] sm:$0xff]
    %v113 = vld [vmem:[#allocation2 + $0x218] sm:$0xff]
    %v114 = vld [vmem:[#allocation2 + $0x220] sm:$0xff]
    %v115 = vld [vmem:[#allocation2 + $0x228] sm:$0xff]
    %v116 = vld [vmem:[#allocation2 + $0x230] sm:$0xff]
    %v117 = vld [vmem:[#allocation2 + $0x238] sm:$0xff]
    %v118 = vld [vmem:[#allocation2 + $0x240] sm:$0xff]
    %v119 = vld [vmem:[#allocation2 + $0x248] sm:$0xff]
    %v120 = vld [vmem:[#allocation2 + $0x250] sm:$0xff]
    %v121 = vld [vmem:[#allocation2 + $0x258] sm:$0xff]
    %v122 = vld [vmem:[#allocation2 + $0x260] sm:$0xff]
    %v123 = vld [vmem:[#allocation2 + $0x268] sm:$0xff]
    %v124 = vld [vmem:[#allocation2 + $0x270] sm:$0xff]
    %v125 = vld [vmem:[#allocation2 + $0x278] sm:$0xff]
    %v126 = vld [vmem:[#allocation2 + $0x280] sm:$0xff]
    %v127 = vld [vmem:[#allocation2 + $0x288] sm:$0xff]
    %v128 = vld [vmem:[#allocation2 + $0x290] sm:$0xff]
    %v129 = vld [vmem:[#allocation2 + $0x298] sm:$0xff]
    %v130 = vld [vmem:[#allocation2 + $0x2a0] sm:$0xff]
    %v131 = vld [vmem:[#allocation2 + $0x2a8] sm:$0xff]
    %v132 = vld [vmem:[#allocation2 + $0x2b0] sm:$0xff]
    %v133 = vld [vmem:[#allocation2 + $0x2b8] sm:$0xff]
    %v134 = vld [vmem:[#allocation2 + $0x2c0] sm:$0xff]
    %v135 = vld [vmem:[#allocation2 + $0x2c8] sm:$0xff]
    %v136 = vld [vmem:[#allocation2 + $0x2d0] sm:$0xff]
    %v137 = vld [vmem:[#allocation2 + $0x2d8] sm:$0xff]
    %v138 = vld [vmem:[#allocation2 + $0x2e0] sm:$0xff]
    %v139 = vld [vmem:[#allocation2 + $0x2e8] sm:$0xff]
    %v140 = vld [vmem:[#allocation2 + $0x2f0] sm:$0xff]
    %v141 = vld [vmem:[#allocation2 + $0x2f8] sm:$0xff]
    %v142 = vld [vmem:[#allocation2 + $0x300] sm:$0xff]
    %v143 = vld [vmem:[#allocation2 + $0x308] sm:$0xff]
    %v144 = vld [vmem:[#allocation2 + $0x310] sm:$0xff]
    %v145 = vld [vmem:[#allocation2 + $0x318] sm:$0xff]
    %v146 = vld [vmem:[#allocation2 + $0x320] sm:$0xff]
    %v147 = vld [vmem:[#allocation2 + $0x328] sm:$0xff]
    %v148 = vld [vmem:[#allocation2 + $0x330] sm:$0xff]
    %v149 = vld [vmem:[#allocation2 + $0x338] sm:$0xff]
    %v150 = vld [vmem:[#allocation2 + $0x340] sm:$0xff]
    %v151 = vld [vmem:[#allocation2 + $0x348] sm:$0xff]
    %v152 = vld [vmem:[#allocation2 + $0x350] sm:$0xff]
    %v153 = vld [vmem:[#allocation2 + $0x358] sm:$0xff]
    %v154 = vld [vmem:[#allocation2 + $0x360] sm:$0xff]
    %v155 = vld [vmem:[#allocation2 + $0x368] sm:$0xff]
    %v156 = vld [vmem:[#allocation2 + $0x370] sm:$0xff]
    %v157 = vld [vmem:[#allocation2 + $0x378] sm:$0xff]
    %v158 = vld [vmem:[#allocation2 + $0x380] sm:$0xff]
    %v159 = vld [vmem:[#allocation2 + $0x388] sm:$0xff]
    %v160 = vld [vmem:[#allocation2 + $0x390] sm:$0xff]
    %v161 = vld [vmem:[#allocation2 + $0x398] sm:$0xff]
    %v162 = vld [vmem:[#allocation2 + $0x3a0] sm:$0xff]
    %v163 = vld [vmem:[#allocation2 + $0x3a8] sm:$0xff]
    %v164 = vld [vmem:[#allocation2 + $0x3b0] sm:$0xff]
    %v165 = vld [vmem:[#allocation2 + $0x3b8] sm:$0xff]
    %v166 = vld [vmem:[#allocation2 + $0x3c0] sm:$0xff]
    %v167 = vld [vmem:[#allocation2 + $0x3c8] sm:$0xff]
    %v168 = vld [vmem:[#allocation2 + $0x3d0] sm:$0xff]
    %v169 = vld [vmem:[#allocation2 + $0x3d8] sm:$0xff]
    %v170 = vld [vmem:[#allocation2 + $0x3e0] sm:$0xff]
    %v171 = vld [vmem:[#allocation2 + $0x3e8] sm:$0xff]
    %v172 = vld [vmem:[#allocation2 + $0x3f0] sm:$0xff]
    %v173 = vld [vmem:[#allocation2 + $0x3f8] sm:$0xff]
    %v174 = vld [vmem:[#allocation2 + $0x400] sm:$0xff]
    %v175 = vld [vmem:[#allocation2 + $0x408] sm:$0xff]
    %v176 = vld [vmem:[#allocation2 + $0x410] sm:$0xff]
    %v177 = vld [vmem:[#allocation2 + $0x418] sm:$0xff]
    %v178 = vld [vmem:[#allocation2 + $0x420] sm:$0xff]
    %v179 = vld [vmem:[#allocation2 + $0x428] sm:$0xff]
    %v180 = vld [vmem:[#allocation2 + $0x430] sm:$0xff]
    %v181 = vld [vmem:[#allocation2 + $0x438] sm:$0xff]
    %v182 = vld [vmem:[#allocation2 + $0x440] sm:$0xff]
    %v183 = vld [vmem:[#allocation2 + $0x448] sm:$0xff]
    %v184 = vld [vmem:[#allocation2 + $0x450] sm:$0xff]
    %v185 = vld [vmem:[#allocation2 + $0x458] sm:$0xff]
    %v186 = vld [vmem:[#allocation2 + $0x460] sm:$0xff]
    %v187 = vld [vmem:[#allocation2 + $0x468] sm:$0xff]
    %v188 = vld [vmem:[#allocation2 + $0x470] sm:$0xff]
    %v189 = vld [vmem:[#allocation2 + $0x478] sm:$0xff]
    %v190 = vld [vmem:[#allocation2 + $0x480] sm:$0xff]
    %v191 = vld [vmem:[#allocation2 + $0x488] sm:$0xff]
    %v192 = vld [vmem:[#allocation2 + $0x490] sm:$0xff]
    %v193 = vld [vmem:[#allocation2 + $0x498] sm:$0xff]
    %v194 = vld [vmem:[#allocation2 + $0x4a0] sm:$0xff]
    %v195 = vld [vmem:[#allocation2 + $0x4a8] sm:$0xff]
    %v196 = vld [vmem:[#allocation2 + $0x4b0] sm:$0xff]
    %v197 = vld [vmem:[#allocation2 + $0x4b8] sm:$0xff]
    %v198 = vld [vmem:[#allocation2 + $0x4c0] sm:$0xff]
    %v199 = vld [vmem:[#allocation2 + $0x4c8] sm:$0xff]
    %v200 = vld [vmem:[#allocation2 + $0x4d0] sm:$0xff]
    %v201 = vld [vmem:[#allocation2 + $0x4d8] sm:$0xff]
    %v202 = vld [vmem:[#allocation2 + $0x4e0] sm:$0xff]
    %v203 = vld [vmem:[#allocation2 + $0x4e8] sm:$0xff]
    %v204 = vld [vmem:[#allocation2 + $0x4f0] sm:$0xff]
    %v205 = vld [vmem:[#allocation2 + $0x4f8] sm:$0xff]
    %v206 = vld [vmem:[#allocation2 + $0x500] sm:$0xff]
    %v207 = vld [vmem:[#allocation2 + $0x508] sm:$0xff]
    %v208 = vld [vmem:[#allocation2 + $0x510] sm:$0xff]
    %v209 = vld [vmem:[#allocation2 + $0x518] sm:$0xff]
    %v210 = vld [vmem:[#allocation2 + $0x520] sm:$0xff]
    %v211 = vld [vmem:[#allocation2 + $0x528] sm:$0xff]
    %v212 = vld [vmem:[#allocation2 + $0x530] sm:$0xff]
    %v213 = vld [vmem:[#allocation2 + $0x538] sm:$0xff]
    %v214 = vld [vmem:[#allocation2 + $0x540] sm:$0xff]
    %v215 = vld [vmem:[#allocation2 + $0x548] sm:$0xff]
    %v216 = vld [vmem:[#allocation2 + $0x550] sm:$0xff]
    %v217 = vld [vmem:[#allocation2 + $0x558] sm:$0xff]
    %v218 = vld [vmem:[#allocation2 + $0x560] sm:$0xff]
    %v219 = vld [vmem:[#allocation2 + $0x568] sm:$0xff]
    %v220 = vld [vmem:[#allocation2 + $0x570] sm:$0xff]
    %v221 = vld [vmem:[#allocation2 + $0x578] sm:$0xff]
    %v222 = vld [vmem:[#allocation2 + $0x580] sm:$0xff]
    %v223 = vld [vmem:[#allocation2 + $0x588] sm:$0xff]
    %v224 = vld [vmem:[#allocation2 + $0x590] sm:$0xff]
    %v225 = vld [vmem:[#allocation2 + $0x598] sm:$0xff]
    %v226 = vld [vmem:[#allocation2 + $0x5a0] sm:$0xff]
    %v227 = vld [vmem:[#allocation2 + $0x5a8] sm:$0xff]
    %v228 = vld [vmem:[#allocation2 + $0x5b0] sm:$0xff]
    %v229 = vld [vmem:[#allocation2 + $0x5b8] sm:$0xff]
    %v230 = vld [vmem:[#allocation2 + $0x5c0] sm:$0xff]
    %v231 = vld [vmem:[#allocation2 + $0x5c8] sm:$0xff]
    %v232 = vld [vmem:[#allocation2 + $0x5d0] sm:$0xff]
    %v233 = vld [vmem:[#allocation2 + $0x5d8] sm:$0xff]
    %v234 = vld [vmem:[#allocation2 + $0x5e0] sm:$0xff]
    %v235 = vld [vmem:[#allocation2 + $0x5e8] sm:$0xff]
    %v236 = vld [vmem:[#allocation2 + $0x5f0] sm:$0xff]
    %v237 = vld [vmem:[#allocation2 + $0x5f8] sm:$0xff]
    %v238 = vld [vmem:[#allocation2 + $0x600] sm:$0xff]
    %v239 = vld [vmem:[#allocation2 + $0x608] sm:$0xff]
    %v240 = vld [vmem:[#allocation2 + $0x610] sm:$0xff]
    %v241 = vld [vmem:[#allocation2 + $0x618] sm:$0xff]
    %v242 = vld [vmem:[#allocation2 + $0x620] sm:$0xff]
    %v243 = vld [vmem:[#allocation2 + $0x628] sm:$0xff]
    %v244 = vld [vmem:[#allocation2 + $0x630] sm:$0xff]
    %v245 = vld [vmem:[#allocation2 + $0x638] sm:$0xff]
    %v246 = vld [vmem:[#allocation2 + $0x640] sm:$0xff]
    %v247 = vld [vmem:[#allocation2 + $0x648] sm:$0xff]
    %v248 = vld [vmem:[#allocation2 + $0x650] sm:$0xff]
    %v249 = vld [vmem:[#allocation2 + $0x658] sm:$0xff]
    %v250 = vld [vmem:[#allocation2 + $0x660] sm:$0xff]
    %v251 = vld [vmem:[#allocation2 + $0x668] sm:$0xff]
    %v252 = vld [vmem:[#allocation2 + $0x670] sm:$0xff]
    %v253 = vld [vmem:[#allocation2 + $0x678] sm:$0xff]
    %v254 = vld [vmem:[#allocation2 + $0x680] sm:$0xff]
    %v255 = vld [vmem:[#allocation2 + $0x688] sm:$0xff]
    %v256 = vld [vmem:[#allocation2 + $0x690] sm:$0xff]
    %v257 = vld [vmem:[#allocation2 + $0x698] sm:$0xff]
    %v258 = vld [vmem:[#allocation2 + $0x6a0] sm:$0xff]
    %v259 = vld [vmem:[#allocation2 + $0x6a8] sm:$0xff]
    %v260 = vld [vmem:[#allocation2 + $0x6b0] sm:$0xff]
    %v261 = vld [vmem:[#allocation2 + $0x6b8] sm:$0xff]
    %v262 = vld [vmem:[#allocation2 + $0x6c0] sm:$0xff]
    %v263 = vld [vmem:[#allocation2 + $0x6c8] sm:$0xff]
    %v264 = vld [vmem:[#allocation2 + $0x6d0] sm:$0xff]
    %v265 = vld [vmem:[#allocation2 + $0x6d8] sm:$0xff]
    %v266 = vld [vmem:[#allocation2 + $0x6e0] sm:$0xff]
    %v267 = vld [vmem:[#allocation2 + $0x6e8] sm:$0xff]
    %v268 = vld [vmem:[#allocation2 + $0x6f0] sm:$0xff]
    %v269 = vld [vmem:[#allocation2 + $0x6f8] sm:$0xff]
    %v270 = vld [vmem:[#allocation2 + $0x700] sm:$0xff]
    %v271 = vld [vmem:[#allocation2 + $0x708] sm:$0xff]
    %v272 = vld [vmem:[#allocation2 + $0x710] sm:$0xff]
    %v273 = vld [vmem:[#allocation2 + $0x718] sm:$0xff]
    %v274 = vld [vmem:[#allocation2 + $0x720] sm:$0xff]
    %v275 = vld [vmem:[#allocation2 + $0x728] sm:$0xff]
    %v276 = vld [vmem:[#allocation2 + $0x730] sm:$0xff]
    %v277 = vld [vmem:[#allocation2 + $0x738] sm:$0xff]
    %v278 = vld [vmem:[#allocation2 + $0x740] sm:$0xff]
    %v279 = vld [vmem:[#allocation2 + $0x748] sm:$0xff]
    %v280 = vld [vmem:[#allocation2 + $0x750] sm:$0xff]
    %v281 = vld [vmem:[#allocation2 + $0x758] sm:$0xff]
    %v282 = vld [vmem:[#allocation2 + $0x760] sm:$0xff]
    %v283 = vld [vmem:[#allocation2 + $0x768] sm:$0xff]
    %v284 = vld [vmem:[#allocation2 + $0x770] sm:$0xff]
    %v285 = vld [vmem:[#allocation2 + $0x778] sm:$0xff]
    %v286 = vld [vmem:[#allocation2 + $0x780] sm:$0xff]
    %v287 = vld [vmem:[#allocation2 + $0x788] sm:$0xff]
    %v288 = vld [vmem:[#allocation2 + $0x790] sm:$0xff]
    %v289 = vld [vmem:[#allocation2 + $0x798] sm:$0xff]
    %v290 = vld [vmem:[#allocation2 + $0x7a0] sm:$0xff]
    %v291 = vld [vmem:[#allocation2 + $0x7a8] sm:$0xff]
    %v292 = vld [vmem:[#allocation2 + $0x7b0] sm:$0xff]
    %v293 = vld [vmem:[#allocation2 + $0x7b8] sm:$0xff]
    %v294 = vld [vmem:[#allocation2 + $0x7c0] sm:$0xff]
    %v295 = vld [vmem:[#allocation2 + $0x7c8] sm:$0xff]
    %v296 = vld [vmem:[#allocation2 + $0x7d0] sm:$0xff]
    %v297 = vld [vmem:[#allocation2 + $0x7d8] sm:$0xff]
    %v298 = vld [vmem:[#allocation2 + $0x7e0] sm:$0xff]
    %v299 = vld [vmem:[#allocation2 + $0x7e8] sm:$0xff]
    %v300 = vld [vmem:[#allocation2 + $0x7f0] sm:$0xff]
    %v301 = vld [vmem:[#allocation2 + $0x7f8] sm:$0xff]
    %v302 = vld [vmem:[%s2] sm:$0xff]
    %v304 = vperm.slane %v302, 0
    %v305 = vperm.slane %v302, 1
    %v306 = vperm.slane %v302, 2
    %v307 = vperm.slane %v302, 3
    %v308 = vperm.slane %v302, 4
    %v309 = vperm.slane %v302, 5
    %v310 = vperm.slane %v302, 6
    %v311 = vperm.slane %v302, 7
    %320 = vmatpush.msra.mxu0 %v166
    %321 = vmatpush.msra.mxu0 %v158
    %322 = vmatpush.msra.mxu0 %v150
    %323 = vmatpush.msra.mxu0 %v142
    %324 = vmatpush.msra.mxu0 %v134
    %325 = vmatpush.msra.mxu0 %v126
    %326 = vmatpush.msra.mxu0 %v118
    %327 = vmatpush.msra.mxu0 %v110
    %328 = vmatpush.msra.mxu0 %v102
    %329 = vmatpush.msra.mxu0 %v94
    %330 = vmatpush.msra.mxu0 %v86
    %331 = vmatpush.msra.mxu0 %v78
    %332 = vmatpush.msra.mxu0 %v70
    %333 = vmatpush.msra.mxu0 %v62
    %334 = vmatpush.msra.mxu0 %v54
    %335 = vmatpush.msra.mxu0 %v46
    %336 = vmatmul.f32.gmra.mxu0 %v30
    %v337 = vpop.f32.mrf.mxu0
    %v338 = vadd.f32 %v304, %v337
    %339 = vmatmul.f32.gmra.mxu0 %v32
    %v340 = vpop.f32.mrf.mxu0
    %v341 = vadd.f32 %v304, %v340
    %342 = vmatmul.f32.gmra.mxu0 %v34
    %v343 = vpop.f32.mrf.mxu0
    %v344 = vadd.f32 %v304, %v343
    %345 = vmatmul.f32.gmra.mxu0 %v36
    %v346 = vpop.f32.mrf.mxu0
    %v347 = vadd.f32 %v304, %v346
    %348 = vmatmul.f32.gmra.mxu0 %v38
    %v349 = vpop.f32.mrf.mxu0
    %v350 = vadd.f32 %v304, %v349
    %351 = vmatmul.f32.gmra.mxu0 %v40
    %v352 = vpop.f32.mrf.mxu0
    %v353 = vadd.f32 %v304, %v352
    %354 = vmatmul.f32.gmra.mxu0 %v42
    %v355 = vpop.f32.mrf.mxu0
    %v356 = vadd.f32 %v304, %v355
    %357 = vmatmul.f32.gmra.mxu0 %v44
    %v358 = vpop.f32.mrf.mxu0
    %v359 = vadd.f32 %v304, %v358
    %360 = vdwg.mxu0
    %361 = vmatpush.msra.mxu0 %v294
    %362 = vmatpush.msra.mxu0 %v286
    %363 = vmatpush.msra.mxu0 %v278
    %364 = vmatpush.msra.mxu0 %v270
    %365 = vmatpush.msra.mxu0 %v262
    %366 = vmatpush.msra.mxu0 %v254
    %367 = vmatpush.msra.mxu0 %v246
    %368 = vmatpush.msra.mxu0 %v238
    %369 = vmatpush.msra.mxu0 %v230
    %370 = vmatpush.msra.mxu0 %v222
    %371 = vmatpush.msra.mxu0 %v214
    %372 = vmatpush.msra.mxu0 %v206
    %373 = vmatpush.msra.mxu0 %v198
    %374 = vmatpush.msra.mxu0 %v190
    %375 = vmatpush.msra.mxu0 %v182
    %376 = vmatpush.msra.mxu0 %v174
    %377 = vmatmul.f32.gmra.mxu0 %v31
    %v378 = vpop.f32.mrf.mxu0
    %v379 = vadd.f32 %v338, %v378
    %380 = vmatmul.f32.gmra.mxu0 %v33
    %v381 = vpop.f32.mrf.mxu0
    %v382 = vadd.f32 %v341, %v381
    %383 = vmatmul.f32.gmra.mxu0 %v35
    %v384 = vpop.f32.mrf.mxu0
    %v385 = vadd.f32 %v344, %v384
    %386 = vmatmul.f32.gmra.mxu0 %v37
    %v387 = vpop.f32.mrf.mxu0
    %v388 = vadd.f32 %v347, %v387
    %389 = vmatmul.f32.gmra.mxu0 %v39
    %v390 = vpop.f32.mrf.mxu0
    %v391 = vadd.f32 %v350, %v390
    %392 = vmatmul.f32.gmra.mxu0 %v41
    %v393 = vpop.f32.mrf.mxu0
    %v394 = vadd.f32 %v353, %v393
    %395 = vmatmul.f32.gmra.mxu0 %v43
    %v396 = vpop.f32.mrf.mxu0
    %v397 = vadd.f32 %v356, %v396
    %398 = vmatmul.f32.gmra.mxu0 %v45
    %v399 = vpop.f32.mrf.mxu0
    %v400 = vadd.f32 %v359, %v399
    %401 = vdwg.mxu0
    %402 = vmatpush.msra.mxu0 %v167
    %403 = vmatpush.msra.mxu0 %v159
    %404 = vmatpush.msra.mxu0 %v151
    %405 = vmatpush.msra.mxu0 %v143
    %406 = vmatpush.msra.mxu0 %v135
    %407 = vmatpush.msra.mxu0 %v127
    %408 = vmatpush.msra.mxu0 %v119
    %409 = vmatpush.msra.mxu0 %v111
    %410 = vmatpush.msra.mxu0 %v103
    %411 = vmatpush.msra.mxu0 %v95
    %412 = vmatpush.msra.mxu0 %v87
    %413 = vmatpush.msra.mxu0 %v79
    %414 = vmatpush.msra.mxu0 %v71
    %415 = vmatpush.msra.mxu0 %v63
    %416 = vmatpush.msra.mxu0 %v55
    %417 = vmatpush.msra.mxu0 %v47
    %418 = vmatmul.f32.gmra.mxu0 %v30
    %v419 = vpop.f32.mrf.mxu0
    %v420 = vadd.f32 %v305, %v419
    %421 = vmatmul.f32.gmra.mxu0 %v32
    %v422 = vpop.f32.mrf.mxu0
    %v423 = vadd.f32 %v305, %v422
    %424 = vmatmul.f32.gmra.mxu0 %v34
    %v425 = vpop.f32.mrf.mxu0
    %v426 = vadd.f32 %v305, %v425
    %427 = vmatmul.f32.gmra.mxu0 %v36
    %v428 = vpop.f32.mrf.mxu0
    %v429 = vadd.f32 %v305, %v428
    %430 = vmatmul.f32.gmra.mxu0 %v38
    %v431 = vpop.f32.mrf.mxu0
    %v432 = vadd.f32 %v305, %v431
    %433 = vmatmul.f32.gmra.mxu0 %v40
    %v434 = vpop.f32.mrf.mxu0
    %v435 = vadd.f32 %v305, %v434
    %436 = vmatmul.f32.gmra.mxu0 %v42
    %v437 = vpop.f32.mrf.mxu0
    %v438 = vadd.f32 %v305, %v437
    %439 = vmatmul.f32.gmra.mxu0 %v44
    %v440 = vpop.f32.mrf.mxu0
    %v441 = vadd.f32 %v305, %v440
    %442 = vdwg.mxu0
    %443 = vmatpush.msra.mxu0 %v295
    %444 = vmatpush.msra.mxu0 %v287
    %445 = vmatpush.msra.mxu0 %v279
    %446 = vmatpush.msra.mxu0 %v271
    %447 = vmatpush.msra.mxu0 %v263
    %448 = vmatpush.msra.mxu0 %v255
    %449 = vmatpush.msra.mxu0 %v247
    %450 = vmatpush.msra.mxu0 %v239
    %451 = vmatpush.msra.mxu0 %v231
    %452 = vmatpush.msra.mxu0 %v223
    %453 = vmatpush.msra.mxu0 %v215
    %454 = vmatpush.msra.mxu0 %v207
    %455 = vmatpush.msra.mxu0 %v199
    %456 = vmatpush.msra.mxu0 %v191
    %457 = vmatpush.msra.mxu0 %v183
    %458 = vmatpush.msra.mxu0 %v175
    %459 = vmatmul.f32.gmra.mxu0 %v31
    %v460 = vpop.f32.mrf.mxu0
    %v461 = vadd.f32 %v420, %v460
    %462 = vmatmul.f32.gmra.mxu0 %v33
    %v463 = vpop.f32.mrf.mxu0
    %v464 = vadd.f32 %v423, %v463
    %465 = vmatmul.f32.gmra.mxu0 %v35
    %v466 = vpop.f32.mrf.mxu0
    %v467 = vadd.f32 %v426, %v466
    %468 = vmatmul.f32.gmra.mxu0 %v37
    %v469 = vpop.f32.mrf.mxu0
    %v470 = vadd.f32 %v429, %v469
    %471 = vmatmul.f32.gmra.mxu0 %v39
    %v472 = vpop.f32.mrf.mxu0
    %v473 = vadd.f32 %v432, %v472
    %474 = vmatmul.f32.gmra.mxu0 %v41
    %v475 = vpop.f32.mrf.mxu0
    %v476 = vadd.f32 %v435, %v475
    %477 = vmatmul.f32.gmra.mxu0 %v43
    %v478 = vpop.f32.mrf.mxu0
    %v479 = vadd.f32 %v438, %v478
    %480 = vmatmul.f32.gmra.mxu0 %v45
    %v481 = vpop.f32.mrf.mxu0
    %v482 = vadd.f32 %v441, %v481
    %483 = vdwg.mxu0
    %484 = vmatpush.msra.mxu0 %v168
    %485 = vmatpush.msra.mxu0 %v160
    %486 = vmatpush.msra.mxu0 %v152
    %487 = vmatpush.msra.mxu0 %v144
    %488 = vmatpush.msra.mxu0 %v136
    %489 = vmatpush.msra.mxu0 %v128
    %490 = vmatpush.msra.mxu0 %v120
    %491 = vmatpush.msra.mxu0 %v112
    %492 = vmatpush.msra.mxu0 %v104
    %493 = vmatpush.msra.mxu0 %v96
    %494 = vmatpush.msra.mxu0 %v88
    %495 = vmatpush.msra.mxu0 %v80
    %496 = vmatpush.msra.mxu0 %v72
    %497 = vmatpush.msra.mxu0 %v64
    %498 = vmatpush.msra.mxu0 %v56
    %499 = vmatpush.msra.mxu0 %v48
    %500 = vmatmul.f32.gmra.mxu0 %v30
    %v501 = vpop.f32.mrf.mxu0
    %v502 = vadd.f32 %v306, %v501
    %503 = vmatmul.f32.gmra.mxu0 %v32
    %v504 = vpop.f32.mrf.mxu0
    %v505 = vadd.f32 %v306, %v504
    %506 = vmatmul.f32.gmra.mxu0 %v34
    %v507 = vpop.f32.mrf.mxu0
    %v508 = vadd.f32 %v306, %v507
    %509 = vmatmul.f32.gmra.mxu0 %v36
    %v510 = vpop.f32.mrf.mxu0
    %v511 = vadd.f32 %v306, %v510
    %512 = vmatmul.f32.gmra.mxu0 %v38
    %v513 = vpop.f32.mrf.mxu0
    %v514 = vadd.f32 %v306, %v513
    %515 = vmatmul.f32.gmra.mxu0 %v40
    %v516 = vpop.f32.mrf.mxu0
    %v517 = vadd.f32 %v306, %v516
    %518 = vmatmul.f32.gmra.mxu0 %v42
    %v519 = vpop.f32.mrf.mxu0
    %v520 = vadd.f32 %v306, %v519
    %521 = vmatmul.f32.gmra.mxu0 %v44
    %v522 = vpop.f32.mrf.mxu0
    %v523 = vadd.f32 %v306, %v522
    %524 = vdwg.mxu0
    %525 = vmatpush.msra.mxu0 %v296
    %526 = vmatpush.msra.mxu0 %v288
    %527 = vmatpush.msra.mxu0 %v280
    %528 = vmatpush.msra.mxu0 %v272
    %529 = vmatpush.msra.mxu0 %v264
    %530 = vmatpush.msra.mxu0 %v256
    %531 = vmatpush.msra.mxu0 %v248
    %532 = vmatpush.msra.mxu0 %v240
    %533 = vmatpush.msra.mxu0 %v232
    %534 = vmatpush.msra.mxu0 %v224
    %535 = vmatpush.msra.mxu0 %v216
    %536 = vmatpush.msra.mxu0 %v208
    %537 = vmatpush.msra.mxu0 %v200
    %538 = vmatpush.msra.mxu0 %v192
    %539 = vmatpush.msra.mxu0 %v184
    %540 = vmatpush.msra.mxu0 %v176
    %541 = vmatmul.f32.gmra.mxu0 %v31
    %v542 = vpop.f32.mrf.mxu0
    %v543 = vadd.f32 %v502, %v542
    %544 = vmatmul.f32.gmra.mxu0 %v33
    %v545 = vpop.f32.mrf.mxu0
    %v546 = vadd.f32 %v505, %v545
    %547 = vmatmul.f32.gmra.mxu0 %v35
    %v548 = vpop.f32.mrf.mxu0
    %v549 = vadd.f32 %v508, %v548
    %550 = vmatmul.f32.gmra.mxu0 %v37
    %v551 = vpop.f32.mrf.mxu0
    %v552 = vadd.f32 %v511, %v551
    %553 = vmatmul.f32.gmra.mxu0 %v39
    %v554 = vpop.f32.mrf.mxu0
    %v555 = vadd.f32 %v514, %v554
    %556 = vmatmul.f32.gmra.mxu0 %v41
    %v557 = vpop.f32.mrf.mxu0
    %v558 = vadd.f32 %v517, %v557
    %559 = vmatmul.f32.gmra.mxu0 %v43
    %v560 = vpop.f32.mrf.mxu0
    %v561 = vadd.f32 %v520, %v560
    %562 = vmatmul.f32.gmra.mxu0 %v45
    %v563 = vpop.f32.mrf.mxu0
    %v564 = vadd.f32 %v523, %v563
    %565 = vdwg.mxu0
    %566 = vmatpush.msra.mxu0 %v169
    %567 = vmatpush.msra.mxu0 %v161
    %568 = vmatpush.msra.mxu0 %v153
    %569 = vmatpush.msra.mxu0 %v145
    %570 = vmatpush.msra.mxu0 %v137
    %571 = vmatpush.msra.mxu0 %v129
    %572 = vmatpush.msra.mxu0 %v121
    %573 = vmatpush.msra.mxu0 %v113
    %574 = vmatpush.msra.mxu0 %v105
    %575 = vmatpush.msra.mxu0 %v97
    %576 = vmatpush.msra.mxu0 %v89
    %577 = vmatpush.msra.mxu0 %v81
    %578 = vmatpush.msra.mxu0 %v73
    %579 = vmatpush.msra.mxu0 %v65
    %580 = vmatpush.msra.mxu0 %v57
    %581 = vmatpush.msra.mxu0 %v49
    %582 = vmatmul.f32.gmra.mxu0 %v30
    %v583 = vpop.f32.mrf.mxu0
    %v584 = vadd.f32 %v307, %v583
    %585 = vmatmul.f32.gmra.mxu0 %v32
    %v586 = vpop.f32.mrf.mxu0
    %v587 = vadd.f32 %v307, %v586
    %588 = vmatmul.f32.gmra.mxu0 %v34
    %v589 = vpop.f32.mrf.mxu0
    %v590 = vadd.f32 %v307, %v589
    %591 = vmatmul.f32.gmra.mxu0 %v36
    %v592 = vpop.f32.mrf.mxu0
    %v593 = vadd.f32 %v307, %v592
    %594 = vmatmul.f32.gmra.mxu0 %v38
    %v595 = vpop.f32.mrf.mxu0
    %v596 = vadd.f32 %v307, %v595
    %597 = vmatmul.f32.gmra.mxu0 %v40
    %v598 = vpop.f32.mrf.mxu0
    %v599 = vadd.f32 %v307, %v598
    %600 = vmatmul.f32.gmra.mxu0 %v42
    %v601 = vpop.f32.mrf.mxu0
    %v602 = vadd.f32 %v307, %v601
    %603 = vmatmul.f32.gmra.mxu0 %v44
    %v604 = vpop.f32.mrf.mxu0
    %v605 = vadd.f32 %v307, %v604
    %606 = vdwg.mxu0
    %607 = vmatpush.msra.mxu0 %v297
    %608 = vmatpush.msra.mxu0 %v289
    %609 = vmatpush.msra.mxu0 %v281
    %610 = vmatpush.msra.mxu0 %v273
    %611 = vmatpush.msra.mxu0 %v265
    %612 = vmatpush.msra.mxu0 %v257
    %613 = vmatpush.msra.mxu0 %v249
    %614 = vmatpush.msra.mxu0 %v241
    %615 = vmatpush.msra.mxu0 %v233
    %616 = vmatpush.msra.mxu0 %v225
    %617 = vmatpush.msra.mxu0 %v217
    %618 = vmatpush.msra.mxu0 %v209
    %619 = vmatpush.msra.mxu0 %v201
    %620 = vmatpush.msra.mxu0 %v193
    %621 = vmatpush.msra.mxu0 %v185
    %622 = vmatpush.msra.mxu0 %v177
    %623 = vmatmul.f32.gmra.mxu0 %v31
    %v624 = vpop.f32.mrf.mxu0
    %v625 = vadd.f32 %v584, %v624
    %626 = vmatmul.f32.gmra.mxu0 %v33
    %v627 = vpop.f32.mrf.mxu0
    %v628 = vadd.f32 %v587, %v627
    %629 = vmatmul.f32.gmra.mxu0 %v35
    %v630 = vpop.f32.mrf.mxu0
    %v631 = vadd.f32 %v590, %v630
    %632 = vmatmul.f32.gmra.mxu0 %v37
    %v633 = vpop.f32.mrf.mxu0
    %v634 = vadd.f32 %v593, %v633
    %635 = vmatmul.f32.gmra.mxu0 %v39
    %v636 = vpop.f32.mrf.mxu0
    %v637 = vadd.f32 %v596, %v636
    %638 = vmatmul.f32.gmra.mxu0 %v41
    %v639 = vpop.f32.mrf.mxu0
    %v640 = vadd.f32 %v599, %v639
    %641 = vmatmul.f32.gmra.mxu0 %v43
    %v642 = vpop.f32.mrf.mxu0
    %v643 = vadd.f32 %v602, %v642
    %644 = vmatmul.f32.gmra.mxu0 %v45
    %v645 = vpop.f32.mrf.mxu0
    %v646 = vadd.f32 %v605, %v645
    %647 = vdwg.mxu0
    %648 = vmatpush.msra.mxu0 %v170
    %649 = vmatpush.msra.mxu0 %v162
    %650 = vmatpush.msra.mxu0 %v154
    %651 = vmatpush.msra.mxu0 %v146
    %652 = vmatpush.msra.mxu0 %v138
    %653 = vmatpush.msra.mxu0 %v130
    %654 = vmatpush.msra.mxu0 %v122
    %655 = vmatpush.msra.mxu0 %v114
    %656 = vmatpush.msra.mxu0 %v106
    %657 = vmatpush.msra.mxu0 %v98
    %658 = vmatpush.msra.mxu0 %v90
    %659 = vmatpush.msra.mxu0 %v82
    %660 = vmatpush.msra.mxu0 %v74
    %661 = vmatpush.msra.mxu0 %v66
    %662 = vmatpush.msra.mxu0 %v58
    %663 = vmatpush.msra.mxu0 %v50
    %664 = vmatmul.f32.gmra.mxu0 %v30
    %v665 = vpop.f32.mrf.mxu0
    %v666 = vadd.f32 %v308, %v665
    %667 = vmatmul.f32.gmra.mxu0 %v32
    %v668 = vpop.f32.mrf.mxu0
    %v669 = vadd.f32 %v308, %v668
    %670 = vmatmul.f32.gmra.mxu0 %v34
    %v671 = vpop.f32.mrf.mxu0
    %v672 = vadd.f32 %v308, %v671
    %673 = vmatmul.f32.gmra.mxu0 %v36
    %v674 = vpop.f32.mrf.mxu0
    %v675 = vadd.f32 %v308, %v674
    %676 = vmatmul.f32.gmra.mxu0 %v38
    %v677 = vpop.f32.mrf.mxu0
    %v678 = vadd.f32 %v308, %v677
    %679 = vmatmul.f32.gmra.mxu0 %v40
    %v680 = vpop.f32.mrf.mxu0
    %v681 = vadd.f32 %v308, %v680
    %682 = vmatmul.f32.gmra.mxu0 %v42
    %v683 = vpop.f32.mrf.mxu0
    %v684 = vadd.f32 %v308, %v683
    %685 = vmatmul.f32.gmra.mxu0 %v44
    %v686 = vpop.f32.mrf.mxu0
    %v687 = vadd.f32 %v308, %v686
    %688 = vdwg.mxu0
    %689 = vmatpush.msra.mxu0 %v298
    %690 = vmatpush.msra.mxu0 %v290
    %691 = vmatpush.msra.mxu0 %v282
    %692 = vmatpush.msra.mxu0 %v274
    %693 = vmatpush.msra.mxu0 %v266
    %694 = vmatpush.msra.mxu0 %v258
    %695 = vmatpush.msra.mxu0 %v250
    %696 = vmatpush.msra.mxu0 %v242
    %697 = vmatpush.msra.mxu0 %v234
    %698 = vmatpush.msra.mxu0 %v226
    %699 = vmatpush.msra.mxu0 %v218
    %700 = vmatpush.msra.mxu0 %v210
    %701 = vmatpush.msra.mxu0 %v202
    %702 = vmatpush.msra.mxu0 %v194
    %703 = vmatpush.msra.mxu0 %v186
    %704 = vmatpush.msra.mxu0 %v178
    %705 = vmatmul.f32.gmra.mxu0 %v31
    %v706 = vpop.f32.mrf.mxu0
    %v707 = vadd.f32 %v666, %v706
    %708 = vmatmul.f32.gmra.mxu0 %v33
    %v709 = vpop.f32.mrf.mxu0
    %v710 = vadd.f32 %v669, %v709
    %711 = vmatmul.f32.gmra.mxu0 %v35
    %v712 = vpop.f32.mrf.mxu0
    %v713 = vadd.f32 %v672, %v712
    %714 = vmatmul.f32.gmra.mxu0 %v37
    %v715 = vpop.f32.mrf.mxu0
    %v716 = vadd.f32 %v675, %v715
    %717 = vmatmul.f32.gmra.mxu0 %v39
    %v718 = vpop.f32.mrf.mxu0
    %v719 = vadd.f32 %v678, %v718
    %720 = vmatmul.f32.gmra.mxu0 %v41
    %v721 = vpop.f32.mrf.mxu0
    %v722 = vadd.f32 %v681, %v721
    %723 = vmatmul.f32.gmra.mxu0 %v43
    %v724 = vpop.f32.mrf.mxu0
    %v725 = vadd.f32 %v684, %v724
    %726 = vmatmul.f32.gmra.mxu0 %v45
    %v727 = vpop.f32.mrf.mxu0
    %v728 = vadd.f32 %v687, %v727
    %729 = vdwg.mxu0
    %730 = vmatpush.msra.mxu0 %v171
    %731 = vmatpush.msra.mxu0 %v163
    %732 = vmatpush.msra.mxu0 %v155
    %733 = vmatpush.msra.mxu0 %v147
    %734 = vmatpush.msra.mxu0 %v139
    %735 = vmatpush.msra.mxu0 %v131
    %736 = vmatpush.msra.mxu0 %v123
    %737 = vmatpush.msra.mxu0 %v115
    %738 = vmatpush.msra.mxu0 %v107
    %739 = vmatpush.msra.mxu0 %v99
    %740 = vmatpush.msra.mxu0 %v91
    %741 = vmatpush.msra.mxu0 %v83
    %742 = vmatpush.msra.mxu0 %v75
    %743 = vmatpush.msra.mxu0 %v67
    %744 = vmatpush.msra.mxu0 %v59
    %745 = vmatpush.msra.mxu0 %v51
    %746 = vmatmul.f32.gmra.mxu0 %v30
    %v747 = vpop.f32.mrf.mxu0
    %v748 = vadd.f32 %v309, %v747
    %749 = vmatmul.f32.gmra.mxu0 %v32
    %v750 = vpop.f32.mrf.mxu0
    %v751 = vadd.f32 %v309, %v750
    %752 = vmatmul.f32.gmra.mxu0 %v34
    %v753 = vpop.f32.mrf.mxu0
    %v754 = vadd.f32 %v309, %v753
    %755 = vmatmul.f32.gmra.mxu0 %v36
    %v756 = vpop.f32.mrf.mxu0
    %v757 = vadd.f32 %v309, %v756
    %758 = vmatmul.f32.gmra.mxu0 %v38
    %v759 = vpop.f32.mrf.mxu0
    %v760 = vadd.f32 %v309, %v759
    %761 = vmatmul.f32.gmra.mxu0 %v40
    %v762 = vpop.f32.mrf.mxu0
    %v763 = vadd.f32 %v309, %v762
    %764 = vmatmul.f32.gmra.mxu0 %v42
    %v765 = vpop.f32.mrf.mxu0
    %v766 = vadd.f32 %v309, %v765
    %767 = vmatmul.f32.gmra.mxu0 %v44
    %v768 = vpop.f32.mrf.mxu0
    %v769 = vadd.f32 %v309, %v768
    %770 = vdwg.mxu0
    %771 = vmatpush.msra.mxu0 %v299
    %772 = vmatpush.msra.mxu0 %v291
    %773 = vmatpush.msra.mxu0 %v283
    %774 = vmatpush.msra.mxu0 %v275
    %775 = vmatpush.msra.mxu0 %v267
    %776 = vmatpush.msra.mxu0 %v259
    %777 = vmatpush.msra.mxu0 %v251
    %778 = vmatpush.msra.mxu0 %v243
    %779 = vmatpush.msra.mxu0 %v235
    %780 = vmatpush.msra.mxu0 %v227
    %781 = vmatpush.msra.mxu0 %v219
    %782 = vmatpush.msra.mxu0 %v211
    %783 = vmatpush.msra.mxu0 %v203
    %784 = vmatpush.msra.mxu0 %v195
    %785 = vmatpush.msra.mxu0 %v187
    %786 = vmatpush.msra.mxu0 %v179
    %787 = vmatmul.f32.gmra.mxu0 %v31
    %v788 = vpop.f32.mrf.mxu0
    %v789 = vadd.f32 %v748, %v788
    %790 = vmatmul.f32.gmra.mxu0 %v33
    %v791 = vpop.f32.mrf.mxu0
    %v792 = vadd.f32 %v751, %v791
    %793 = vmatmul.f32.gmra.mxu0 %v35
    %v794 = vpop.f32.mrf.mxu0
    %v795 = vadd.f32 %v754, %v794
    %796 = vmatmul.f32.gmra.mxu0 %v37
    %v797 = vpop.f32.mrf.mxu0
    %v798 = vadd.f32 %v757, %v797
    %799 = vmatmul.f32.gmra.mxu0 %v39
    %v800 = vpop.f32.mrf.mxu0
    %v801 = vadd.f32 %v760, %v800
    %802 = vmatmul.f32.gmra.mxu0 %v41
    %v803 = vpop.f32.mrf.mxu0
    %v804 = vadd.f32 %v763, %v803
    %805 = vmatmul.f32.gmra.mxu0 %v43
    %v806 = vpop.f32.mrf.mxu0
    %v807 = vadd.f32 %v766, %v806
    %808 = vmatmul.f32.gmra.mxu0 %v45
    %v809 = vpop.f32.mrf.mxu0
    %v810 = vadd.f32 %v769, %v809
    %811 = vdwg.mxu0
    %812 = vmatpush.msra.mxu0 %v172
    %813 = vmatpush.msra.mxu0 %v164
    %814 = vmatpush.msra.mxu0 %v156
    %815 = vmatpush.msra.mxu0 %v148
    %816 = vmatpush.msra.mxu0 %v140
    %817 = vmatpush.msra.mxu0 %v132
    %818 = vmatpush.msra.mxu0 %v124
    %819 = vmatpush.msra.mxu0 %v116
    %820 = vmatpush.msra.mxu0 %v108
    %821 = vmatpush.msra.mxu0 %v100
    %822 = vmatpush.msra.mxu0 %v92
    %823 = vmatpush.msra.mxu0 %v84
    %824 = vmatpush.msra.mxu0 %v76
    %825 = vmatpush.msra.mxu0 %v68
    %826 = vmatpush.msra.mxu0 %v60
    %827 = vmatpush.msra.mxu0 %v52
    %828 = vmatmul.f32.gmra.mxu0 %v30
    %v829 = vpop.f32.mrf.mxu0
    %v830 = vadd.f32 %v310, %v829
    %831 = vmatmul.f32.gmra.mxu0 %v32
    %v832 = vpop.f32.mrf.mxu0
    %v833 = vadd.f32 %v310, %v832
    %834 = vmatmul.f32.gmra.mxu0 %v34
    %v835 = vpop.f32.mrf.mxu0
    %v836 = vadd.f32 %v310, %v835
    %837 = vmatmul.f32.gmra.mxu0 %v36
    %v838 = vpop.f32.mrf.mxu0
    %v839 = vadd.f32 %v310, %v838
    %840 = vmatmul.f32.gmra.mxu0 %v38
    %v841 = vpop.f32.mrf.mxu0
    %v842 = vadd.f32 %v310, %v841
    %843 = vmatmul.f32.gmra.mxu0 %v40
    %v844 = vpop.f32.mrf.mxu0
    %v845 = vadd.f32 %v310, %v844
    %846 = vmatmul.f32.gmra.mxu0 %v42
    %v847 = vpop.f32.mrf.mxu0
    %v848 = vadd.f32 %v310, %v847
    %849 = vmatmul.f32.gmra.mxu0 %v44
    %v850 = vpop.f32.mrf.mxu0
    %v851 = vadd.f32 %v310, %v850
    %852 = vdwg.mxu0
    %853 = vmatpush.msra.mxu0 %v300
    %854 = vmatpush.msra.mxu0 %v292
    %855 = vmatpush.msra.mxu0 %v284
    %856 = vmatpush.msra.mxu0 %v276
    %857 = vmatpush.msra.mxu0 %v268
    %858 = vmatpush.msra.mxu0 %v260
    %859 = vmatpush.msra.mxu0 %v252
    %860 = vmatpush.msra.mxu0 %v244
    %861 = vmatpush.msra.mxu0 %v236
    %862 = vmatpush.msra.mxu0 %v228
    %863 = vmatpush.msra.mxu0 %v220
    %864 = vmatpush.msra.mxu0 %v212
    %865 = vmatpush.msra.mxu0 %v204
    %866 = vmatpush.msra.mxu0 %v196
    %867 = vmatpush.msra.mxu0 %v188
    %868 = vmatpush.msra.mxu0 %v180
    %869 = vmatmul.f32.gmra.mxu0 %v31
    %v870 = vpop.f32.mrf.mxu0
    %v871 = vadd.f32 %v830, %v870
    %872 = vmatmul.f32.gmra.mxu0 %v33
    %v873 = vpop.f32.mrf.mxu0
    %v874 = vadd.f32 %v833, %v873
    %875 = vmatmul.f32.gmra.mxu0 %v35
    %v876 = vpop.f32.mrf.mxu0
    %v877 = vadd.f32 %v836, %v876
    %878 = vmatmul.f32.gmra.mxu0 %v37
    %v879 = vpop.f32.mrf.mxu0
    %v880 = vadd.f32 %v839, %v879
    %881 = vmatmul.f32.gmra.mxu0 %v39
    %v882 = vpop.f32.mrf.mxu0
    %v883 = vadd.f32 %v842, %v882
    %884 = vmatmul.f32.gmra.mxu0 %v41
    %v885 = vpop.f32.mrf.mxu0
    %v886 = vadd.f32 %v845, %v885
    %887 = vmatmul.f32.gmra.mxu0 %v43
    %v888 = vpop.f32.mrf.mxu0
    %v889 = vadd.f32 %v848, %v888
    %890 = vmatmul.f32.gmra.mxu0 %v45
    %v891 = vpop.f32.mrf.mxu0
    %v892 = vadd.f32 %v851, %v891
    %893 = vdwg.mxu0
    %894 = vmatpush.msra.mxu0 %v173
    %895 = vmatpush.msra.mxu0 %v165
    %896 = vmatpush.msra.mxu0 %v157
    %897 = vmatpush.msra.mxu0 %v149
    %898 = vmatpush.msra.mxu0 %v141
    %899 = vmatpush.msra.mxu0 %v133
    %900 = vmatpush.msra.mxu0 %v125
    %901 = vmatpush.msra.mxu0 %v117
    %902 = vmatpush.msra.mxu0 %v109
    %903 = vmatpush.msra.mxu0 %v101
    %904 = vmatpush.msra.mxu0 %v93
    %905 = vmatpush.msra.mxu0 %v85
    %906 = vmatpush.msra.mxu0 %v77
    %907 = vmatpush.msra.mxu0 %v69
    %908 = vmatpush.msra.mxu0 %v61
    %909 = vmatpush.msra.mxu0 %v53
    %910 = vmatmul.f32.gmra.mxu0 %v30
    %v911 = vpop.f32.mrf.mxu0
    %v912 = vadd.f32 %v311, %v911
    %913 = vmatmul.f32.gmra.mxu0 %v32
    %v914 = vpop.f32.mrf.mxu0
    %v915 = vadd.f32 %v311, %v914
    %916 = vmatmul.f32.gmra.mxu0 %v34
    %v917 = vpop.f32.mrf.mxu0
    %v918 = vadd.f32 %v311, %v917
    %919 = vmatmul.f32.gmra.mxu0 %v36
    %v920 = vpop.f32.mrf.mxu0
    %v921 = vadd.f32 %v311, %v920
    %922 = vmatmul.f32.gmra.mxu0 %v38
    %v923 = vpop.f32.mrf.mxu0
    %v924 = vadd.f32 %v311, %v923
    %925 = vmatmul.f32.gmra.mxu0 %v40
    %v926 = vpop.f32.mrf.mxu0
    %v927 = vadd.f32 %v311, %v926
    %928 = vmatmul.f32.gmra.mxu0 %v42
    %v929 = vpop.f32.mrf.mxu0
    %v930 = vadd.f32 %v311, %v929
    %931 = vmatmul.f32.gmra.mxu0 %v44
    %v932 = vpop.f32.mrf.mxu0
    %v933 = vadd.f32 %v311, %v932
    %934 = vdwg.mxu0
    %935 = vmatpush.msra.mxu0 %v301
    %936 = vmatpush.msra.mxu0 %v293
    %937 = vmatpush.msra.mxu0 %v285
    %938 = vmatpush.msra.mxu0 %v277
    %939 = vmatpush.msra.mxu0 %v269
    %940 = vmatpush.msra.mxu0 %v261
    %941 = vmatpush.msra.mxu0 %v253
    %942 = vmatpush.msra.mxu0 %v245
    %943 = vmatpush.msra.mxu0 %v237
    %944 = vmatpush.msra.mxu0 %v229
    %945 = vmatpush.msra.mxu0 %v221
    %946 = vmatpush.msra.mxu0 %v213
    %947 = vmatpush.msra.mxu0 %v205
    %948 = vmatpush.msra.mxu0 %v197
    %949 = vmatpush.msra.mxu0 %v189
    %950 = vmatpush.msra.mxu0 %v181
    %951 = vmatmul.f32.gmra.mxu0 %v31
    %v952 = vpop.f32.mrf.mxu0
    %v953 = vadd.f32 %v912, %v952
    %954 = vmatmul.f32.gmra.mxu0 %v33
    %v955 = vpop.f32.mrf.mxu0
    %v956 = vadd.f32 %v915, %v955
    %957 = vmatmul.f32.gmra.mxu0 %v35
    %v958 = vpop.f32.mrf.mxu0
    %v959 = vadd.f32 %v918, %v958
    %960 = vmatmul.f32.gmra.mxu0 %v37
    %v961 = vpop.f32.mrf.mxu0
    %v962 = vadd.f32 %v921, %v961
    %963 = vmatmul.f32.gmra.mxu0 %v39
    %v964 = vpop.f32.mrf.mxu0
    %v965 = vadd.f32 %v924, %v964
    %966 = vmatmul.f32.gmra.mxu0 %v41
    %v967 = vpop.f32.mrf.mxu0
    %v968 = vadd.f32 %v927, %v967
    %969 = vmatmul.f32.gmra.mxu0 %v43
    %v970 = vpop.f32.mrf.mxu0
    %v971 = vadd.f32 %v930, %v970
    %972 = vmatmul.f32.gmra.mxu0 %v45
    %v973 = vpop.f32.mrf.mxu0
    %v974 = vadd.f32 %v933, %v973
    %975 = vdwg.mxu0
    %976 = vst [vmem:[%s3] sm:$0xff] %v379
    %977 = vst [vmem:[%s3 + $0x8] sm:$0xff] %v461
    %978 = vst [vmem:[%s3 + $0x10] sm:$0xff] %v543
    %979 = vst [vmem:[%s3 + $0x18] sm:$0xff] %v625
    %980 = vst [vmem:[%s3 + $0x20] sm:$0xff] %v707
    %981 = vst [vmem:[%s3 + $0x28] sm:$0xff] %v789
    %982 = vst [vmem:[%s3 + $0x30] sm:$0xff] %v871
    %983 = vst [vmem:[%s3 + $0x38] sm:$0xff] %v953
    %984 = vst [vmem:[%s3 + $0x40] sm:$0xff] %v382
    %985 = vst [vmem:[%s3 + $0x48] sm:$0xff] %v464
    %986 = vst [vmem:[%s3 + $0x50] sm:$0xff] %v546
    %987 = vst [vmem:[%s3 + $0x58] sm:$0xff] %v628
    %988 = vst [vmem:[%s3 + $0x60] sm:$0xff] %v710
    %989 = vst [vmem:[%s3 + $0x68] sm:$0xff] %v792
    %990 = vst [vmem:[%s3 + $0x70] sm:$0xff] %v874
    %991 = vst [vmem:[%s3 + $0x78] sm:$0xff] %v956
    %992 = vst [vmem:[%s3 + $0x80] sm:$0xff] %v385
    %993 = vst [vmem:[%s3 + $0x88] sm:$0xff] %v467
    %994 = vst [vmem:[%s3 + $0x90] sm:$0xff] %v549
    %995 = vst [vmem:[%s3 + $0x98] sm:$0xff] %v631
    %996 = vst [vmem:[%s3 + $0xa0] sm:$0xff] %v713
    %997 = vst [vmem:[%s3 + $0xa8] sm:$0xff] %v795
    %998 = vst [vmem:[%s3 + $0xb0] sm:$0xff] %v877
    %999 = vst [vmem:[%s3 + $0xb8] sm:$0xff] %v959
    %1000 = vst [vmem:[%s3 + $0xc0] sm:$0xff] %v388
    %1001 = vst [vmem:[%s3 + $0xc8] sm:$0xff] %v470
    %1002 = vst [vmem:[%s3 + $0xd0] sm:$0xff] %v552
    %1003 = vst [vmem:[%s3 + $0xd8] sm:$0xff] %v634
    %1004 = vst [vmem:[%s3 + $0xe0] sm:$0xff] %v716
    %1005 = vst [vmem:[%s3 + $0xe8] sm:$0xff] %v798
    %1006 = vst [vmem:[%s3 + $0xf0] sm:$0xff] %v880
    %1007 = vst [vmem:[%s3 + $0xf8] sm:$0xff] %v962
    %1008 = vst [vmem:[%s3 + $0x100] sm:$0xff] %v391
    %1009 = vst [vmem:[%s3 + $0x108] sm:$0xff] %v473
    %1010 = vst [vmem:[%s3 + $0x110] sm:$0xff] %v555
    %1011 = vst [vmem:[%s3 + $0x118] sm:$0xff] %v637
    %1012 = vst [vmem:[%s3 + $0x120] sm:$0xff] %v719
    %1013 = vst [vmem:[%s3 + $0x128] sm:$0xff] %v801
    %1014 = vst [vmem:[%s3 + $0x130] sm:$0xff] %v883
    %1015 = vst [vmem:[%s3 + $0x138] sm:$0xff] %v965
    %1016 = vst [vmem:[%s3 + $0x140] sm:$0xff] %v394
    %1017 = vst [vmem:[%s3 + $0x148] sm:$0xff] %v476
    %1018 = vst [vmem:[%s3 + $0x150] sm:$0xff] %v558
    %1019 = vst [vmem:[%s3 + $0x158] sm:$0xff] %v640
    %1020 = vst [vmem:[%s3 + $0x160] sm:$0xff] %v722
    %1021 = vst [vmem:[%s3 + $0x168] sm:$0xff] %v804
    %1022 = vst [vmem:[%s3 + $0x170] sm:$0xff] %v886
    %1023 = vst [vmem:[%s3 + $0x178] sm:$0xff] %v968
    %1024 = vst [vmem:[%s3 + $0x180] sm:$0xff] %v397
    %1025 = vst [vmem:[%s3 + $0x188] sm:$0xff] %v479
    %1026 = vst [vmem:[%s3 + $0x190] sm:$0xff] %v561
    %1027 = vst [vmem:[%s3 + $0x198] sm:$0xff] %v643
    %1028 = vst [vmem:[%s3 + $0x1a0] sm:$0xff] %v725
    %1029 = vst [vmem:[%s3 + $0x1a8] sm:$0xff] %v807
    %1030 = vst [vmem:[%s3 + $0x1b0] sm:$0xff] %v889
    %1031 = vst [vmem:[%s3 + $0x1b8] sm:$0xff] %v971
    %1032 = vst [vmem:[%s3 + $0x1c0] sm:$0xff] %v400
    %1033 = vst [vmem:[%s3 + $0x1c8] sm:$0xff] %v482
    %1034 = vst [vmem:[%s3 + $0x1d0] sm:$0xff] %v564
    %1035 = vst [vmem:[%s3 + $0x1d8] sm:$0xff] %v646
    %1036 = vst [vmem:[%s3 + $0x1e0] sm:$0xff] %v728
    %1037 = vst [vmem:[%s3 + $0x1e8] sm:$0xff] %v810
    %1038 = vst [vmem:[%s3 + $0x1f0] sm:$0xff] %v892
    %1039 = vst [vmem:[%s3 + $0x1f8] sm:$0xff] %v974
    // Predicated region
    $region18: #{encoder_forward.7} parent=1 // pred_check
      _
    $region19: #{encoder_forward.7} parent=1 // pred_check_branch
      %1041 = sbr.rel (0) target = $region21
    $region20: #{encoder_forward.7} parent=1 // pred_region
      _
    $region21: #{encoder_forward.7} parent=1 // pred_fallthru
      _
    // Predicated region
    $region22: #{encoder_forward.7} parent=1 // pred_check
      _
    $region23: #{encoder_forward.7} parent=1 // pred_check_branch
      %1043 = sbr.rel (0) target = $region25
    $region24: #{encoder_forward.7} parent=1 // pred_region
      _
    $region25: #{encoder_forward.7} parent=1 // pred_fallthru
      _
    %1044 = vsyncpa [#allocation3], 1

// kernel: encoder_forward.6
$region0: #{encoder_forward.6}
  #allocation0 [shape = 'u32[]', space=smem, size = 0x4, offset = 0x4, fixed_abs, tag = 'smem constant byte address 0x4 - core index']
  #allocation1 [shape = 'u32[72,128]{1,0:T(1,128)}', space=vmem, size = 0x9000, scoped, tag = 'internal scratch']
  #allocation2 [shape = 'f32[8,128]{1,0:T(8,128)}', space=vmem, size = 0x1000, scoped, tag = 'scratch operand']
  #allocation3 [shape = 'f32[8,128]{1,0:T(8,128)}', space=vmem, size = 0x1000, scoped, tag = 'scratch operand']
  %s0 = inlined_call_operand.vmem [shape: s32[8,1], index: 0, kind: input, shape index: {}]
  %s1 = inlined_call_operand.vmem [shape: f32[8,8,1024], index: 1, kind: input, shape index: {}]
  %s2 = inlined_call_operand.hbm [shape: f32[128,1024], index: 2, kind: input, shape index: {}]
  %s3 = inlined_call_operand.vmem [shape: f32[8,8,256], index: 3, kind: output, shape index: {}]
  %s4 = sld [smem:[#allocation0]]
  $region110: #{encoder_forward.6} parent=0
    _
  %s6 = ssub.s32 1, %s4
  %s7 = scalar_select 0, %s6, %s4
  $region1: #{encoder_forward.6} parent=0
    #allocation4 [shape = 'u8[262144]{0}', space=vmem, size = 0x40000, scoped, tag = 'input window, operand 1']
    #allocation5 [shape = 'u8[524288]{0}', space=vmem, size = 0x80000, scoped, tag = 'input window, operand 2']
    #allocation6 [shape = 's32[2]{0}', space=sflag, size = 0x8, scoped, tag = 'scoped memory for encoder_forward.6']
    #allocation7 [shape = 'u8[65536]{0}', space=vmem, size = 0x10000, scoped, tag = 'output window, operand 0']
    %8 = vsyncpa [#allocation6], 0
    %s9 = scalar_lea.sflag [#allocation6], 1
    %10 = vsyncpa %s9, 0
    loop: start=0, step=1, limit=4
    $region2: #{encoder_forward.6} parent=1 // loop_pre_header
      _
    $region3: #{encoder_forward.6} parent=1 // loop_header
      %s12 = sphi 0, %s16
      %p13 = scmp.ge.s32.totalorder %s12, 4
      %s19 = sphi 0, %s31
      %s20 = sphi 0, %s27
      %s21 = sphi 0, %s19
      %s22 = sphi 0, %s20
      %s23 = sphi 0, %s21
      %s24 = sphi 0, %s22
      %s32 = sphi 0, %s32
      %s34 = sphi 0, %s32
      %s35 = sphi 0, %s34
      %s49 = sphi 0, %s35
      %s65 = sphi 0, %s67
      %s68 = sphi 0, %s65
      %s69 = sphi 0, %s68
      %s85 = sphi 0, %s69
      %s91 = sphi 0, %s93
      %s94 = sphi 0, %s91
      %s95 = sphi 0, %s94
      %s111 = sphi 0, %s95
      %s127 = sphi 0, %s129
      %s130 = sphi 0, %s127
      %s131 = sphi 0, %s130
      %s147 = sphi 0, %s131
    $region4: #{encoder_forward.6} parent=1 // loop_header_branch
      %15 = sbr.rel (%p13) target = $region8
    $region5: #{encoder_forward.6} parent=1 // loop_body
      %s17 = ssub.s32 %s12, 1
      %s18 = ssub.s32 %s12, 2
      %s25 = sadd.s32 1, %s20
      %p26 = scmp.ge.s32.totalorder %s25, 1
      %s27 = scalar_select %p26, 0, %s25
      %s28 = sadd.s32 1, %s19
      %s29 = scalar_select %p26, %s28, %s19
      %p30 = scmp.ge.s32.totalorder %s29, 2
      %s31 = scalar_select %p30, 0, %s29
      %s33 = sadd.s32 %s32, 1
      %p36 = scmp.eq.s32.totalorder %s12, 1
      %p37 = scmp.ne.s32.totalorder %s32, %s34
      %p38 = scmp.eq.s32.totalorder %s12, 0
      %p39 = por %p37, %p38
      %p40 = scmp.ne.s32.totalorder %s32, %s34
      %p41 = scmp.eq.s32.totalorder %s17, 1
      %p42 = por %p40, %p41
      %p43 = scmp.ne.s32.totalorder %s34, %s35
      %p44 = scmp.eq.s32.totalorder %s17, 0
      %p45 = por %p43, %p44
      %p46 = scmp.ne.s32.totalorder %s34, %s35
      %p47 = scmp.eq.s32.totalorder %s18, 1
      %p48 = por %p46, %p47
      %p50 = scmp.ne.s32.totalorder %s35, %s49
      %p51 = scmp.eq.s32.totalorder %s18, 0
      %p52 = por %p50, %p51
      %s53 = smul.u32 %s20, 2
      %s54 = ssub.s32 0, %s53
      %s55 = smul.u32 %s19, %s54
      %s56 = sadd.s32 %s20, %s55
      %s57 = smul.u32 %s27, 2
      %s58 = ssub.s32 0, %s57
      %s59 = smul.u32 %s31, %s58
      %s60 = sadd.s32 %s27, %s59
      %s61 = ssub.s32 %s56, %s60
      %s62 = ssub.s32 %s19, %s31
      %s63 = sor.u32 %s61, %s62
      %p64 = scmp.eq.s32.totalorder %s63, 0
      %s66 = sadd.s32 %s65, 1
      %s67 = scalar_select %p64, %s65, %s66
      %p70 = pneg %p64
      %p71 = scmp.eq.s32.totalorder %s12, 1
      %p72 = por %p70, %p71
      %p73 = scmp.ne.s32.totalorder %s65, %s68
      %p74 = scmp.eq.s32.totalorder %s12, 0
      %p75 = por %p73, %p74
      %p76 = scmp.ne.s32.totalorder %s65, %s68
      %p77 = scmp.eq.s32.totalorder %s17, 1
      %p78 = por %p76, %p77
      %p79 = scmp.ne.s32.totalorder %s68, %s69
      %p80 = scmp.eq.s32.totalorder %s17, 0
      %p81 = por %p79, %p80
      %p82 = scmp.ne.s32.totalorder %s68, %s69
      %p83 = scmp.eq.s32.totalorder %s18, 1
      %p84 = por %p82, %p83
      %p86 = scmp.ne.s32.totalorder %s69, %s85
      %p87 = scmp.eq.s32.totalorder %s18, 0
      %p88 = por %p86, %p87
      %s89 = ssub.s32 %s19, %s31
      %p90 = scmp.eq.s32.totalorder %s89, 0
      %s92 = sadd.s32 %s91, 1
      %s93 = scalar_select %p90, %s91, %s92
      %p96 = pneg %p90
      %p97 = scmp.eq.s32.totalorder %s12, 1
      %p98 = por %p96, %p97
      %p99 = scmp.ne.s32.totalorder %s91, %s94
      %p100 = scmp.eq.s32.totalorder %s12, 0
      %p101 = por %p99, %p100
      %p102 = scmp.ne.s32.totalorder %s91, %s94
      %p103 = scmp.eq.s32.totalorder %s17, 1
      %p104 = por %p102, %p103
      %p105 = scmp.ne.s32.totalorder %s94, %s95
      %p106 = scmp.eq.s32.totalorder %s17, 0
      %p107 = por %p105, %p106
      %p108 = scmp.ne.s32.totalorder %s94, %s95
      %p109 = scmp.eq.s32.totalorder %s18, 1
      %p110 = por %p108, %p109
      %p112 = scmp.ne.s32.totalorder %s95, %s111
      %p113 = scmp.eq.s32.totalorder %s18, 0
      %p114 = por %p112, %p113
      %s115 = smul.u32 %s20, 2
      %s116 = ssub.s32 0, %s115
      %s117 = smul.u32 %s19, %s116
      %s118 = sadd.s32 %s20, %s117
      %s119 = smul.u32 %s27, 2
      %s120 = ssub.s32 0, %s119
      %s121 = smul.u32 %s31, %s120
      %s122 = sadd.s32 %s27, %s121
      %s123 = ssub.s32 %s118, %s122
      %s124 = ssub.s32 %s19, %s31
      %s125 = sor.u32 %s123, %s124
      %p126 = scmp.eq.s32.totalorder %s125, 0
      %s128 = sadd.s32 %s127, 1
      %s129 = scalar_select %p126, %s127, %s128
      %p132 = pneg %p126
      %p133 = scmp.eq.s32.totalorder %s12, 1
      %p134 = por %p132, %p133
      %p135 = scmp.ne.s32.totalorder %s127, %s130
      %p136 = scmp.eq.s32.totalorder %s12, 0
      %p137 = por %p135, %p136
      %p138 = scmp.ne.s32.totalorder %s127, %s130
      %p139 = scmp.eq.s32.totalorder %s17, 1
      %p140 = por %p138, %p139
      %p141 = scmp.ne.s32.totalorder %s130, %s131
      %p142 = scmp.eq.s32.totalorder %s17, 0
      %p143 = por %p141, %p142
      %p144 = scmp.ne.s32.totalorder %s130, %s131
      %p145 = scmp.eq.s32.totalorder %s18, 1
      %p146 = por %p144, %p145
      %p148 = scmp.ne.s32.totalorder %s131, %s147
      %p149 = scmp.eq.s32.totalorder %s18, 0
      %p150 = por %p148, %p149
      %p151 = scmp.le.s32.totalorder 1, %s12
      %p152 = scmp.lt.s32.totalorder %s12, 3
      %p153 = pnand %p151, %p152
      %p154 = pneg %p153
      // Predicated region
      $region9: #{encoder_forward.6} parent=5 // pred_check
        _
      $region10: #{encoder_forward.6} parent=5 // pred_check_branch
        %156 = sbr.rel (%p153) target = $region12
      $region11: #{encoder_forward.6} parent=5 // pred_region
        %s157 = ssub.s32 %s12, 1
        // Predicated region
        $region13: #{encoder_forward.6} parent=11 // pred_check
          %p158 = pneg %p45
        $region14: #{encoder_forward.6} parent=11 // pred_check_branch
          %160 = sbr.rel (%p158) target = $region16
        $region15: #{encoder_forward.6} parent=11 // pred_region
          _
        $region16: #{encoder_forward.6} parent=11 // pred_fallthru
          _
      $region12: #{encoder_forward.6} parent=5 // pred_fallthru
        _
      %p161 = scmp.lt.s32.totalorder %s12, 2
      // Predicated region
      $region17: #{encoder_forward.6} parent=5 // pred_check
        %p162 = pneg %p161
      $region18: #{encoder_forward.6} parent=5 // pred_check_branch
        %164 = sbr.rel (%p162) target = $region20
      $region19: #{encoder_forward.6} parent=5 // pred_region
        // Predicated region
        $region21: #{encoder_forward.6} parent=19 // pred_check
          %p165 = pneg %p75
        $region22: #{encoder_forward.6} parent=19 // pred_check_branch
          %167 = sbr.rel (%p165) target = $region24
        $region23: #{encoder_forward.6} parent=19 // pred_region
          %s168 = sand.u32 %s65, 1
          %s169 = sand.u32 %s65, 1
          %s170 = smul.addr %s169, 256
          %s171 = scalar_lea.vmem [#allocation4], %s170
          %s172 = smul.u32 %s20, 2
          %s173 = ssub.s32 0, %s172
          %s174 = smul.u32 %s19, %s173
          %s175 = sadd.s32 %s20, %s174
          %s176 = smul.u32 8, %s175
          %s177 = smul.u32 4, %s19
          %s178 = smul.addr %s176, 8
          %s179 = sadd.s32 %s177, %s178
          %s180 = smul.addr %s179, 8
          %s181 = scalar_lea.vmem %s1, %s180
          // Predicated region
          $region25: #{encoder_forward.6} parent=23 // pred_check
            _
          $region26: #{encoder_forward.6} parent=23 // pred_check_branch
            %183 = sbr.rel (0) target = $region28
          $region27: #{encoder_forward.6} parent=23 // pred_region
            // Predicated region
            $region29: #{encoder_forward.6} parent=27 // pred_check
              _
            $region30: #{encoder_forward.6} parent=27 // pred_check_branch
              %185 = sbr.rel (0) target = $region32
            $region31: #{encoder_forward.6} parent=27 // pred_region
              loop: start=0, step=1, limit=1
              $region33: #{encoder_forward.6} parent=31 // loop_pre_header
                _
              $region34: #{encoder_forward.6} parent=31 // loop_header
                %s187 = sphi 0, %s191
                %p188 = scmp.ge.s32.totalorder %s187, 1
                %s192 = sphi %s181, %s181
                %s193 = sphi %s171, %s171
              $region35: #{encoder_forward.6} parent=31 // loop_header_branch
                %190 = sbr.rel (%p188) target = $region39
              $region36: #{encoder_forward.6} parent=31 // loop_body
                %v194 = vld [vmem:[%s192] sm:$0xff]
                %195 = vst [vmem:[%s193] sm:$0xff] %v194
                %v196 = vld [vmem:[%s192 + $0x8] sm:$0xff]
                %197 = vst [vmem:[%s193 + $0x8] sm:$0xff] %v196
                %v198 = vld [vmem:[%s192 + $0x10] sm:$0xff]
                %199 = vst [vmem:[%s193 + $0x10] sm:$0xff] %v198
                %v200 = vld [vmem:[%s192 + $0x18] sm:$0xff]
                %201 = vst [vmem:[%s193 + $0x18] sm:$0xff] %v200
                %v202 = vld [vmem:[%s192 + $0x40] sm:$0xff]
                %203 = vst [vmem:[%s193 + $0x20] sm:$0xff] %v202
                %v204 = vld [vmem:[%s192 + $0x48] sm:$0xff]
                %205 = vst [vmem:[%s193 + $0x28] sm:$0xff] %v204
                %v206 = vld [vmem:[%s192 + $0x50] sm:$0xff]
                %207 = vst [vmem:[%s193 + $0x30] sm:$0xff] %v206
                %v208 = vld [vmem:[%s192 + $0x58] sm:$0xff]
                %209 = vst [vmem:[%s193 + $0x38] sm:$0xff] %v208
                %v210 = vld [vmem:[%s192 + $0x80] sm:$0xff]
                %211 = vst [vmem:[%s193 + $0x40] sm:$0xff] %v210
                %v212 = vld [vmem:[%s192 + $0x88] sm:$0xff]
                %213 = vst [vmem:[%s193 + $0x48] sm:$0xff] %v212
                %v214 = vld [vmem:[%s192 + $0x90] sm:$0xff]
                %215 = vst [vmem:[%s193 + $0x50] sm:$0xff] %v214
                %v216 = vld [vmem:[%s192 + $0x98] sm:$0xff]
                %217 = vst [vmem:[%s193 + $0x58] sm:$0xff] %v216
                %v218 = vld [vmem:[%s192 + $0xc0] sm:$0xff]
                %219 = vst [vmem:[%s193 + $0x60] sm:$0xff] %v218
                %v220 = vld [vmem:[%s192 + $0xc8] sm:$0xff]
                %221 = vst [vmem:[%s193 + $0x68] sm:$0xff] %v220
                %v222 = vld [vmem:[%s192 + $0xd0] sm:$0xff]
                %223 = vst [vmem:[%s193 + $0x70] sm:$0xff] %v222
                %v224 = vld [vmem:[%s192 + $0xd8] sm:$0xff]
                %225 = vst [vmem:[%s193 + $0x78] sm:$0xff] %v224
                %v226 = vld [vmem:[%s192 + $0x100] sm:$0xff]
                %227 = vst [vmem:[%s193 + $0x80] sm:$0xff] %v226
                %v228 = vld [vmem:[%s192 + $0x108] sm:$0xff]
                %229 = vst [vmem:[%s193 + $0x88] sm:$0xff] %v228
                %v230 = vld [vmem:[%s192 + $0x110] sm:$0xff]
                %231 = vst [vmem:[%s193 + $0x90] sm:$0xff] %v230
                %v232 = vld [vmem:[%s192 + $0x118] sm:$0xff]
                %233 = vst [vmem:[%s193 + $0x98] sm:$0xff] %v232
                %v234 = vld [vmem:[%s192 + $0x140] sm:$0xff]
                %235 = vst [vmem:[%s193 + $0xa0] sm:$0xff] %v234
                %v236 = vld [vmem:[%s192 + $0x148] sm:$0xff]
                %237 = vst [vmem:[%s193 + $0xa8] sm:$0xff] %v236
                %v238 = vld [vmem:[%s192 + $0x150] sm:$0xff]
                %239 = vst [vmem:[%s193 + $0xb0] sm:$0xff] %v238
                %v240 = vld [vmem:[%s192 + $0x158] sm:$0xff]
                %241 = vst [vmem:[%s193 + $0xb8] sm:$0xff] %v240
                %v242 = vld [vmem:[%s192 + $0x180] sm:$0xff]
                %243 = vst [vmem:[%s193 + $0xc0] sm:$0xff] %v242
                %v244 = vld [vmem:[%s192 + $0x188] sm:$0xff]
                %245 = vst [vmem:[%s193 + $0xc8] sm:$0xff] %v244
                %v246 = vld [vmem:[%s192 + $0x190] sm:$0xff]
                %247 = vst [vmem:[%s193 + $0xd0] sm:$0xff] %v246
                %v248 = vld [vmem:[%s192 + $0x198] sm:$0xff]
                %249 = vst [vmem:[%s193 + $0xd8] sm:$0xff] %v248
                %v250 = vld [vmem:[%s192 + $0x1c0] sm:$0xff]
                %251 = vst [vmem:[%s193 + $0xe0] sm:$0xff] %v250
                %v252 = vld [vmem:[%s192 + $0x1c8] sm:$0xff]
                %253 = vst [vmem:[%s193 + $0xe8] sm:$0xff] %v252
                %v254 = vld [vmem:[%s192 + $0x1d0] sm:$0xff]
                %255 = vst [vmem:[%s193 + $0xf0] sm:$0xff] %v254
                %v256 = vld [vmem:[%s192 + $0x1d8] sm:$0xff]
                %257 = vst [vmem:[%s193 + $0xf8] sm:$0xff] %v256
              $region37: #{encoder_forward.6} parent=31 // loop_footer
                %s191 = sadd.s32 1, %s187
              $region38: #{encoder_forward.6} parent=31 // loop_footer_branch
                %186 = sbr.rel target = $region34
              $region39: #{encoder_forward.6} parent=31 // loop_exit
                _
            $region32: #{encoder_forward.6} parent=27 // pred_fallthru
              _
            // Predicated region
            $region40: #{encoder_forward.6} parent=27 // pred_check
              _
            $region41: #{encoder_forward.6} parent=27 // pred_check_branch
              %259 = sbr.rel target = $region43
            $region42: #{encoder_forward.6} parent=27 // pred_region
              _
            $region43: #{encoder_forward.6} parent=27 // pred_fallthru
              _
          $region28: #{encoder_forward.6} parent=23 // pred_fallthru
            _
          %260 = vnop
        $region24: #{encoder_forward.6} parent=19 // pred_fallthru
          _
        // Predicated region
        $region44: #{encoder_forward.6} parent=19 // pred_check
          %p261 = pneg %p101
        $region45: #{encoder_forward.6} parent=19 // pred_check_branch
          %263 = sbr.rel (%p261) target = $region47
        $region46: #{encoder_forward.6} parent=19 // pred_region
          %s264 = sand.u32 %s91, 1
          %s265 = scalar_lea.sflag [#allocation6], %s264
          %s266 = sand.u32 %s91, 1
          %s267 = smul.addr %s266, 512
          %s268 = scalar_lea.vmem [#allocation5], %s267
          %s269 = smul.u32 4, %s19
          %271 = vsyncadd %s265, 0
          %s272 = smul.addr %s269, 8
          %s273 = scalar_lea.hbm %s2, %s272
          %s274 = sshll.u32 %s273, 4
          %s275 = int_to_ptr.hbm [resolvable:$true] %s274
          %s276 = sshll.u32 %s268, 4
          %s277 = int_to_ptr.vmem [resolvable:$true] %s276
          %282 = dma.hbm_to_vmem [thread:$0]  %s275, 8192, %s277, %s265, 1024, 512, 32
        $region47: #{encoder_forward.6} parent=19 // pred_fallthru
          _
      $region20: #{encoder_forward.6} parent=5 // pred_fallthru
        _
      %p283 = scmp.le.s32.totalorder 1, %s12
      %p284 = scmp.lt.s32.totalorder %s12, 3
      %p285 = pnand %p283, %p284
      %p286 = pneg %p285
      // Predicated region
      $region48: #{encoder_forward.6} parent=5 // pred_check
        _
      $region49: #{encoder_forward.6} parent=5 // pred_check_branch
        %288 = sbr.rel (%p285) target = $region51
      $region50: #{encoder_forward.6} parent=5 // pred_region
        %s289 = ssub.s32 %s12, 1
        %s290 = sand.u32 %s68, 1
        %s291 = sand.u32 %s68, 1
        %s292 = smul.addr %s291, 256
        %s293 = scalar_lea.vmem [#allocation4], %s292
        // Predicated region
        $region52: #{encoder_forward.6} parent=50 // pred_check
          %p294 = pneg %p81
        $region53: #{encoder_forward.6} parent=50 // pred_check_branch
          %296 = sbr.rel (%p294) target = $region55
        $region54: #{encoder_forward.6} parent=50 // pred_region
          _
        $region55: #{encoder_forward.6} parent=50 // pred_fallthru
          _
        %s297 = sand.u32 %s94, 1
        %s298 = scalar_lea.sflag [#allocation6], %s297
        %s299 = sand.u32 %s94, 1
        %s300 = smul.addr %s299, 512
        %s301 = scalar_lea.vmem [#allocation5], %s300
        // Predicated region
        $region56: #{encoder_forward.6} parent=50 // pred_check
          %p302 = pneg %p107
        $region57: #{encoder_forward.6} parent=50 // pred_check_branch
          %304 = sbr.rel (%p302) target = $region59
        $region58: #{encoder_forward.6} parent=50 // pred_region
          %306 = dma.done %s298, 8192
        $region59: #{encoder_forward.6} parent=50 // pred_fallthru
          _
        %p307 = pneg %p45
        %p308 = pneg %p42
        %s309 = sand.u32 %s68, 1
        %s310 = sand.u32 %s68, 1
        %s311 = smul.addr %s310, 256
        %s312 = scalar_lea.vmem [#allocation4], %s311
        %p313 = pneg %p81
        %p314 = pneg %p78
        %s315 = sand.u32 %s94, 1
        %s316 = scalar_lea.sflag [#allocation6], %s315
        %s317 = sand.u32 %s94, 1
        %s318 = smul.addr %s317, 512
        %s319 = scalar_lea.vmem [#allocation5], %s318
        %p320 = pneg %p107
        %p321 = pneg %p104
        %p322 = pneg %p143
        %p323 = pneg %p140
        %s324 = sand.u32 %s130, 1
        %s325 = sand.u32 %s130, 1
        %s326 = smul.addr %s325, 64
        %s327 = scalar_lea.vmem [#allocation7], %s326
        %s328 = smul.u32 %s22, 2
        %s329 = ssub.s32 0, %s328
        %s330 = smul.u32 %s21, %s329
        %s331 = sadd.s32 %s22, %s330
        %s332 = smul.u32 8, %s331
        %s333 = smul.u32 4, %s21
        %s334 = smul.u32 4, %s21
        %s335 = smul.u32 %s22, 2
        %s336 = ssub.s32 0, %s335
        %s337 = smul.u32 %s21, %s336
        %s338 = sadd.s32 %s22, %s337
        %s339 = smul.u32 8, %s338
        %p340 = scmp.eq.s32.totalorder %s22, 0
        // Predicated region
        $region60: #{encoder_forward.6} parent=50 // pred_check
          %p341 = pneg %p340
        $region61: #{encoder_forward.6} parent=50 // pred_check_branch
          %343 = sbr.rel (%p341) target = $region63
        $region62: #{encoder_forward.6} parent=50 // pred_region
          %344 = vst [vmem:[#allocation2] sm:$0xff] 0.0
          %345 = vst [vmem:[#allocation3] sm:$0xff] 0.0
        $region63: #{encoder_forward.6} parent=50 // pred_fallthru
          _
        %v346 = vld [vmem:[%s0] sm:$0xff]
        %s347 = smul.u32 %s22, 2
        %s348 = ssub.s32 0, %s347
        %s349 = smul.u32 %s21, %s348
        %s350 = sadd.s32 %s22, %s349
        %s351 = smul.u32 %s21, 7
        %s352 = smul.u32 %s350, 8
        %s353 = sadd.s32 %s352, %s351
        %v354 = vld [vmem:[#allocation2] sm:$0xff]
        %v355 = vld [vmem:[#allocation3] sm:$0xff]
        %s356 = smul.u32 %s351, 4
        %s357 = smul.addr %s356, 8
        %s358 = scalar_lea.vmem %s293, %s357 [#allocation4]
        %v359 = vld [vmem:[%s358] sm:$0xff]
        %v360 = vld [vmem:[%s358 + $0x8] sm:$0xff]
        %v361 = vld [vmem:[%s358 + $0x10] sm:$0xff]
        %v362 = vld [vmem:[%s358 + $0x18] sm:$0xff]
        %v363 = vld [vmem:[%s301] sm:$0xff]
        %v364 = vld [vmem:[%s301 + $0x8] sm:$0xff]
        %v365 = vld [vmem:[%s301 + $0x10] sm:$0xff]
        %v366 = vld [vmem:[%s301 + $0x18] sm:$0xff]
        %v367 = vld [vmem:[%s301 + $0x20] sm:$0xff]
        %v368 = vld [vmem:[%s301 + $0x28] sm:$0xff]
        %v369 = vld [vmem:[%s301 + $0x30] sm:$0xff]
        %v370 = vld [vmem:[%s301 + $0x38] sm:$0xff]
        %v371 = vld [vmem:[%s301 + $0x40] sm:$0xff]
        %v372 = vld [vmem:[%s301 + $0x48] sm:$0xff]
        %v373 = vld [vmem:[%s301 + $0x50] sm:$0xff]
        %v374 = vld [vmem:[%s301 + $0x58] sm:$0xff]
        %v375 = vld [vmem:[%s301 + $0x60] sm:$0xff]
        %v376 = vld [vmem:[%s301 + $0x68] sm:$0xff]
        %v377 = vld [vmem:[%s301 + $0x70] sm:$0xff]
        %v378 = vld [vmem:[%s301 + $0x78] sm:$0xff]
        %v379 = vld [vmem:[%s301 + $0x80] sm:$0xff]
        %v380 = vld [vmem:[%s301 + $0x88] sm:$0xff]
        %v381 = vld [vmem:[%s301 + $0x90] sm:$0xff]
        %v382 = vld [vmem:[%s301 + $0x98] sm:$0xff]
        %v383 = vld [vmem:[%s301 + $0xa0] sm:$0xff]
        %v384 = vld [vmem:[%s301 + $0xa8] sm:$0xff]
        %v385 = vld [vmem:[%s301 + $0xb0] sm:$0xff]
        %v386 = vld [vmem:[%s301 + $0xb8] sm:$0xff]
        %v387 = vld [vmem:[%s301 + $0xc0] sm:$0xff]
        %v388 = vld [vmem:[%s301 + $0xc8] sm:$0xff]
        %v389 = vld [vmem:[%s301 + $0xd0] sm:$0xff]
        %v390 = vld [vmem:[%s301 + $0xd8] sm:$0xff]
        %v391 = vld [vmem:[%s301 + $0xe0] sm:$0xff]
        %v392 = vld [vmem:[%s301 + $0xe8] sm:$0xff]
        %v393 = vld [vmem:[%s301 + $0xf0] sm:$0xff]
        %v394 = vld [vmem:[%s301 + $0xf8] sm:$0xff]
        %v395 = vld [vmem:[%s301 + $0x100] sm:$0xff]
        %v396 = vld [vmem:[%s301 + $0x108] sm:$0xff]
        %v397 = vld [vmem:[%s301 + $0x110] sm:$0xff]
        %v398 = vld [vmem:[%s301 + $0x118] sm:$0xff]
        %v399 = vld [vmem:[%s301 + $0x120] sm:$0xff]
        %v400 = vld [vmem:[%s301 + $0x128] sm:$0xff]
        %v401 = vld [vmem:[%s301 + $0x130] sm:$0xff]
        %v402 = vld [vmem:[%s301 + $0x138] sm:$0xff]
        %v403 = vld [vmem:[%s301 + $0x140] sm:$0xff]
        %v404 = vld [vmem:[%s301 + $0x148] sm:$0xff]
        %v405 = vld [vmem:[%s301 + $0x150] sm:$0xff]
        %v406 = vld [vmem:[%s301 + $0x158] sm:$0xff]
        %v407 = vld [vmem:[%s301 + $0x160] sm:$0xff]
        %v408 = vld [vmem:[%s301 + $0x168] sm:$0xff]
        %v409 = vld [vmem:[%s301 + $0x170] sm:$0xff]
        %v410 = vld [vmem:[%s301 + $0x178] sm:$0xff]
        %v411 = vld [vmem:[%s301 + $0x180] sm:$0xff]
        %v412 = vld [vmem:[%s301 + $0x188] sm:$0xff]
        %v413 = vld [vmem:[%s301 + $0x190] sm:$0xff]
        %v414 = vld [vmem:[%s301 + $0x198] sm:$0xff]
        %v415 = vld [vmem:[%s301 + $0x1a0] sm:$0xff]
        %v416 = vld [vmem:[%s301 + $0x1a8] sm:$0xff]
        %v417 = vld [vmem:[%s301 + $0x1b0] sm:$0xff]
        %v418 = vld [vmem:[%s301 + $0x1b8] sm:$0xff]
        %v419 = vld [vmem:[%s301 + $0x1c0] sm:$0xff]
        %v420 = vld [vmem:[%s301 + $0x1c8] sm:$0xff]
        %v421 = vld [vmem:[%s301 + $0x1d0] sm:$0xff]
        %v422 = vld [vmem:[%s301 + $0x1d8] sm:$0xff]
        %v423 = vld [vmem:[%s301 + $0x1e0] sm:$0xff]
        %v424 = vld [vmem:[%s301 + $0x1e8] sm:$0xff]
        %v425 = vld [vmem:[%s301 + $0x1f0] sm:$0xff]
        %v426 = vld [vmem:[%s301 + $0x1f8] sm:$0xff]
        %427 = vmatpush.msra.mxu0 %v423
        %428 = vmatpush.msra.mxu0 %v419
        %429 = vmatpush.msra.mxu0 %v415
        %430 = vmatpush.msra.mxu0 %v411
        %431 = vmatpush.msra.mxu0 %v407
        %432 = vmatpush.msra.mxu0 %v403
        %433 = vmatpush.msra.mxu0 %v399
        %434 = vmatpush.msra.mxu0 %v395
        %435 = vmatpush.msra.mxu0 %v391
        %436 = vmatpush.msra.mxu0 %v387
        %437 = vmatpush.msra.mxu0 %v383
        %438 = vmatpush.msra.mxu0 %v379
        %439 = vmatpush.msra.mxu0 %v375
        %440 = vmatpush.msra.mxu0 %v371
        %441 = vmatpush.msra.mxu0 %v367
        %442 = vmatpush.msra.mxu0 %v363
        %443 = vmatmul.f32.gmra.mxu0 %v354
        %v444 = vpop.f32.mrf.mxu0
        %v445 = vadd.f32 0.0, %v444
        %446 = vdwg.mxu0
        %447 = vmatpush.msra.mxu0 %v424
        %448 = vmatpush.msra.mxu0 %v420
        %449 = vmatpush.msra.mxu0 %v416
        %450 = vmatpush.msra.mxu0 %v412
        %451 = vmatpush.msra.mxu0 %v408
        %452 = vmatpush.msra.mxu0 %v404
        %453 = vmatpush.msra.mxu0 %v400
        %454 = vmatpush.msra.mxu0 %v396
        %455 = vmatpush.msra.mxu0 %v392
        %456 = vmatpush.msra.mxu0 %v388
        %457 = vmatpush.msra.mxu0 %v384
        %458 = vmatpush.msra.mxu0 %v380
        %459 = vmatpush.msra.mxu0 %v376
        %460 = vmatpush.msra.mxu0 %v372
        %461 = vmatpush.msra.mxu0 %v368
        %462 = vmatpush.msra.mxu0 %v364
        %463 = vmatmul.f32.gmra.mxu0 %v354
        %v464 = vpop.f32.mrf.mxu0
        %v465 = vadd.f32 0.0, %v464
        %466 = vdwg.mxu0
        %467 = vmatpush.msra.mxu0 %v425
        %468 = vmatpush.msra.mxu0 %v421
        %469 = vmatpush.msra.mxu0 %v417
        %470 = vmatpush.msra.mxu0 %v413
        %471 = vmatpush.msra.mxu0 %v409
        %472 = vmatpush.msra.mxu0 %v405
        %473 = vmatpush.msra.mxu0 %v401
        %474 = vmatpush.msra.mxu0 %v397
        %475 = vmatpush.msra.mxu0 %v393
        %476 = vmatpush.msra.mxu0 %v389
        %477 = vmatpush.msra.mxu0 %v385
        %478 = vmatpush.msra.mxu0 %v381
        %479 = vmatpush.msra.mxu0 %v377
        %480 = vmatpush.msra.mxu0 %v373
        %481 = vmatpush.msra.mxu0 %v369
        %482 = vmatpush.msra.mxu0 %v365
        %483 = vmatmul.f32.gmra.mxu0 %v354
        %v484 = vpop.f32.mrf.mxu0
        %v485 = vadd.f32 0.0, %v484
        %486 = vdwg.mxu0
        %487 = vmatpush.msra.mxu0 %v426
        %488 = vmatpush.msra.mxu0 %v422
        %489 = vmatpush.msra.mxu0 %v418
        %490 = vmatpush.msra.mxu0 %v414
        %491 = vmatpush.msra.mxu0 %v410
        %492 = vmatpush.msra.mxu0 %v406
        %493 = vmatpush.msra.mxu0 %v402
        %494 = vmatpush.msra.mxu0 %v398
        %495 = vmatpush.msra.mxu0 %v394
        %496 = vmatpush.msra.mxu0 %v390
        %497 = vmatpush.msra.mxu0 %v386
        %498 = vmatpush.msra.mxu0 %v382
        %499 = vmatpush.msra.mxu0 %v378
        %500 = vmatpush.msra.mxu0 %v374
        %501 = vmatpush.msra.mxu0 %v370
        %502 = vmatpush.msra.mxu0 %v366
        %503 = vmatmul.f32.gmra.mxu0 %v354
        %v504 = vpop.f32.mrf.mxu0
        %v505 = vadd.f32 0.0, %v504
        %506 = vdwg.mxu0
        %v507 = vadd.f32 %v359, %v445
        %v508 = vadd.f32 %v360, %v465
        %v509 = vadd.f32 %v361, %v485
        %v510 = vadd.f32 %v362, %v505
        %v511 = vxor.u32 %v507, 2147483648
        %v512 = vmul.f32 %v511, 1.442695
        %v513 = vpow.pop %v512
        %v514 = vadd.f32 %v513, 1.0
        %v515 = vrcp.pop %v514
        %v516 = vmul.f32 %v514, %v515
        %v517 = vsub.f32 1.0, %v516
        %v518 = vmul.f32 %v515, %v517
        %v519 = vadd.f32 %v515, %v518
        %vm520 = vweird.f32 %v514
        %vm521 = vweird.f32 %v515
        %vm522 = vmor %vm520, %vm521
        %v523 = vsel %vm522, %v515, %v519
        %v524 = vand.u32 2147483647, %v514
        %vm525 = vcmp.eq.f32.partialorder %v524, 8.507059e+37
        %v526 = vand.u32 %v514, 2147483648
        %v527 = vor.u32 1.1754944e-38, %v526
        %v528 = vsel %vm525, %v527, %v523
        %v529 = vmul.f32 1.0, %v528
        %v530 = vxor.u32 %v508, 2147483648
        %v531 = vmul.f32 %v530, 1.442695
        %v532 = vpow.pop %v531
        %v533 = vadd.f32 %v532, 1.0
        %v534 = vrcp.pop %v533
        %v535 = vmul.f32 %v533, %v534
        %v536 = vsub.f32 1.0, %v535
        %v537 = vmul.f32 %v534, %v536
        %v538 = vadd.f32 %v534, %v537
        %vm539 = vweird.f32 %v533
        %vm540 = vweird.f32 %v534
        %vm541 = vmor %vm539, %vm540
        %v542 = vsel %vm541, %v534, %v538
        %v543 = vand.u32 2147483647, %v533
        %vm544 = vcmp.eq.f32.partialorder %v543, 8.507059e+37
        %v545 = vand.u32 %v533, 2147483648
        %v546 = vor.u32 1.1754944e-38, %v545
        %v547 = vsel %vm544, %v546, %v542
        %v548 = vmul.f32 1.0, %v547
        %v549 = vtanh.pop %v509
        %v550 = vxor.u32 %v510, 2147483648
        %v551 = vmul.f32 %v550, 1.442695
        %v552 = vpow.pop %v551
        %v553 = vadd.f32 %v552, 1.0
        %v554 = vrcp.pop %v553
        %v555 = vmul.f32 %v553, %v554
        %v556 = vsub.f32 1.0, %v555
        %v557 = vmul.f32 %v554, %v556
        %v558 = vadd.f32 %v554, %v557
        %vm559 = vweird.f32 %v553
        %vm560 = vweird.f32 %v554
        %vm561 = vmor %vm559, %vm560
        %v562 = vsel %vm561, %v554, %v558
        %v563 = vand.u32 2147483647, %v553
        %vm564 = vcmp.eq.f32.partialorder %v563, 8.507059e+37
        %v565 = vand.u32 %v553, 2147483648
        %v566 = vor.u32 1.1754944e-38, %v565
        %v567 = vsel %vm564, %v566, %v562
        %v568 = vmul.f32 1.0, %v567
        %v569 = vmul.f32 %v548, %v355
        %v570 = vmul.f32 %v529, %v549
        %v571 = vadd.f32 %v569, %v570
        %v572 = vtanh.pop %v571
        %v573 = vmul.f32 %v568, %v572
        %v574 = vstv %s353
        %vm575 = vcmp.gt.s32.totalorder %v346, %v574
        %v576 = vsel %vm575, 1, 0
        %577 = vset.pattern.permute.xlu0 0
        %578 = vperm.xlu0 %577, %v576
        %v579 = vpop.permute.xlu0 %578
        %vm580 = vcmp.eq.s32.totalorder %v579, 1
        %v581 = vsel %vm580, %v571, %v355
        %582 = vst [vmem:[#allocation3] sm:$0xff] %v581
        %v583 = vsel %vm580, %v573, %v354
        %584 = vst [vmem:[#allocation2] sm:$0xff] %v583
        %v585 = vsel %vm580, %v573, 0.0
        %s586 = smul.u32 %s351, 8
        %s587 = scalar_lea.vmem %s327, %s586 [#allocation7]
        %588 = vst [vmem:[%s587] sm:$0xff] %v585
        %s589 = smul.u32 %s21, 5
        %s590 = sadd.s32 %s589, 1
        %s591 = sadd.s32 %s352, %s590
        %v592 = vld [vmem:[#allocation2] sm:$0xff]
        %v593 = vld [vmem:[#allocation3] sm:$0xff]
        %s594 = smul.u32 %s590, 4
        %s595 = smul.addr %s594, 8
        %s596 = scalar_lea.vmem %s293, %s595 [#allocation4]
        %v597 = vld [vmem:[%s596] sm:$0xff]
        %v598 = vld [vmem:[%s596 + $0x8] sm:$0xff]
        %v599 = vld [vmem:[%s596 + $0x10] sm:$0xff]
        %v600 = vld [vmem:[%s596 + $0x18] sm:$0xff]
        %v601 = vld [vmem:[%s301] sm:$0xff]
        %v602 = vld [vmem:[%s301 + $0x8] sm:$0xff]
        %v603 = vld [vmem:[%s301 + $0x10] sm:$0xff]
        %v604 = vld [vmem:[%s301 + $0x18] sm:$0xff]
        %v605 = vld [vmem:[%s301 + $0x20] sm:$0xff]
        %v606 = vld [vmem:[%s301 + $0x28] sm:$0xff]
        %v607 = vld [vmem:[%s301 + $0x30] sm:$0xff]
        %v608 = vld [vmem:[%s301 + $0x38] sm:$0xff]
        %v609 = vld [vmem:[%s301 + $0x40] sm:$0xff]
        %v610 = vld [vmem:[%s301 + $0x48] sm:$0xff]
        %v611 = vld [vmem:[%s301 + $0x50] sm:$0xff]
        %v612 = vld [vmem:[%s301 + $0x58] sm:$0xff]
        %v613 = vld [vmem:[%s301 + $0x60] sm:$0xff]
        %v614 = vld [vmem:[%s301 + $0x68] sm:$0xff]
        %v615 = vld [vmem:[%s301 + $0x70] sm:$0xff]
        %v616 = vld [vmem:[%s301 + $0x78] sm:$0xff]
        %v617 = vld [vmem:[%s301 + $0x80] sm:$0xff]
        %v618 = vld [vmem:[%s301 + $0x88] sm:$0xff]
        %v619 = vld [vmem:[%s301 + $0x90] sm:$0xff]
        %v620 = vld [vmem:[%s301 + $0x98] sm:$0xff]
        %v621 = vld [vmem:[%s301 + $0xa0] sm:$0xff]
        %v622 = vld [vmem:[%s301 + $0xa8] sm:$0xff]
        %v623 = vld [vmem:[%s301 + $0xb0] sm:$0xff]
        %v624 = vld [vmem:[%s301 + $0xb8] sm:$0xff]
        %v625 = vld [vmem:[%s301 + $0xc0] sm:$0xff]
        %v626 = vld [vmem:[%s301 + $0xc8] sm:$0xff]
        %v627 = vld [vmem:[%s301 + $0xd0] sm:$0xff]
        %v628 = vld [vmem:[%s301 + $0xd8] sm:$0xff]
        %v629 = vld [vmem:[%s301 + $0xe0] sm:$0xff]
        %v630 = vld [vmem:[%s301 + $0xe8] sm:$0xff]
        %v631 = vld [vmem:[%s301 + $0xf0] sm:$0xff]
        %v632 = vld [vmem:[%s301 + $0xf8] sm:$0xff]
        %v633 = vld [vmem:[%s301 + $0x100] sm:$0xff]
        %v634 = vld [vmem:[%s301 + $0x108] sm:$0xff]
        %v635 = vld [vmem:[%s301 + $0x110] sm:$0xff]
        %v636 = vld [vmem:[%s301 + $0x118] sm:$0xff]
        %v637 = vld [vmem:[%s301 + $0x120] sm:$0xff]
        %v638 = vld [vmem:[%s301 + $0x128] sm:$0xff]
        %v639 = vld [vmem:[%s301 + $0x130] sm:$0xff]
        %v640 = vld [vmem:[%s301 + $0x138] sm:$0xff]
        %v641 = vld [vmem:[%s301 + $0x140] sm:$0xff]
        %v642 = vld [vmem:[%s301 + $0x148] sm:$0xff]
        %v643 = vld [vmem:[%s301 + $0x150] sm:$0xff]
        %v644 = vld [vmem:[%s301 + $0x158] sm:$0xff]
        %v645 = vld [vmem:[%s301 + $0x160] sm:$0xff]
        %v646 = vld [vmem:[%s301 + $0x168] sm:$0xff]
        %v647 = vld [vmem:[%s301 + $0x170] sm:$0xff]
        %v648 = vld [vmem:[%s301 + $0x178] sm:$0xff]
        %v649 = vld [vmem:[%s301 + $0x180] sm:$0xff]
        %v650 = vld [vmem:[%s301 + $0x188] sm:$0xff]
        %v651 = vld [vmem:[%s301 + $0x190] sm:$0xff]
        %v652 = vld [vmem:[%s301 + $0x198] sm:$0xff]
        %v653 = vld [vmem:[%s301 + $0x1a0] sm:$0xff]
        %v654 = vld [vmem:[%s301 + $0x1a8] sm:$0xff]
        %v655 = vld [vmem:[%s301 + $0x1b0] sm:$0xff]
        %v656 = vld [vmem:[%s301 + $0x1b8] sm:$0xff]
        %v657 = vld [vmem:[%s301 + $0x1c0] sm:$0xff]
        %v658 = vld [vmem:[%s301 + $0x1c8] sm:$0xff]
        %v659 = vld [vmem:[%s301 + $0x1d0] sm:$0xff]
        %v660 = vld [vmem:[%s301 + $0x1d8] sm:$0xff]
        %v661 = vld [vmem:[%s301 + $0x1e0] sm:$0xff]
        %v662 = vld [vmem:[%s301 + $0x1e8] sm:$0xff]
        %v663 = vld [vmem:[%s301 + $0x1f0] sm:$0xff]
        %v664 = vld [vmem:[%s301 + $0x1f8] sm:$0xff]
        %665 = vmatpush.msra.mxu0 %v661
        %666 = vmatpush.msra.mxu0 %v657
        %667 = vmatpush.msra.mxu0 %v653
        %668 = vmatpush.msra.mxu0 %v649
        %669 = vmatpush.msra.mxu0 %v645
        %670 = vmatpush.msra.mxu0 %v641
        %671 = vmatpush.msra.mxu0 %v637
        %672 = vmatpush.msra.mxu0 %v633
        %673 = vmatpush.msra.mxu0 %v629
        %674 = vmatpush.msra.mxu0 %v625
        %675 = vmatpush.msra.mxu0 %v621
        %676 = vmatpush.msra.mxu0 %v617
        %677 = vmatpush.msra.mxu0 %v613
        %678 = vmatpush.msra.mxu0 %v609
        %679 = vmatpush.msra.mxu0 %v605
        %680 = vmatpush.msra.mxu0 %v601
        %681 = vmatmul.f32.gmra.mxu0 %v592
        %v682 = vpop.f32.mrf.mxu0
        %v683 = vadd.f32 0.0, %v682
        %684 = vdwg.mxu0
        %685 = vmatpush.msra.mxu0 %v662
        %686 = vmatpush.msra.mxu0 %v658
        %687 = vmatpush.msra.mxu0 %v654
        %688 = vmatpush.msra.mxu0 %v650
        %689 = vmatpush.msra.mxu0 %v646
        %690 = vmatpush.msra.mxu0 %v642
        %691 = vmatpush.msra.mxu0 %v638
        %692 = vmatpush.msra.mxu0 %v634
        %693 = vmatpush.msra.mxu0 %v630
        %694 = vmatpush.msra.mxu0 %v626
        %695 = vmatpush.msra.mxu0 %v622
        %696 = vmatpush.msra.mxu0 %v618
        %697 = vmatpush.msra.mxu0 %v614
        %698 = vmatpush.msra.mxu0 %v610
        %699 = vmatpush.msra.mxu0 %v606
        %700 = vmatpush.msra.mxu0 %v602
        %701 = vmatmul.f32.gmra.mxu0 %v592
        %v702 = vpop.f32.mrf.mxu0
        %v703 = vadd.f32 0.0, %v702
        %704 = vdwg.mxu0
        %705 = vmatpush.msra.mxu0 %v663
        %706 = vmatpush.msra.mxu0 %v659
        %707 = vmatpush.msra.mxu0 %v655
        %708 = vmatpush.msra.mxu0 %v651
        %709 = vmatpush.msra.mxu0 %v647
        %710 = vmatpush.msra.mxu0 %v643
        %711 = vmatpush.msra.mxu0 %v639
        %712 = vmatpush.msra.mxu0 %v635
        %713 = vmatpush.msra.mxu0 %v631
        %714 = vmatpush.msra.mxu0 %v627
        %715 = vmatpush.msra.mxu0 %v623
        %716 = vmatpush.msra.mxu0 %v619
        %717 = vmatpush.msra.mxu0 %v615
        %718 = vmatpush.msra.mxu0 %v611
        %719 = vmatpush.msra.mxu0 %v607
        %720 = vmatpush.msra.mxu0 %v603
        %721 = vmatmul.f32.gmra.mxu0 %v592
        %v722 = vpop.f32.mrf.mxu0
        %v723 = vadd.f32 0.0, %v722
        %724 = vdwg.mxu0
        %725 = vmatpush.msra.mxu0 %v664
        %726 = vmatpush.msra.mxu0 %v660
        %727 = vmatpush.msra.mxu0 %v656
        %728 = vmatpush.msra.mxu0 %v652
        %729 = vmatpush.msra.mxu0 %v648
        %730 = vmatpush.msra.mxu0 %v644
        %731 = vmatpush.msra.mxu0 %v640
        %732 = vmatpush.msra.mxu0 %v636
        %733 = vmatpush.msra.mxu0 %v632
        %734 = vmatpush.msra.mxu0 %v628
        %735 = vmatpush.msra.mxu0 %v624
        %736 = vmatpush.msra.mxu0 %v620
        %737 = vmatpush.msra.mxu0 %v616
        %738 = vmatpush.msra.mxu0 %v612
        %739 = vmatpush.msra.mxu0 %v608
        %740 = vmatpush.msra.mxu0 %v604
        %741 = vmatmul.f32.gmra.mxu0 %v592
        %v742 = vpop.f32.mrf.mxu0
        %v743 = vadd.f32 0.0, %v742
        %744 = vdwg.mxu0
        %v745 = vadd.f32 %v597, %v683
        %v746 = vadd.f32 %v598, %v703
        %v747 = vadd.f32 %v599, %v723
        %v748 = vadd.f32 %v600, %v743
        %v749 = vxor.u32 %v745, 2147483648
        %v750 = vmul.f32 %v749, 1.442695
        %v751 = vpow.pop %v750
        %v752 = vadd.f32 %v751, 1.0
        %v753 = vrcp.pop %v752
        %v754 = vmul.f32 %v752, %v753
        %v755 = vsub.f32 1.0, %v754
        %v756 = vmul.f32 %v753, %v755
        %v757 = vadd.f32 %v753, %v756
        %vm758 = vweird.f32 %v752
        %vm759 = vweird.f32 %v753
        %vm760 = vmor %vm758, %vm759
        %v761 = vsel %vm760, %v753, %v757
        %v762 = vand.u32 2147483647, %v752
        %vm763 = vcmp.eq.f32.partialorder %v762, 8.507059e+37
        %v764 = vand.u32 %v752, 2147483648
        %v765 = vor.u32 1.1754944e-38, %v764
        %v766 = vsel %vm763, %v765, %v761
        %v767 = vmul.f32 1.0, %v766
        %v768 = vxor.u32 %v746, 2147483648
        %v769 = vmul.f32 %v768, 1.442695
        %v770 = vpow.pop %v769
        %v771 = vadd.f32 %v770, 1.0
        %v772 = vrcp.pop %v771
        %v773 = vmul.f32 %v771, %v772
        %v774 = vsub.f32 1.0, %v773
        %v775 = vmul.f32 %v772, %v774
        %v776 = vadd.f32 %v772, %v775
        %vm777 = vweird.f32 %v771
        %vm778 = vweird.f32 %v772
        %vm779 = vmor %vm777, %vm778
        %v780 = vsel %vm779, %v772, %v776
        %v781 = vand.u32 2147483647, %v771
        %vm782 = vcmp.eq.f32.partialorder %v781, 8.507059e+37
        %v783 = vand.u32 %v771, 2147483648
        %v784 = vor.u32 1.1754944e-38, %v783
        %v785 = vsel %vm782, %v784, %v780
        %v786 = vmul.f32 1.0, %v785
        %v787 = vtanh.pop %v747
        %v788 = vxor.u32 %v748, 2147483648
        %v789 = vmul.f32 %v788, 1.442695
        %v790 = vpow.pop %v789
        %v791 = vadd.f32 %v790, 1.0
        %v792 = vrcp.pop %v791
        %v793 = vmul.f32 %v791, %v792
        %v794 = vsub.f32 1.0, %v793
        %v795 = vmul.f32 %v792, %v794
        %v796 = vadd.f32 %v792, %v795
        %vm797 = vweird.f32 %v791
        %vm798 = vweird.f32 %v792
        %vm799 = vmor %vm797, %vm798
        %v800 = vsel %vm799, %v792, %v796
        %v801 = vand.u32 2147483647, %v791
        %vm802 = vcmp.eq.f32.partialorder %v801, 8.507059e+37
        %v803 = vand.u32 %v791, 2147483648
        %v804 = vor.u32 1.1754944e-38, %v803
        %v805 = vsel %vm802, %v804, %v800
        %v806 = vmul.f32 1.0, %v805
        %v807 = vmul.f32 %v786, %v593
        %v808 = vmul.f32 %v767, %v787
        %v809 = vadd.f32 %v807, %v808
        %v810 = vtanh.pop %v809
        %v811 = vmul.f32 %v806, %v810
        %v812 = vstv %s591
        %vm813 = vcmp.gt.s32.totalorder %v346, %v812
        %v814 = vsel %vm813, 1, 0
        %815 = vset.pattern.permute.xlu0 0
        %816 = vperm.xlu0 %815, %v814
        %v817 = vpop.permute.xlu0 %816
        %vm818 = vcmp.eq.s32.totalorder %v817, 1
        %v819 = vsel %vm818, %v809, %v593
        %820 = vst [vmem:[#allocation3] sm:$0xff] %v819
        %v821 = vsel %vm818, %v811, %v592
        %822 = vst [vmem:[#allocation2] sm:$0xff] %v821
        %v823 = vsel %vm818, %v811, 0.0
        %s824 = smul.u32 %s590, 8
        %s825 = scalar_lea.vmem %s327, %s824 [#allocation7]
        %826 = vst [vmem:[%s825] sm:$0xff] %v823
        %s827 = smul.u32 %s21, 3
        %s828 = sadd.s32 %s827, 2
        %s829 = sadd.s32 %s352, %s828
        %v830 = vld [vmem:[#allocation2] sm:$0xff]
        %v831 = vld [vmem:[#allocation3] sm:$0xff]
        %s832 = smul.u32 %s828, 4
        %s833 = smul.addr %s832, 8
        %s834 = scalar_lea.vmem %s293, %s833 [#allocation4]
        %v835 = vld [vmem:[%s834] sm:$0xff]
        %v836 = vld [vmem:[%s834 + $0x8] sm:$0xff]
        %v837 = vld [vmem:[%s834 + $0x10] sm:$0xff]
        %v838 = vld [vmem:[%s834 + $0x18] sm:$0xff]
        %v839 = vld [vmem:[%s301] sm:$0xff]
        %v840 = vld [vmem:[%s301 + $0x8] sm:$0xff]
        %v841 = vld [vmem:[%s301 + $0x10] sm:$0xff]
        %v842 = vld [vmem:[%s301 + $0x18] sm:$0xff]
        %v843 = vld [vmem:[%s301 + $0x20] sm:$0xff]
        %v844 = vld [vmem:[%s301 + $0x28] sm:$0xff]
        %v845 = vld [vmem:[%s301 + $0x30] sm:$0xff]
        %v846 = vld [vmem:[%s301 + $0x38] sm:$0xff]
        %v847 = vld [vmem:[%s301 + $0x40] sm:$0xff]
        %v848 = vld [vmem:[%s301 + $0x48] sm:$0xff]
        %v849 = vld [vmem:[%s301 + $0x50] sm:$0xff]
        %v850 = vld [vmem:[%s301 + $0x58] sm:$0xff]
        %v851 = vld [vmem:[%s301 + $0x60] sm:$0xff]
        %v852 = vld [vmem:[%s301 + $0x68] sm:$0xff]
        %v853 = vld [vmem:[%s301 + $0x70] sm:$0xff]
        %v854 = vld [vmem:[%s301 + $0x78] sm:$0xff]
        %v855 = vld [vmem:[%s301 + $0x80] sm:$0xff]
        %v856 = vld [vmem:[%s301 + $0x88] sm:$0xff]
        %v857 = vld [vmem:[%s301 + $0x90] sm:$0xff]
        %v858 = vld [vmem:[%s301 + $0x98] sm:$0xff]
        %v859 = vld [vmem:[%s301 + $0xa0] sm:$0xff]
        %v860 = vld [vmem:[%s301 + $0xa8] sm:$0xff]
        %v861 = vld [vmem:[%s301 + $0xb0] sm:$0xff]
        %v862 = vld [vmem:[%s301 + $0xb8] sm:$0xff]
        %v863 = vld [vmem:[%s301 + $0xc0] sm:$0xff]
        %v864 = vld [vmem:[%s301 + $0xc8] sm:$0xff]
        %v865 = vld [vmem:[%s301 + $0xd0] sm:$0xff]
        %v866 = vld [vmem:[%s301 + $0xd8] sm:$0xff]
        %v867 = vld [vmem:[%s301 + $0xe0] sm:$0xff]
        %v868 = vld [vmem:[%s301 + $0xe8] sm:$0xff]
        %v869 = vld [vmem:[%s301 + $0xf0] sm:$0xff]
        %v870 = vld [vmem:[%s301 + $0xf8] sm:$0xff]
        %v871 = vld [vmem:[%s301 + $0x100] sm:$0xff]
        %v872 = vld [vmem:[%s301 + $0x108] sm:$0xff]
        %v873 = vld [vmem:[%s301 + $0x110] sm:$0xff]
        %v874 = vld [vmem:[%s301 + $0x118] sm:$0xff]
        %v875 = vld [vmem:[%s301 + $0x120] sm:$0xff]
        %v876 = vld [vmem:[%s301 + $0x128] sm:$0xff]
        %v877 = vld [vmem:[%s301 + $0x130] sm:$0xff]
        %v878 = vld [vmem:[%s301 + $0x138] sm:$0xff]
        %v879 = vld [vmem:[%s301 + $0x140] sm:$0xff]
        %v880 = vld [vmem:[%s301 + $0x148] sm:$0xff]
        %v881 = vld [vmem:[%s301 + $0x150] sm:$0xff]
        %v882 = vld [vmem:[%s301 + $0x158] sm:$0xff]
        %v883 = vld [vmem:[%s301 + $0x160] sm:$0xff]
        %v884 = vld [vmem:[%s301 + $0x168] sm:$0xff]
        %v885 = vld [vmem:[%s301 + $0x170] sm:$0xff]
        %v886 = vld [vmem:[%s301 + $0x178] sm:$0xff]
        %v887 = vld [vmem:[%s301 + $0x180] sm:$0xff]
        %v888 = vld [vmem:[%s301 + $0x188] sm:$0xff]
        %v889 = vld [vmem:[%s301 + $0x190] sm:$0xff]
        %v890 = vld [vmem:[%s301 + $0x198] sm:$0xff]
        %v891 = vld [vmem:[%s301 + $0x1a0] sm:$0xff]
        %v892 = vld [vmem:[%s301 + $0x1a8] sm:$0xff]
        %v893 = vld [vmem:[%s301 + $0x1b0] sm:$0xff]
        %v894 = vld [vmem:[%s301 + $0x1b8] sm:$0xff]
        %v895 = vld [vmem:[%s301 + $0x1c0] sm:$0xff]
        %v896 = vld [vmem:[%s301 + $0x1c8] sm:$0xff]
        %v897 = vld [vmem:[%s301 + $0x1d0] sm:$0xff]
        %v898 = vld [vmem:[%s301 + $0x1d8] sm:$0xff]
        %v899 = vld [vmem:[%s301 + $0x1e0] sm:$0xff]
        %v900 = vld [vmem:[%s301 + $0x1e8] sm:$0xff]
        %v901 = vld [vmem:[%s301 + $0x1f0] sm:$0xff]
        %v902 = vld [vmem:[%s301 + $0x1f8] sm:$0xff]
        %903 = vmatpush.msra.mxu0 %v899
        %904 = vmatpush.msra.mxu0 %v895
        %905 = vmatpush.msra.mxu0 %v891
        %906 = vmatpush.msra.mxu0 %v887
        %907 = vmatpush.msra.mxu0 %v883
        %908 = vmatpush.msra.mxu0 %v879
        %909 = vmatpush.msra.mxu0 %v875
        %910 = vmatpush.msra.mxu0 %v871
        %911 = vmatpush.msra.mxu0 %v867
        %912 = vmatpush.msra.mxu0 %v863
        %913 = vmatpush.msra.mxu0 %v859
        %914 = vmatpush.msra.mxu0 %v855
        %915 = vmatpush.msra.mxu0 %v851
        %916 = vmatpush.msra.mxu0 %v847
        %917 = vmatpush.msra.mxu0 %v843
        %918 = vmatpush.msra.mxu0 %v839
        %919 = vmatmul.f32.gmra.mxu0 %v830
        %v920 = vpop.f32.mrf.mxu0
        %v921 = vadd.f32 0.0, %v920
        %922 = vdwg.mxu0
        %923 = vmatpush.msra.mxu0 %v900
        %924 = vmatpush.msra.mxu0 %v896
        %925 = vmatpush.msra.mxu0 %v892
        %926 = vmatpush.msra.mxu0 %v888
        %927 = vmatpush.msra.mxu0 %v884
        %928 = vmatpush.msra.mxu0 %v880
        %929 = vmatpush.msra.mxu0 %v876
        %930 = vmatpush.msra.mxu0 %v872
        %931 = vmatpush.msra.mxu0 %v868
        %932 = vmatpush.msra.mxu0 %v864
        %933 = vmatpush.msra.mxu0 %v860
        %934 = vmatpush.msra.mxu0 %v856
        %935 = vmatpush.msra.mxu0 %v852
        %936 = vmatpush.msra.mxu0 %v848
        %937 = vmatpush.msra.mxu0 %v844
        %938 = vmatpush.msra.mxu0 %v840
        %939 = vmatmul.f32.gmra.mxu0 %v830
        %v940 = vpop.f32.mrf.mxu0
        %v941 = vadd.f32 0.0, %v940
        %942 = vdwg.mxu0
        %943 = vmatpush.msra.mxu0 %v901
        %944 = vmatpush.msra.mxu0 %v897
        %945 = vmatpush.msra.mxu0 %v893
        %946 = vmatpush.msra.mxu0 %v889
        %947 = vmatpush.msra.mxu0 %v885
        %948 = vmatpush.msra.mxu0 %v881
        %949 = vmatpush.msra.mxu0 %v877
        %950 = vmatpush.msra.mxu0 %v873
        %951 = vmatpush.msra.mxu0 %v869
        %952 = vmatpush.msra.mxu0 %v865
        %953 = vmatpush.msra.mxu0 %v861
        %954 = vmatpush.msra.mxu0 %v857
        %955 = vmatpush.msra.mxu0 %v853
        %956 = vmatpush.msra.mxu0 %v849
        %957 = vmatpush.msra.mxu0 %v845
        %958 = vmatpush.msra.mxu0 %v841
        %959 = vmatmul.f32.gmra.mxu0 %v830
        %v960 = vpop.f32.mrf.mxu0
        %v961 = vadd.f32 0.0, %v960
        %962 = vdwg.mxu0
        %963 = vmatpush.msra.mxu0 %v902
        %964 = vmatpush.msra.mxu0 %v898
        %965 = vmatpush.msra.mxu0 %v894
        %966 = vmatpush.msra.mxu0 %v890
        %967 = vmatpush.msra.mxu0 %v886
        %968 = vmatpush.msra.mxu0 %v882
        %969 = vmatpush.msra.mxu0 %v878
        %970 = vmatpush.msra.mxu0 %v874
        %971 = vmatpush.msra.mxu0 %v870
        %972 = vmatpush.msra.mxu0 %v866
        %973 = vmatpush.msra.mxu0 %v862
        %974 = vmatpush.msra.mxu0 %v858
        %975 = vmatpush.msra.mxu0 %v854
        %976 = vmatpush.msra.mxu0 %v850
        %977 = vmatpush.msra.mxu0 %v846
        %978 = vmatpush.msra.mxu0 %v842
        %979 = vmatmul.f32.gmra.mxu0 %v830
        %v980 = vpop.f32.mrf.mxu0
        %v981 = vadd.f32 0.0, %v980
        %982 = vdwg.mxu0
        %v983 = vadd.f32 %v835, %v921
        %v984 = vadd.f32 %v836, %v941
        %v985 = vadd.f32 %v837, %v961
        %v986 = vadd.f32 %v838, %v981
        %v987 = vxor.u32 %v983, 2147483648
        %v988 = vmul.f32 %v987, 1.442695
        %v989 = vpow.pop %v988
        %v990 = vadd.f32 %v989, 1.0
        %v991 = vrcp.pop %v990
        %v992 = vmul.f32 %v990, %v991
        %v993 = vsub.f32 1.0, %v992
        %v994 = vmul.f32 %v991, %v993
        %v995 = vadd.f32 %v991, %v994
        %vm996 = vweird.f32 %v990
        %vm997 = vweird.f32 %v991
        %vm998 = vmor %vm996, %vm997
        %v999 = vsel %vm998, %v991, %v995
        %v1000 = vand.u32 2147483647, %v990
        %vm1001 = vcmp.eq.f32.partialorder %v1000, 8.507059e+37
        %v1002 = vand.u32 %v990, 2147483648
        %v1003 = vor.u32 1.1754944e-38, %v1002
        %v1004 = vsel %vm1001, %v1003, %v999
        %v1005 = vmul.f32 1.0, %v1004
        %v1006 = vxor.u32 %v984, 2147483648
        %v1007 = vmul.f32 %v1006, 1.442695
        %v1008 = vpow.pop %v1007
        %v1009 = vadd.f32 %v1008, 1.0
        %v1010 = vrcp.pop %v1009
        %v1011 = vmul.f32 %v1009, %v1010
        %v1012 = vsub.f32 1.0, %v1011
        %v1013 = vmul.f32 %v1010, %v1012
        %v1014 = vadd.f32 %v1010, %v1013
        %vm1015 = vweird.f32 %v1009
        %vm1016 = vweird.f32 %v1010
        %vm1017 = vmor %vm1015, %vm1016
        %v1018 = vsel %vm1017, %v1010, %v1014
        %v1019 = vand.u32 2147483647, %v1009
        %vm1020 = vcmp.eq.f32.partialorder %v1019, 8.507059e+37
        %v1021 = vand.u32 %v1009, 2147483648
        %v1022 = vor.u32 1.1754944e-38, %v1021
        %v1023 = vsel %vm1020, %v1022, %v1018
        %v1024 = vmul.f32 1.0, %v1023
        %v1025 = vtanh.pop %v985
        %v1026 = vxor.u32 %v986, 2147483648
        %v1027 = vmul.f32 %v1026, 1.442695
        %v1028 = vpow.pop %v1027
        %v1029 = vadd.f32 %v1028, 1.0
        %v1030 = vrcp.pop %v1029
        %v1031 = vmul.f32 %v1029, %v1030
        %v1032 = vsub.f32 1.0, %v1031
        %v1033 = vmul.f32 %v1030, %v1032
        %v1034 = vadd.f32 %v1030, %v1033
        %vm1035 = vweird.f32 %v1029
        %vm1036 = vweird.f32 %v1030
        %vm1037 = vmor %vm1035, %vm1036
        %v1038 = vsel %vm1037, %v1030, %v1034
        %v1039 = vand.u32 2147483647, %v1029
        %vm1040 = vcmp.eq.f32.partialorder %v1039, 8.507059e+37
        %v1041 = vand.u32 %v1029, 2147483648
        %v1042 = vor.u32 1.1754944e-38, %v1041
        %v1043 = vsel %vm1040, %v1042, %v1038
        %v1044 = vmul.f32 1.0, %v1043
        %v1045 = vmul.f32 %v1024, %v831
        %v1046 = vmul.f32 %v1005, %v1025
        %v1047 = vadd.f32 %v1045, %v1046
        %v1048 = vtanh.pop %v1047
        %v1049 = vmul.f32 %v1044, %v1048
        %v1050 = vstv %s829
        %vm1051 = vcmp.gt.s32.totalorder %v346, %v1050
        %v1052 = vsel %vm1051, 1, 0
        %1053 = vset.pattern.permute.xlu0 0
        %1054 = vperm.xlu0 %1053, %v1052
        %v1055 = vpop.permute.xlu0 %1054
        %vm1056 = vcmp.eq.s32.totalorder %v1055, 1
        %v1057 = vsel %vm1056, %v1047, %v831
        %1058 = vst [vmem:[#allocation3] sm:$0xff] %v1057
        %v1059 = vsel %vm1056, %v1049, %v830
        %1060 = vst [vmem:[#allocation2] sm:$0xff] %v1059
        %v1061 = vsel %vm1056, %v1049, 0.0
        %s1062 = smul.u32 %s828, 8
        %s1063 = scalar_lea.vmem %s327, %s1062 [#allocation7]
        %1064 = vst [vmem:[%s1063] sm:$0xff] %v1061
        %s1065 = sadd.s32 %s21, 3
        %s1066 = sadd.s32 %s352, %s1065
        %v1067 = vld [vmem:[#allocation2] sm:$0xff]
        %v1068 = vld [vmem:[#allocation3] sm:$0xff]
        %s1069 = smul.u32 %s1065, 4
        %s1070 = smul.addr %s1069, 8
        %s1071 = scalar_lea.vmem %s293, %s1070 [#allocation4]
        %v1072 = vld [vmem:[%s1071] sm:$0xff]
        %v1073 = vld [vmem:[%s1071 + $0x8] sm:$0xff]
        %v1074 = vld [vmem:[%s1071 + $0x10] sm:$0xff]
        %v1075 = vld [vmem:[%s1071 + $0x18] sm:$0xff]
        %v1076 = vld [vmem:[%s301] sm:$0xff]
        %v1077 = vld [vmem:[%s301 + $0x8] sm:$0xff]
        %v1078 = vld [vmem:[%s301 + $0x10] sm:$0xff]
        %v1079 = vld [vmem:[%s301 + $0x18] sm:$0xff]
        %v1080 = vld [vmem:[%s301 + $0x20] sm:$0xff]
        %v1081 = vld [vmem:[%s301 + $0x28] sm:$0xff]
        %v1082 = vld [vmem:[%s301 + $0x30] sm:$0xff]
        %v1083 = vld [vmem:[%s301 + $0x38] sm:$0xff]
        %v1084 = vld [vmem:[%s301 + $0x40] sm:$0xff]
        %v1085 = vld [vmem:[%s301 + $0x48] sm:$0xff]
        %v1086 = vld [vmem:[%s301 + $0x50] sm:$0xff]
        %v1087 = vld [vmem:[%s301 + $0x58] sm:$0xff]
        %v1088 = vld [vmem:[%s301 + $0x60] sm:$0xff]
        %v1089 = vld [vmem:[%s301 + $0x68] sm:$0xff]
        %v1090 = vld [vmem:[%s301 + $0x70] sm:$0xff]
        %v1091 = vld [vmem:[%s301 + $0x78] sm:$0xff]
        %v1092 = vld [vmem:[%s301 + $0x80] sm:$0xff]
        %v1093 = vld [vmem:[%s301 + $0x88] sm:$0xff]
        %v1094 = vld [vmem:[%s301 + $0x90] sm:$0xff]
        %v1095 = vld [vmem:[%s301 + $0x98] sm:$0xff]
        %v1096 = vld [vmem:[%s301 + $0xa0] sm:$0xff]
        %v1097 = vld [vmem:[%s301 + $0xa8] sm:$0xff]
        %v1098 = vld [vmem:[%s301 + $0xb0] sm:$0xff]
        %v1099 = vld [vmem:[%s301 + $0xb8] sm:$0xff]
        %v1100 = vld [vmem:[%s301 + $0xc0] sm:$0xff]
        %v1101 = vld [vmem:[%s301 + $0xc8] sm:$0xff]
        %v1102 = vld [vmem:[%s301 + $0xd0] sm:$0xff]
        %v1103 = vld [vmem:[%s301 + $0xd8] sm:$0xff]
        %v1104 = vld [vmem:[%s301 + $0xe0] sm:$0xff]
        %v1105 = vld [vmem:[%s301 + $0xe8] sm:$0xff]
        %v1106 = vld [vmem:[%s301 + $0xf0] sm:$0xff]
        %v1107 = vld [vmem:[%s301 + $0xf8] sm:$0xff]
        %v1108 = vld [vmem:[%s301 + $0x100] sm:$0xff]
        %v1109 = vld [vmem:[%s301 + $0x108] sm:$0xff]
        %v1110 = vld [vmem:[%s301 + $0x110] sm:$0xff]
        %v1111 = vld [vmem:[%s301 + $0x118] sm:$0xff]
        %v1112 = vld [vmem:[%s301 + $0x120] sm:$0xff]
        %v1113 = vld [vmem:[%s301 + $0x128] sm:$0xff]
        %v1114 = vld [vmem:[%s301 + $0x130] sm:$0xff]
        %v1115 = vld [vmem:[%s301 + $0x138] sm:$0xff]
        %v1116 = vld [vmem:[%s301 + $0x140] sm:$0xff]
        %v1117 = vld [vmem:[%s301 + $0x148] sm:$0xff]
        %v1118 = vld [vmem:[%s301 + $0x150] sm:$0xff]
        %v1119 = vld [vmem:[%s301 + $0x158] sm:$0xff]
        %v1120 = vld [vmem:[%s301 + $0x160] sm:$0xff]
        %v1121 = vld [vmem:[%s301 + $0x168] sm:$0xff]
        %v1122 = vld [vmem:[%s301 + $0x170] sm:$0xff]
        %v1123 = vld [vmem:[%s301 + $0x178] sm:$0xff]
        %v1124 = vld [vmem:[%s301 + $0x180] sm:$0xff]
        %v1125 = vld [vmem:[%s301 + $0x188] sm:$0xff]
        %v1126 = vld [vmem:[%s301 + $0x190] sm:$0xff]
        %v1127 = vld [vmem:[%s301 + $0x198] sm:$0xff]
        %v1128 = vld [vmem:[%s301 + $0x1a0] sm:$0xff]
        %v1129 = vld [vmem:[%s301 + $0x1a8] sm:$0xff]
        %v1130 = vld [vmem:[%s301 + $0x1b0] sm:$0xff]
        %v1131 = vld [vmem:[%s301 + $0x1b8] sm:$0xff]
        %v1132 = vld [vmem:[%s301 + $0x1c0] sm:$0xff]
        %v1133 = vld [vmem:[%s301 + $0x1c8] sm:$0xff]
        %v1134 = vld [vmem:[%s301 + $0x1d0] sm:$0xff]
        %v1135 = vld [vmem:[%s301 + $0x1d8] sm:$0xff]
        %v1136 = vld [vmem:[%s301 + $0x1e0] sm:$0xff]
        %v1137 = vld [vmem:[%s301 + $0x1e8] sm:$0xff]
        %v1138 = vld [vmem:[%s301 + $0x1f0] sm:$0xff]
        %v1139 = vld [vmem:[%s301 + $0x1f8] sm:$0xff]
        %1140 = vmatpush.msra.mxu0 %v1136
        %1141 = vmatpush.msra.mxu0 %v1132
        %1142 = vmatpush.msra.mxu0 %v1128
        %1143 = vmatpush.msra.mxu0 %v1124
        %1144 = vmatpush.msra.mxu0 %v1120
        %1145 = vmatpush.msra.mxu0 %v1116
        %1146 = vmatpush.msra.mxu0 %v1112
        %1147 = vmatpush.msra.mxu0 %v1108
        %1148 = vmatpush.msra.mxu0 %v1104
        %1149 = vmatpush.msra.mxu0 %v1100
        %1150 = vmatpush.msra.mxu0 %v1096
        %1151 = vmatpush.msra.mxu0 %v1092
        %1152 = vmatpush.msra.mxu0 %v1088
        %1153 = vmatpush.msra.mxu0 %v1084
        %1154 = vmatpush.msra.mxu0 %v1080
        %1155 = vmatpush.msra.mxu0 %v1076
        %1156 = vmatmul.f32.gmra.mxu0 %v1067
        %v1157 = vpop.f32.mrf.mxu0
        %v1158 = vadd.f32 0.0, %v1157
        %1159 = vdwg.mxu0
        %1160 = vmatpush.msra.mxu0 %v1137
        %1161 = vmatpush.msra.mxu0 %v1133
        %1162 = vmatpush.msra.mxu0 %v1129
        %1163 = vmatpush.msra.mxu0 %v1125
        %1164 = vmatpush.msra.mxu0 %v1121
        %1165 = vmatpush.msra.mxu0 %v1117
        %1166 = vmatpush.msra.mxu0 %v1113
        %1167 = vmatpush.msra.mxu0 %v1109
        %1168 = vmatpush.msra.mxu0 %v1105
        %1169 = vmatpush.msra.mxu0 %v1101
        %1170 = vmatpush.msra.mxu0 %v1097
        %1171 = vmatpush.msra.mxu0 %v1093
        %1172 = vmatpush.msra.mxu0 %v1089
        %1173 = vmatpush.msra.mxu0 %v1085
        %1174 = vmatpush.msra.mxu0 %v1081
        %1175 = vmatpush.msra.mxu0 %v1077
        %1176 = vmatmul.f32.gmra.mxu0 %v1067
        %v1177 = vpop.f32.mrf.mxu0
        %v1178 = vadd.f32 0.0, %v1177
        %1179 = vdwg.mxu0
        %1180 = vmatpush.msra.mxu0 %v1138
        %1181 = vmatpush.msra.mxu0 %v1134
        %1182 = vmatpush.msra.mxu0 %v1130
        %1183 = vmatpush.msra.mxu0 %v1126
        %1184 = vmatpush.msra.mxu0 %v1122
        %1185 = vmatpush.msra.mxu0 %v1118
        %1186 = vmatpush.msra.mxu0 %v1114
        %1187 = vmatpush.msra.mxu0 %v1110
        %1188 = vmatpush.msra.mxu0 %v1106
        %1189 = vmatpush.msra.mxu0 %v1102
        %1190 = vmatpush.msra.mxu0 %v1098
        %1191 = vmatpush.msra.mxu0 %v1094
        %1192 = vmatpush.msra.mxu0 %v1090
        %1193 = vmatpush.msra.mxu0 %v1086
        %1194 = vmatpush.msra.mxu0 %v1082
        %1195 = vmatpush.msra.mxu0 %v1078
        %1196 = vmatmul.f32.gmra.mxu0 %v1067
        %v1197 = vpop.f32.mrf.mxu0
        %v1198 = vadd.f32 0.0, %v1197
        %1199 = vdwg.mxu0
        %1200 = vmatpush.msra.mxu0 %v1139
        %1201 = vmatpush.msra.mxu0 %v1135
        %1202 = vmatpush.msra.mxu0 %v1131
        %1203 = vmatpush.msra.mxu0 %v1127
        %1204 = vmatpush.msra.mxu0 %v1123
        %1205 = vmatpush.msra.mxu0 %v1119
        %1206 = vmatpush.msra.mxu0 %v1115
        %1207 = vmatpush.msra.mxu0 %v1111
        %1208 = vmatpush.msra.mxu0 %v1107
        %1209 = vmatpush.msra.mxu0 %v1103
        %1210 = vmatpush.msra.mxu0 %v1099
        %1211 = vmatpush.msra.mxu0 %v1095
        %1212 = vmatpush.msra.mxu0 %v1091
        %1213 = vmatpush.msra.mxu0 %v1087
        %1214 = vmatpush.msra.mxu0 %v1083
        %1215 = vmatpush.msra.mxu0 %v1079
        %1216 = vmatmul.f32.gmra.mxu0 %v1067
        %v1217 = vpop.f32.mrf.mxu0
        %v1218 = vadd.f32 0.0, %v1217
        %1219 = vdwg.mxu0
        %v1220 = vadd.f32 %v1072, %v1158
        %v1221 = vadd.f32 %v1073, %v1178
        %v1222 = vadd.f32 %v1074, %v1198
        %v1223 = vadd.f32 %v1075, %v1218
        %v1224 = vxor.u32 %v1220, 2147483648
        %v1225 = vmul.f32 %v1224, 1.442695
        %v1226 = vpow.pop %v1225
        %v1227 = vadd.f32 %v1226, 1.0
        %v1228 = vrcp.pop %v1227
        %v1229 = vmul.f32 %v1227, %v1228
        %v1230 = vsub.f32 1.0, %v1229
        %v1231 = vmul.f32 %v1228, %v1230
        %v1232 = vadd.f32 %v1228, %v1231
        %vm1233 = vweird.f32 %v1227
        %vm1234 = vweird.f32 %v1228
        %vm1235 = vmor %vm1233, %vm1234
        %v1236 = vsel %vm1235, %v1228, %v1232
        %v1237 = vand.u32 2147483647, %v1227
        %vm1238 = vcmp.eq.f32.partialorder %v1237, 8.507059e+37
        %v1239 = vand.u32 %v1227, 2147483648
        %v1240 = vor.u32 1.1754944e-38, %v1239
        %v1241 = vsel %vm1238, %v1240, %v1236
        %v1242 = vmul.f32 1.0, %v1241
        %v1243 = vxor.u32 %v1221, 2147483648
        %v1244 = vmul.f32 %v1243, 1.442695
        %v1245 = vpow.pop %v1244
        %v1246 = vadd.f32 %v1245, 1.0
        %v1247 = vrcp.pop %v1246
        %v1248 = vmul.f32 %v1246, %v1247
        %v1249 = vsub.f32 1.0, %v1248
        %v1250 = vmul.f32 %v1247, %v1249
        %v1251 = vadd.f32 %v1247, %v1250
        %vm1252 = vweird.f32 %v1246
        %vm1253 = vweird.f32 %v1247
        %vm1254 = vmor %vm1252, %vm1253
        %v1255 = vsel %vm1254, %v1247, %v1251
        %v1256 = vand.u32 2147483647, %v1246
        %vm1257 = vcmp.eq.f32.partialorder %v1256, 8.507059e+37
        %v1258 = vand.u32 %v1246, 2147483648
        %v1259 = vor.u32 1.1754944e-38, %v1258
        %v1260 = vsel %vm1257, %v1259, %v1255
        %v1261 = vmul.f32 1.0, %v1260
        %v1262 = vtanh.pop %v1222
        %v1263 = vxor.u32 %v1223, 2147483648
        %v1264 = vmul.f32 %v1263, 1.442695
        %v1265 = vpow.pop %v1264
        %v1266 = vadd.f32 %v1265, 1.0
        %v1267 = vrcp.pop %v1266
        %v1268 = vmul.f32 %v1266, %v1267
        %v1269 = vsub.f32 1.0, %v1268
        %v1270 = vmul.f32 %v1267, %v1269
        %v1271 = vadd.f32 %v1267, %v1270
        %vm1272 = vweird.f32 %v1266
        %vm1273 = vweird.f32 %v1267
        %vm1274 = vmor %vm1272, %vm1273
        %v1275 = vsel %vm1274, %v1267, %v1271
        %v1276 = vand.u32 2147483647, %v1266
        %vm1277 = vcmp.eq.f32.partialorder %v1276, 8.507059e+37
        %v1278 = vand.u32 %v1266, 2147483648
        %v1279 = vor.u32 1.1754944e-38, %v1278
        %v1280 = vsel %vm1277, %v1279, %v1275
        %v1281 = vmul.f32 1.0, %v1280
        %v1282 = vmul.f32 %v1261, %v1068
        %v1283 = vmul.f32 %v1242, %v1262
        %v1284 = vadd.f32 %v1282, %v1283
        %v1285 = vtanh.pop %v1284
        %v1286 = vmul.f32 %v1281, %v1285
        %v1287 = vstv %s1066
        %vm1288 = vcmp.gt.s32.totalorder %v346, %v1287
        %v1289 = vsel %vm1288, 1, 0
        %1290 = vset.pattern.permute.xlu0 0
        %1291 = vperm.xlu0 %1290, %v1289
        %v1292 = vpop.permute.xlu0 %1291
        %vm1293 = vcmp.eq.s32.totalorder %v1292, 1
        %v1294 = vsel %vm1293, %v1284, %v1068
        %1295 = vst [vmem:[#allocation3] sm:$0xff] %v1294
        %v1296 = vsel %vm1293, %v1286, %v1067
        %1297 = vst [vmem:[#allocation2] sm:$0xff] %v1296
        %v1298 = vsel %vm1293, %v1286, 0.0
        %s1299 = smul.u32 %s1065, 8
        %s1300 = scalar_lea.vmem %s327, %s1299 [#allocation7]
        %1301 = vst [vmem:[%s1300] sm:$0xff] %v1298
        %s1302 = ssub.s32 4, %s21
        %s1303 = sadd.s32 %s352, %s1302
        %v1304 = vld [vmem:[#allocation2] sm:$0xff]
        %v1305 = vld [vmem:[#allocation3] sm:$0xff]
        %s1306 = smul.u32 %s1302, 4
        %s1307 = smul.addr %s1306, 8
        %s1308 = scalar_lea.vmem %s293, %s1307 [#allocation4]
        %v1309 = vld [vmem:[%s1308] sm:$0xff]
        %v1310 = vld [vmem:[%s1308 + $0x8] sm:$0xff]
        %v1311 = vld [vmem:[%s1308 + $0x10] sm:$0xff]
        %v1312 = vld [vmem:[%s1308 + $0x18] sm:$0xff]
        %v1313 = vld [vmem:[%s301] sm:$0xff]
        %v1314 = vld [vmem:[%s301 + $0x8] sm:$0xff]
        %v1315 = vld [vmem:[%s301 + $0x10] sm:$0xff]
        %v1316 = vld [vmem:[%s301 + $0x18] sm:$0xff]
        %v1317 = vld [vmem:[%s301 + $0x20] sm:$0xff]
        %v1318 = vld [vmem:[%s301 + $0x28] sm:$0xff]
        %v1319 = vld [vmem:[%s301 + $0x30] sm:$0xff]
        %v1320 = vld [vmem:[%s301 + $0x38] sm:$0xff]
        %v1321 = vld [vmem:[%s301 + $0x40] sm:$0xff]
        %v1322 = vld [vmem:[%s301 + $0x48] sm:$0xff]
        %v1323 = vld [vmem:[%s301 + $0x50] sm:$0xff]
        %v1324 = vld [vmem:[%s301 + $0x58] sm:$0xff]
        %v1325 = vld [vmem:[%s301 + $0x60] sm:$0xff]
        %v1326 = vld [vmem:[%s301 + $0x68] sm:$0xff]
        %v1327 = vld [vmem:[%s301 + $0x70] sm:$0xff]
        %v1328 = vld [vmem:[%s301 + $0x78] sm:$0xff]
        %v1329 = vld [vmem:[%s301 + $0x80] sm:$0xff]
        %v1330 = vld [vmem:[%s301 + $0x88] sm:$0xff]
        %v1331 = vld [vmem:[%s301 + $0x90] sm:$0xff]
        %v1332 = vld [vmem:[%s301 + $0x98] sm:$0xff]
        %v1333 = vld [vmem:[%s301 + $0xa0] sm:$0xff]
        %v1334 = vld [vmem:[%s301 + $0xa8] sm:$0xff]
        %v1335 = vld [vmem:[%s301 + $0xb0] sm:$0xff]
        %v1336 = vld [vmem:[%s301 + $0xb8] sm:$0xff]
        %v1337 = vld [vmem:[%s301 + $0xc0] sm:$0xff]
        %v1338 = vld [vmem:[%s301 + $0xc8] sm:$0xff]
        %v1339 = vld [vmem:[%s301 + $0xd0] sm:$0xff]
        %v1340 = vld [vmem:[%s301 + $0xd8] sm:$0xff]
        %v1341 = vld [vmem:[%s301 + $0xe0] sm:$0xff]
        %v1342 = vld [vmem:[%s301 + $0xe8] sm:$0xff]
        %v1343 = vld [vmem:[%s301 + $0xf0] sm:$0xff]
        %v1344 = vld [vmem:[%s301 + $0xf8] sm:$0xff]
        %v1345 = vld [vmem:[%s301 + $0x100] sm:$0xff]
        %v1346 = vld [vmem:[%s301 + $0x108] sm:$0xff]
        %v1347 = vld [vmem:[%s301 + $0x110] sm:$0xff]
        %v1348 = vld [vmem:[%s301 + $0x118] sm:$0xff]
        %v1349 = vld [vmem:[%s301 + $0x120] sm:$0xff]
        %v1350 = vld [vmem:[%s301 + $0x128] sm:$0xff]
        %v1351 = vld [vmem:[%s301 + $0x130] sm:$0xff]
        %v1352 = vld [vmem:[%s301 + $0x138] sm:$0xff]
        %v1353 = vld [vmem:[%s301 + $0x140] sm:$0xff]
        %v1354 = vld [vmem:[%s301 + $0x148] sm:$0xff]
        %v1355 = vld [vmem:[%s301 + $0x150] sm:$0xff]
        %v1356 = vld [vmem:[%s301 + $0x158] sm:$0xff]
        %v1357 = vld [vmem:[%s301 + $0x160] sm:$0xff]
        %v1358 = vld [vmem:[%s301 + $0x168] sm:$0xff]
        %v1359 = vld [vmem:[%s301 + $0x170] sm:$0xff]
        %v1360 = vld [vmem:[%s301 + $0x178] sm:$0xff]
        %v1361 = vld [vmem:[%s301 + $0x180] sm:$0xff]
        %v1362 = vld [vmem:[%s301 + $0x188] sm:$0xff]
        %v1363 = vld [vmem:[%s301 + $0x190] sm:$0xff]
        %v1364 = vld [vmem:[%s301 + $0x198] sm:$0xff]
        %v1365 = vld [vmem:[%s301 + $0x1a0] sm:$0xff]
        %v1366 = vld [vmem:[%s301 + $0x1a8] sm:$0xff]
        %v1367 = vld [vmem:[%s301 + $0x1b0] sm:$0xff]
        %v1368 = vld [vmem:[%s301 + $0x1b8] sm:$0xff]
        %v1369 = vld [vmem:[%s301 + $0x1c0] sm:$0xff]
        %v1370 = vld [vmem:[%s301 + $0x1c8] sm:$0xff]
        %v1371 = vld [vmem:[%s301 + $0x1d0] sm:$0xff]
        %v1372 = vld [vmem:[%s301 + $0x1d8] sm:$0xff]
        %v1373 = vld [vmem:[%s301 + $0x1e0] sm:$0xff]
        %v1374 = vld [vmem:[%s301 + $0x1e8] sm:$0xff]
        %v1375 = vld [vmem:[%s301 + $0x1f0] sm:$0xff]
        %v1376 = vld [vmem:[%s301 + $0x1f8] sm:$0xff]
        %1377 = vmatpush.msra.mxu0 %v1373
        %1378 = vmatpush.msra.mxu0 %v1369
        %1379 = vmatpush.msra.mxu0 %v1365
        %1380 = vmatpush.msra.mxu0 %v1361
        %1381 = vmatpush.msra.mxu0 %v1357
        %1382 = vmatpush.msra.mxu0 %v1353
        %1383 = vmatpush.msra.mxu0 %v1349
        %1384 = vmatpush.msra.mxu0 %v1345
        %1385 = vmatpush.msra.mxu0 %v1341
        %1386 = vmatpush.msra.mxu0 %v1337
        %1387 = vmatpush.msra.mxu0 %v1333
        %1388 = vmatpush.msra.mxu0 %v1329
        %1389 = vmatpush.msra.mxu0 %v1325
        %1390 = vmatpush.msra.mxu0 %v1321
        %1391 = vmatpush.msra.mxu0 %v1317
        %1392 = vmatpush.msra.mxu0 %v1313
        %1393 = vmatmul.f32.gmra.mxu0 %v1304
        %v1394 = vpop.f32.mrf.mxu0
        %v1395 = vadd.f32 0.0, %v1394
        %1396 = vdwg.mxu0
        %1397 = vmatpush.msra.mxu0 %v1374
        %1398 = vmatpush.msra.mxu0 %v1370
        %1399 = vmatpush.msra.mxu0 %v1366
        %1400 = vmatpush.msra.mxu0 %v1362
        %1401 = vmatpush.msra.mxu0 %v1358
        %1402 = vmatpush.msra.mxu0 %v1354
        %1403 = vmatpush.msra.mxu0 %v1350
        %1404 = vmatpush.msra.mxu0 %v1346
        %1405 = vmatpush.msra.mxu0 %v1342
        %1406 = vmatpush.msra.mxu0 %v1338
        %1407 = vmatpush.msra.mxu0 %v1334
        %1408 = vmatpush.msra.mxu0 %v1330
        %1409 = vmatpush.msra.mxu0 %v1326
        %1410 = vmatpush.msra.mxu0 %v1322
        %1411 = vmatpush.msra.mxu0 %v1318
        %1412 = vmatpush.msra.mxu0 %v1314
        %1413 = vmatmul.f32.gmra.mxu0 %v1304
        %v1414 = vpop.f32.mrf.mxu0
        %v1415 = vadd.f32 0.0, %v1414
        %1416 = vdwg.mxu0
        %1417 = vmatpush.msra.mxu0 %v1375
        %1418 = vmatpush.msra.mxu0 %v1371
        %1419 = vmatpush.msra.mxu0 %v1367
        %1420 = vmatpush.msra.mxu0 %v1363
        %1421 = vmatpush.msra.mxu0 %v1359
        %1422 = vmatpush.msra.mxu0 %v1355
        %1423 = vmatpush.msra.mxu0 %v1351
        %1424 = vmatpush.msra.mxu0 %v1347
        %1425 = vmatpush.msra.mxu0 %v1343
        %1426 = vmatpush.msra.mxu0 %v1339
        %1427 = vmatpush.msra.mxu0 %v1335
        %1428 = vmatpush.msra.mxu0 %v1331
        %1429 = vmatpush.msra.mxu0 %v1327
        %1430 = vmatpush.msra.mxu0 %v1323
        %1431 = vmatpush.msra.mxu0 %v1319
        %1432 = vmatpush.msra.mxu0 %v1315
        %1433 = vmatmul.f32.gmra.mxu0 %v1304
        %v1434 = vpop.f32.mrf.mxu0
        %v1435 = vadd.f32 0.0, %v1434
        %1436 = vdwg.mxu0
        %1437 = vmatpush.msra.mxu0 %v1376
        %1438 = vmatpush.msra.mxu0 %v1372
        %1439 = vmatpush.msra.mxu0 %v1368
        %1440 = vmatpush.msra.mxu0 %v1364
        %1441 = vmatpush.msra.mxu0 %v1360
        %1442 = vmatpush.msra.mxu0 %v1356
        %1443 = vmatpush.msra.mxu0 %v1352
        %1444 = vmatpush.msra.mxu0 %v1348
        %1445 = vmatpush.msra.mxu0 %v1344
        %1446 = vmatpush.msra.mxu0 %v1340
        %1447 = vmatpush.msra.mxu0 %v1336
        %1448 = vmatpush.msra.mxu0 %v1332
        %1449 = vmatpush.msra.mxu0 %v1328
        %1450 = vmatpush.msra.mxu0 %v1324
        %1451 = vmatpush.msra.mxu0 %v1320
        %1452 = vmatpush.msra.mxu0 %v1316
        %1453 = vmatmul.f32.gmra.mxu0 %v1304
        %v1454 = vpop.f32.mrf.mxu0
        %v1455 = vadd.f32 0.0, %v1454
        %1456 = vdwg.mxu0
        %v1457 = vadd.f32 %v1309, %v1395
        %v1458 = vadd.f32 %v1310, %v1415
        %v1459 = vadd.f32 %v1311, %v1435
        %v1460 = vadd.f32 %v1312, %v1455
        %v1461 = vxor.u32 %v1457, 2147483648
        %v1462 = vmul.f32 %v1461, 1.442695
        %v1463 = vpow.pop %v1462
        %v1464 = vadd.f32 %v1463, 1.0
        %v1465 = vrcp.pop %v1464
        %v1466 = vmul.f32 %v1464, %v1465
        %v1467 = vsub.f32 1.0, %v1466
        %v1468 = vmul.f32 %v1465, %v1467
        %v1469 = vadd.f32 %v1465, %v1468
        %vm1470 = vweird.f32 %v1464
        %vm1471 = vweird.f32 %v1465
        %vm1472 = vmor %vm1470, %vm1471
        %v1473 = vsel %vm1472, %v1465, %v1469
        %v1474 = vand.u32 2147483647, %v1464
        %vm1475 = vcmp.eq.f32.partialorder %v1474, 8.507059e+37
        %v1476 = vand.u32 %v1464, 2147483648
        %v1477 = vor.u32 1.1754944e-38, %v1476
        %v1478 = vsel %vm1475, %v1477, %v1473
        %v1479 = vmul.f32 1.0, %v1478
        %v1480 = vxor.u32 %v1458, 2147483648
        %v1481 = vmul.f32 %v1480, 1.442695
        %v1482 = vpow.pop %v1481
        %v1483 = vadd.f32 %v1482, 1.0
        %v1484 = vrcp.pop %v1483
        %v1485 = vmul.f32 %v1483, %v1484
        %v1486 = vsub.f32 1.0, %v1485
        %v1487 = vmul.f32 %v1484, %v1486
        %v1488 = vadd.f32 %v1484, %v1487
        %vm1489 = vweird.f32 %v1483
        %vm1490 = vweird.f32 %v1484
        %vm1491 = vmor %vm1489, %vm1490
        %v1492 = vsel %vm1491, %v1484, %v1488
        %v1493 = vand.u32 2147483647, %v1483
        %vm1494 = vcmp.eq.f32.partialorder %v1493, 8.507059e+37
        %v1495 = vand.u32 %v1483, 2147483648
        %v1496 = vor.u32 1.1754944e-38, %v1495
        %v1497 = vsel %vm1494, %v1496, %v1492
        %v1498 = vmul.f32 1.0, %v1497
        %v1499 = vtanh.pop %v1459
        %v1500 = vxor.u32 %v1460, 2147483648
        %v1501 = vmul.f32 %v1500, 1.442695
        %v1502 = vpow.pop %v1501
        %v1503 = vadd.f32 %v1502, 1.0
        %v1504 = vrcp.pop %v1503
        %v1505 = vmul.f32 %v1503, %v1504
        %v1506 = vsub.f32 1.0, %v1505
        %v1507 = vmul.f32 %v1504, %v1506
        %v1508 = vadd.f32 %v1504, %v1507
        %vm1509 = vweird.f32 %v1503
        %vm1510 = vweird.f32 %v1504
        %vm1511 = vmor %vm1509, %vm1510
        %v1512 = vsel %vm1511, %v1504, %v1508
        %v1513 = vand.u32 2147483647, %v1503
        %vm1514 = vcmp.eq.f32.partialorder %v1513, 8.507059e+37
        %v1515 = vand.u32 %v1503, 2147483648
        %v1516 = vor.u32 1.1754944e-38, %v1515
        %v1517 = vsel %vm1514, %v1516, %v1512
        %v1518 = vmul.f32 1.0, %v1517
        %v1519 = vmul.f32 %v1498, %v1305
        %v1520 = vmul.f32 %v1479, %v1499
        %v1521 = vadd.f32 %v1519, %v1520
        %v1522 = vtanh.pop %v1521
        %v1523 = vmul.f32 %v1518, %v1522
        %v1524 = vstv %s1303
        %vm1525 = vcmp.gt.s32.totalorder %v346, %v1524
        %v1526 = vsel %vm1525, 1, 0
        %1527 = vset.pattern.permute.xlu0 0
        %1528 = vperm.xlu0 %1527, %v1526
        %v1529 = vpop.permute.xlu0 %1528
        %vm1530 = vcmp.eq.s32.totalorder %v1529, 1
        %v1531 = vsel %vm1530, %v1521, %v1305
        %1532 = vst [vmem:[#allocation3] sm:$0xff] %v1531
        %v1533 = vsel %vm1530, %v1523, %v1304
        %1534 = vst [vmem:[#allocation2] sm:$0xff] %v1533
        %v1535 = vsel %vm1530, %v1523, 0.0
        %s1536 = smul.u32 %s1302, 8
        %s1537 = scalar_lea.vmem %s327, %s1536 [#allocation7]
        %1538 = vst [vmem:[%s1537] sm:$0xff] %v1535
        %s1539 = smul.u32 %s21, 4294967293
        %s1540 = sadd.s32 %s1539, 5
        %s1541 = sadd.s32 %s352, %s1540
        %v1542 = vld [vmem:[#allocation2] sm:$0xff]
        %v1543 = vld [vmem:[#allocation3] sm:$0xff]
        %s1544 = smul.u32 %s1540, 4
        %s1545 = smul.addr %s1544, 8
        %s1546 = scalar_lea.vmem %s293, %s1545 [#allocation4]
        %v1547 = vld [vmem:[%s1546] sm:$0xff]
        %v1548 = vld [vmem:[%s1546 + $0x8] sm:$0xff]
        %v1549 = vld [vmem:[%s1546 + $0x10] sm:$0xff]
        %v1550 = vld [vmem:[%s1546 + $0x18] sm:$0xff]
        %v1551 = vld [vmem:[%s301] sm:$0xff]
        %v1552 = vld [vmem:[%s301 + $0x8] sm:$0xff]
        %v1553 = vld [vmem:[%s301 + $0x10] sm:$0xff]
        %v1554 = vld [vmem:[%s301 + $0x18] sm:$0xff]
        %v1555 = vld [vmem:[%s301 + $0x20] sm:$0xff]
        %v1556 = vld [vmem:[%s301 + $0x28] sm:$0xff]
        %v1557 = vld [vmem:[%s301 + $0x30] sm:$0xff]
        %v1558 = vld [vmem:[%s301 + $0x38] sm:$0xff]
        %v1559 = vld [vmem:[%s301 + $0x40] sm:$0xff]
        %v1560 = vld [vmem:[%s301 + $0x48] sm:$0xff]
        %v1561 = vld [vmem:[%s301 + $0x50] sm:$0xff]
        %v1562 = vld [vmem:[%s301 + $0x58] sm:$0xff]
        %v1563 = vld [vmem:[%s301 + $0x60] sm:$0xff]
        %v1564 = vld [vmem:[%s301 + $0x68] sm:$0xff]
        %v1565 = vld [vmem:[%s301 + $0x70] sm:$0xff]
        %v1566 = vld [vmem:[%s301 + $0x78] sm:$0xff]
        %v1567 = vld [vmem:[%s301 + $0x80] sm:$0xff]
        %v1568 = vld [vmem:[%s301 + $0x88] sm:$0xff]
        %v1569 = vld [vmem:[%s301 + $0x90] sm:$0xff]
        %v1570 = vld [vmem:[%s301 + $0x98] sm:$0xff]
        %v1571 = vld [vmem:[%s301 + $0xa0] sm:$0xff]
        %v1572 = vld [vmem:[%s301 + $0xa8] sm:$0xff]
        %v1573 = vld [vmem:[%s301 + $0xb0] sm:$0xff]
        %v1574 = vld [vmem:[%s301 + $0xb8] sm:$0xff]
        %v1575 = vld [vmem:[%s301 + $0xc0] sm:$0xff]
        %v1576 = vld [vmem:[%s301 + $0xc8] sm:$0xff]
        %v1577 = vld [vmem:[%s301 + $0xd0] sm:$0xff]
        %v1578 = vld [vmem:[%s301 + $0xd8] sm:$0xff]
        %v1579 = vld [vmem:[%s301 + $0xe0] sm:$0xff]
        %v1580 = vld [vmem:[%s301 + $0xe8] sm:$0xff]
        %v1581 = vld [vmem:[%s301 + $0xf0] sm:$0xff]
        %v1582 = vld [vmem:[%s301 + $0xf8] sm:$0xff]
        %v1583 = vld [vmem:[%s301 + $0x100] sm:$0xff]
        %v1584 = vld [vmem:[%s301 + $0x108] sm:$0xff]
        %v1585 = vld [vmem:[%s301 + $0x110] sm:$0xff]
        %v1586 = vld [vmem:[%s301 + $0x118] sm:$0xff]
        %v1587 = vld [vmem:[%s301 + $0x120] sm:$0xff]
        %v1588 = vld [vmem:[%s301 + $0x128] sm:$0xff]
        %v1589 = vld [vmem:[%s301 + $0x130] sm:$0xff]
        %v1590 = vld [vmem:[%s301 + $0x138] sm:$0xff]
        %v1591 = vld [vmem:[%s301 + $0x140] sm:$0xff]
        %v1592 = vld [vmem:[%s301 + $0x148] sm:$0xff]
        %v1593 = vld [vmem:[%s301 + $0x150] sm:$0xff]
        %v1594 = vld [vmem:[%s301 + $0x158] sm:$0xff]
        %v1595 = vld [vmem:[%s301 + $0x160] sm:$0xff]
        %v1596 = vld [vmem:[%s301 + $0x168] sm:$0xff]
        %v1597 = vld [vmem:[%s301 + $0x170] sm:$0xff]
        %v1598 = vld [vmem:[%s301 + $0x178] sm:$0xff]
        %v1599 = vld [vmem:[%s301 + $0x180] sm:$0xff]
        %v1600 = vld [vmem:[%s301 + $0x188] sm:$0xff]
        %v1601 = vld [vmem:[%s301 + $0x190] sm:$0xff]
        %v1602 = vld [vmem:[%s301 + $0x198] sm:$0xff]
        %v1603 = vld [vmem:[%s301 + $0x1a0] sm:$0xff]
        %v1604 = vld [vmem:[%s301 + $0x1a8] sm:$0xff]
        %v1605 = vld [vmem:[%s301 + $0x1b0] sm:$0xff]
        %v1606 = vld [vmem:[%s301 + $0x1b8] sm:$0xff]
        %v1607 = vld [vmem:[%s301 + $0x1c0] sm:$0xff]
        %v1608 = vld [vmem:[%s301 + $0x1c8] sm:$0xff]
        %v1609 = vld [vmem:[%s301 + $0x1d0] sm:$0xff]
        %v1610 = vld [vmem:[%s301 + $0x1d8] sm:$0xff]
        %v1611 = vld [vmem:[%s301 + $0x1e0] sm:$0xff]
        %v1612 = vld [vmem:[%s301 + $0x1e8] sm:$0xff]
        %v1613 = vld [vmem:[%s301 + $0x1f0] sm:$0xff]
        %v1614 = vld [vmem:[%s301 + $0x1f8] sm:$0xff]
        %1615 = vmatpush.msra.mxu0 %v1611
        %1616 = vmatpush.msra.mxu0 %v1607
        %1617 = vmatpush.msra.mxu0 %v1603
        %1618 = vmatpush.msra.mxu0 %v1599
        %1619 = vmatpush.msra.mxu0 %v1595
        %1620 = vmatpush.msra.mxu0 %v1591
        %1621 = vmatpush.msra.mxu0 %v1587
        %1622 = vmatpush.msra.mxu0 %v1583
        %1623 = vmatpush.msra.mxu0 %v1579
        %1624 = vmatpush.msra.mxu0 %v1575
        %1625 = vmatpush.msra.mxu0 %v1571
        %1626 = vmatpush.msra.mxu0 %v1567
        %1627 = vmatpush.msra.mxu0 %v1563
        %1628 = vmatpush.msra.mxu0 %v1559
        %1629 = vmatpush.msra.mxu0 %v1555
        %1630 = vmatpush.msra.mxu0 %v1551
        %1631 = vmatmul.f32.gmra.mxu0 %v1542
        %v1632 = vpop.f32.mrf.mxu0
        %v1633 = vadd.f32 0.0, %v1632
        %1634 = vdwg.mxu0
        %1635 = vmatpush.msra.mxu0 %v1612
        %1636 = vmatpush.msra.mxu0 %v1608
        %1637 = vmatpush.msra.mxu0 %v1604
        %1638 = vmatpush.msra.mxu0 %v1600
        %1639 = vmatpush.msra.mxu0 %v1596
        %1640 = vmatpush.msra.mxu0 %v1592
        %1641 = vmatpush.msra.mxu0 %v1588
        %1642 = vmatpush.msra.mxu0 %v1584
        %1643 = vmatpush.msra.mxu0 %v1580
        %1644 = vmatpush.msra.mxu0 %v1576
        %1645 = vmatpush.msra.mxu0 %v1572
        %1646 = vmatpush.msra.mxu0 %v1568
        %1647 = vmatpush.msra.mxu0 %v1564
        %1648 = vmatpush.msra.mxu0 %v1560
        %1649 = vmatpush.msra.mxu0 %v1556
        %1650 = vmatpush.msra.mxu0 %v1552
        %1651 = vmatmul.f32.gmra.mxu0 %v1542
        %v1652 = vpop.f32.mrf.mxu0
        %v1653 = vadd.f32 0.0, %v1652
        %1654 = vdwg.mxu0
        %1655 = vmatpush.msra.mxu0 %v1613
        %1656 = vmatpush.msra.mxu0 %v1609
        %1657 = vmatpush.msra.mxu0 %v1605
        %1658 = vmatpush.msra.mxu0 %v1601
        %1659 = vmatpush.msra.mxu0 %v1597
        %1660 = vmatpush.msra.mxu0 %v1593
        %1661 = vmatpush.msra.mxu0 %v1589
        %1662 = vmatpush.msra.mxu0 %v1585
        %1663 = vmatpush.msra.mxu0 %v1581
        %1664 = vmatpush.msra.mxu0 %v1577
        %1665 = vmatpush.msra.mxu0 %v1573
        %1666 = vmatpush.msra.mxu0 %v1569
        %1667 = vmatpush.msra.mxu0 %v1565
        %1668 = vmatpush.msra.mxu0 %v1561
        %1669 = vmatpush.msra.mxu0 %v1557
        %1670 = vmatpush.msra.mxu0 %v1553
        %1671 = vmatmul.f32.gmra.mxu0 %v1542
        %v1672 = vpop.f32.mrf.mxu0
        %v1673 = vadd.f32 0.0, %v1672
        %1674 = vdwg.mxu0
        %1675 = vmatpush.msra.mxu0 %v1614
        %1676 = vmatpush.msra.mxu0 %v1610
        %1677 = vmatpush.msra.mxu0 %v1606
        %1678 = vmatpush.msra.mxu0 %v1602
        %1679 = vmatpush.msra.mxu0 %v1598
        %1680 = vmatpush.msra.mxu0 %v1594
        %1681 = vmatpush.msra.mxu0 %v1590
        %1682 = vmatpush.msra.mxu0 %v1586
        %1683 = vmatpush.msra.mxu0 %v1582
        %1684 = vmatpush.msra.mxu0 %v1578
        %1685 = vmatpush.msra.mxu0 %v1574
        %1686 = vmatpush.msra.mxu0 %v1570
        %1687 = vmatpush.msra.mxu0 %v1566
        %1688 = vmatpush.msra.mxu0 %v1562
        %1689 = vmatpush.msra.mxu0 %v1558
        %1690 = vmatpush.msra.mxu0 %v1554
        %1691 = vmatmul.f32.gmra.mxu0 %v1542
        %v1692 = vpop.f32.mrf.mxu0
        %v1693 = vadd.f32 0.0, %v1692
        %1694 = vdwg.mxu0
        %v1695 = vadd.f32 %v1547, %v1633
        %v1696 = vadd.f32 %v1548, %v1653
        %v1697 = vadd.f32 %v1549, %v1673
        %v1698 = vadd.f32 %v1550, %v1693
        %v1699 = vxor.u32 %v1695, 2147483648
        %v1700 = vmul.f32 %v1699, 1.442695
        %v1701 = vpow.pop %v1700
        %v1702 = vadd.f32 %v1701, 1.0
        %v1703 = vrcp.pop %v1702
        %v1704 = vmul.f32 %v1702, %v1703
        %v1705 = vsub.f32 1.0, %v1704
        %v1706 = vmul.f32 %v1703, %v1705
        %v1707 = vadd.f32 %v1703, %v1706
        %vm1708 = vweird.f32 %v1702
        %vm1709 = vweird.f32 %v1703
        %vm1710 = vmor %vm1708, %vm1709
        %v1711 = vsel %vm1710, %v1703, %v1707
        %v1712 = vand.u32 2147483647, %v1702
        %vm1713 = vcmp.eq.f32.partialorder %v1712, 8.507059e+37
        %v1714 = vand.u32 %v1702, 2147483648
        %v1715 = vor.u32 1.1754944e-38, %v1714
        %v1716 = vsel %vm1713, %v1715, %v1711
        %v1717 = vmul.f32 1.0, %v1716
        %v1718 = vxor.u32 %v1696, 2147483648
        %v1719 = vmul.f32 %v1718, 1.442695
        %v1720 = vpow.pop %v1719
        %v1721 = vadd.f32 %v1720, 1.0
        %v1722 = vrcp.pop %v1721
        %v1723 = vmul.f32 %v1721, %v1722
        %v1724 = vsub.f32 1.0, %v1723
        %v1725 = vmul.f32 %v1722, %v1724
        %v1726 = vadd.f32 %v1722, %v1725
        %vm1727 = vweird.f32 %v1721
        %vm1728 = vweird.f32 %v1722
        %vm1729 = vmor %vm1727, %vm1728
        %v1730 = vsel %vm1729, %v1722, %v1726
        %v1731 = vand.u32 2147483647, %v1721
        %vm1732 = vcmp.eq.f32.partialorder %v1731, 8.507059e+37
        %v1733 = vand.u32 %v1721, 2147483648
        %v1734 = vor.u32 1.1754944e-38, %v1733
        %v1735 = vsel %vm1732, %v1734, %v1730
        %v1736 = vmul.f32 1.0, %v1735
        %v1737 = vtanh.pop %v1697
        %v1738 = vxor.u32 %v1698, 2147483648
        %v1739 = vmul.f32 %v1738, 1.442695
        %v1740 = vpow.pop %v1739
        %v1741 = vadd.f32 %v1740, 1.0
        %v1742 = vrcp.pop %v1741
        %v1743 = vmul.f32 %v1741, %v1742
        %v1744 = vsub.f32 1.0, %v1743
        %v1745 = vmul.f32 %v1742, %v1744
        %v1746 = vadd.f32 %v1742, %v1745
        %vm1747 = vweird.f32 %v1741
        %vm1748 = vweird.f32 %v1742
        %vm1749 = vmor %vm1747, %vm1748
        %v1750 = vsel %vm1749, %v1742, %v1746
        %v1751 = vand.u32 2147483647, %v1741
        %vm1752 = vcmp.eq.f32.partialorder %v1751, 8.507059e+37
        %v1753 = vand.u32 %v1741, 2147483648
        %v1754 = vor.u32 1.1754944e-38, %v1753
        %v1755 = vsel %vm1752, %v1754, %v1750
        %v1756 = vmul.f32 1.0, %v1755
        %v1757 = vmul.f32 %v1736, %v1543
        %v1758 = vmul.f32 %v1717, %v1737
        %v1759 = vadd.f32 %v1757, %v1758
        %v1760 = vtanh.pop %v1759
        %v1761 = vmul.f32 %v1756, %v1760
        %v1762 = vstv %s1541
        %vm1763 = vcmp.gt.s32.totalorder %v346, %v1762
        %v1764 = vsel %vm1763, 1, 0
        %1765 = vset.pattern.permute.xlu0 0
        %1766 = vperm.xlu0 %1765, %v1764
        %v1767 = vpop.permute.xlu0 %1766
        %vm1768 = vcmp.eq.s32.totalorder %v1767, 1
        %v1769 = vsel %vm1768, %v1759, %v1543
        %1770 = vst [vmem:[#allocation3] sm:$0xff] %v1769
        %v1771 = vsel %vm1768, %v1761, %v1542
        %1772 = vst [vmem:[#allocation2] sm:$0xff] %v1771
        %v1773 = vsel %vm1768, %v1761, 0.0
        %s1774 = smul.u32 %s1540, 8
        %s1775 = scalar_lea.vmem %s327, %s1774 [#allocation7]
        %1776 = vst [vmem:[%s1775] sm:$0xff] %v1773
        %s1777 = smul.u32 %s21, 4294967291
        %s1778 = sadd.s32 %s1777, 6
        %s1779 = sadd.s32 %s352, %s1778
        %v1780 = vld [vmem:[#allocation2] sm:$0xff]
        %v1781 = vld [vmem:[#allocation3] sm:$0xff]
        %s1782 = smul.u32 %s1778, 4
        %s1783 = smul.addr %s1782, 8
        %s1784 = scalar_lea.vmem %s293, %s1783 [#allocation4]
        %v1785 = vld [vmem:[%s1784] sm:$0xff]
        %v1786 = vld [vmem:[%s1784 + $0x8] sm:$0xff]
        %v1787 = vld [vmem:[%s1784 + $0x10] sm:$0xff]
        %v1788 = vld [vmem:[%s1784 + $0x18] sm:$0xff]
        %v1789 = vld [vmem:[%s301] sm:$0xff]
        %v1790 = vld [vmem:[%s301 + $0x8] sm:$0xff]
        %v1791 = vld [vmem:[%s301 + $0x10] sm:$0xff]
        %v1792 = vld [vmem:[%s301 + $0x18] sm:$0xff]
        %v1793 = vld [vmem:[%s301 + $0x20] sm:$0xff]
        %v1794 = vld [vmem:[%s301 + $0x28] sm:$0xff]
        %v1795 = vld [vmem:[%s301 + $0x30] sm:$0xff]
        %v1796 = vld [vmem:[%s301 + $0x38] sm:$0xff]
        %v1797 = vld [vmem:[%s301 + $0x40] sm:$0xff]
        %v1798 = vld [vmem:[%s301 + $0x48] sm:$0xff]
        %v1799 = vld [vmem:[%s301 + $0x50] sm:$0xff]
        %v1800 = vld [vmem:[%s301 + $0x58] sm:$0xff]
        %v1801 = vld [vmem:[%s301 + $0x60] sm:$0xff]
        %v1802 = vld [vmem:[%s301 + $0x68] sm:$0xff]
        %v1803 = vld [vmem:[%s301 + $0x70] sm:$0xff]
        %v1804 = vld [vmem:[%s301 + $0x78] sm:$0xff]
        %v1805 = vld [vmem:[%s301 + $0x80] sm:$0xff]
        %v1806 = vld [vmem:[%s301 + $0x88] sm:$0xff]
        %v1807 = vld [vmem:[%s301 + $0x90] sm:$0xff]
        %v1808 = vld [vmem:[%s301 + $0x98] sm:$0xff]
        %v1809 = vld [vmem:[%s301 + $0xa0] sm:$0xff]
        %v1810 = vld [vmem:[%s301 + $0xa8] sm:$0xff]
        %v1811 = vld [vmem:[%s301 + $0xb0] sm:$0xff]
        %v1812 = vld [vmem:[%s301 + $0xb8] sm:$0xff]
        %v1813 = vld [vmem:[%s301 + $0xc0] sm:$0xff]
        %v1814 = vld [vmem:[%s301 + $0xc8] sm:$0xff]
        %v1815 = vld [vmem:[%s301 + $0xd0] sm:$0xff]
        %v1816 = vld [vmem:[%s301 + $0xd8] sm:$0xff]
        %v1817 = vld [vmem:[%s301 + $0xe0] sm:$0xff]
        %v1818 = vld [vmem:[%s301 + $0xe8] sm:$0xff]
        %v1819 = vld [vmem:[%s301 + $0xf0] sm:$0xff]
        %v1820 = vld [vmem:[%s301 + $0xf8] sm:$0xff]
        %v1821 = vld [vmem:[%s301 + $0x100] sm:$0xff]
        %v1822 = vld [vmem:[%s301 + $0x108] sm:$0xff]
        %v1823 = vld [vmem:[%s301 + $0x110] sm:$0xff]
        %v1824 = vld [vmem:[%s301 + $0x118] sm:$0xff]
        %v1825 = vld [vmem:[%s301 + $0x120] sm:$0xff]
        %v1826 = vld [vmem:[%s301 + $0x128] sm:$0xff]
        %v1827 = vld [vmem:[%s301 + $0x130] sm:$0xff]
        %v1828 = vld [vmem:[%s301 + $0x138] sm:$0xff]
        %v1829 = vld [vmem:[%s301 + $0x140] sm:$0xff]
        %v1830 = vld [vmem:[%s301 + $0x148] sm:$0xff]
        %v1831 = vld [vmem:[%s301 + $0x150] sm:$0xff]
        %v1832 = vld [vmem:[%s301 + $0x158] sm:$0xff]
        %v1833 = vld [vmem:[%s301 + $0x160] sm:$0xff]
        %v1834 = vld [vmem:[%s301 + $0x168] sm:$0xff]
        %v1835 = vld [vmem:[%s301 + $0x170] sm:$0xff]
        %v1836 = vld [vmem:[%s301 + $0x178] sm:$0xff]
        %v1837 = vld [vmem:[%s301 + $0x180] sm:$0xff]
        %v1838 = vld [vmem:[%s301 + $0x188] sm:$0xff]
        %v1839 = vld [vmem:[%s301 + $0x190] sm:$0xff]
        %v1840 = vld [vmem:[%s301 + $0x198] sm:$0xff]
        %v1841 = vld [vmem:[%s301 + $0x1a0] sm:$0xff]
        %v1842 = vld [vmem:[%s301 + $0x1a8] sm:$0xff]
        %v1843 = vld [vmem:[%s301 + $0x1b0] sm:$0xff]
        %v1844 = vld [vmem:[%s301 + $0x1b8] sm:$0xff]
        %v1845 = vld [vmem:[%s301 + $0x1c0] sm:$0xff]
        %v1846 = vld [vmem:[%s301 + $0x1c8] sm:$0xff]
        %v1847 = vld [vmem:[%s301 + $0x1d0] sm:$0xff]
        %v1848 = vld [vmem:[%s301 + $0x1d8] sm:$0xff]
        %v1849 = vld [vmem:[%s301 + $0x1e0] sm:$0xff]
        %v1850 = vld [vmem:[%s301 + $0x1e8] sm:$0xff]
        %v1851 = vld [vmem:[%s301 + $0x1f0] sm:$0xff]
        %v1852 = vld [vmem:[%s301 + $0x1f8] sm:$0xff]
        %1853 = vmatpush.msra.mxu0 %v1849
        %1854 = vmatpush.msra.mxu0 %v1845
        %1855 = vmatpush.msra.mxu0 %v1841
        %1856 = vmatpush.msra.mxu0 %v1837
        %1857 = vmatpush.msra.mxu0 %v1833
        %1858 = vmatpush.msra.mxu0 %v1829
        %1859 = vmatpush.msra.mxu0 %v1825
        %1860 = vmatpush.msra.mxu0 %v1821
        %1861 = vmatpush.msra.mxu0 %v1817
        %1862 = vmatpush.msra.mxu0 %v1813
        %1863 = vmatpush.msra.mxu0 %v1809
        %1864 = vmatpush.msra.mxu0 %v1805
        %1865 = vmatpush.msra.mxu0 %v1801
        %1866 = vmatpush.msra.mxu0 %v1797
        %1867 = vmatpush.msra.mxu0 %v1793
        %1868 = vmatpush.msra.mxu0 %v1789
        %1869 = vmatmul.f32.gmra.mxu0 %v1780
        %v1870 = vpop.f32.mrf.mxu0
        %v1871 = vadd.f32 0.0, %v1870
        %1872 = vdwg.mxu0
        %1873 = vmatpush.msra.mxu0 %v1850
        %1874 = vmatpush.msra.mxu0 %v1846
        %1875 = vmatpush.msra.mxu0 %v1842
        %1876 = vmatpush.msra.mxu0 %v1838
        %1877 = vmatpush.msra.mxu0 %v1834
        %1878 = vmatpush.msra.mxu0 %v1830
        %1879 = vmatpush.msra.mxu0 %v1826
        %1880 = vmatpush.msra.mxu0 %v1822
        %1881 = vmatpush.msra.mxu0 %v1818
        %1882 = vmatpush.msra.mxu0 %v1814
        %1883 = vmatpush.msra.mxu0 %v1810
        %1884 = vmatpush.msra.mxu0 %v1806
        %1885 = vmatpush.msra.mxu0 %v1802
        %1886 = vmatpush.msra.mxu0 %v1798
        %1887 = vmatpush.msra.mxu0 %v1794
        %1888 = vmatpush.msra.mxu0 %v1790
        %1889 = vmatmul.f32.gmra.mxu0 %v1780
        %v1890 = vpop.f32.mrf.mxu0
        %v1891 = vadd.f32 0.0, %v1890
        %1892 = vdwg.mxu0
        %1893 = vmatpush.msra.mxu0 %v1851
        %1894 = vmatpush.msra.mxu0 %v1847
        %1895 = vmatpush.msra.mxu0 %v1843
        %1896 = vmatpush.msra.mxu0 %v1839
        %1897 = vmatpush.msra.mxu0 %v1835
        %1898 = vmatpush.msra.mxu0 %v1831
        %1899 = vmatpush.msra.mxu0 %v1827
        %1900 = vmatpush.msra.mxu0 %v1823
        %1901 = vmatpush.msra.mxu0 %v1819
        %1902 = vmatpush.msra.mxu0 %v1815
        %1903 = vmatpush.msra.mxu0 %v1811
        %1904 = vmatpush.msra.mxu0 %v1807
        %1905 = vmatpush.msra.mxu0 %v1803
        %1906 = vmatpush.msra.mxu0 %v1799
        %1907 = vmatpush.msra.mxu0 %v1795
        %1908 = vmatpush.msra.mxu0 %v1791
        %1909 = vmatmul.f32.gmra.mxu0 %v1780
        %v1910 = vpop.f32.mrf.mxu0
        %v1911 = vadd.f32 0.0, %v1910
        %1912 = vdwg.mxu0
        %1913 = vmatpush.msra.mxu0 %v1852
        %1914 = vmatpush.msra.mxu0 %v1848
        %1915 = vmatpush.msra.mxu0 %v1844
        %1916 = vmatpush.msra.mxu0 %v1840
        %1917 = vmatpush.msra.mxu0 %v1836
        %1918 = vmatpush.msra.mxu0 %v1832
        %1919 = vmatpush.msra.mxu0 %v1828
        %1920 = vmatpush.msra.mxu0 %v1824
        %1921 = vmatpush.msra.mxu0 %v1820
        %1922 = vmatpush.msra.mxu0 %v1816
        %1923 = vmatpush.msra.mxu0 %v1812
        %1924 = vmatpush.msra.mxu0 %v1808
        %1925 = vmatpush.msra.mxu0 %v1804
        %1926 = vmatpush.msra.mxu0 %v1800
        %1927 = vmatpush.msra.mxu0 %v1796
        %1928 = vmatpush.msra.mxu0 %v1792
        %1929 = vmatmul.f32.gmra.mxu0 %v1780
        %v1930 = vpop.f32.mrf.mxu0
        %v1931 = vadd.f32 0.0, %v1930
        %1932 = vdwg.mxu0
        %v1933 = vadd.f32 %v1785, %v1871
        %v1934 = vadd.f32 %v1786, %v1891
        %v1935 = vadd.f32 %v1787, %v1911
        %v1936 = vadd.f32 %v1788, %v1931
        %v1937 = vxor.u32 %v1933, 2147483648
        %v1938 = vmul.f32 %v1937, 1.442695
        %v1939 = vpow.pop %v1938
        %v1940 = vadd.f32 %v1939, 1.0
        %v1941 = vrcp.pop %v1940
        %v1942 = vmul.f32 %v1940, %v1941
        %v1943 = vsub.f32 1.0, %v1942
        %v1944 = vmul.f32 %v1941, %v1943
        %v1945 = vadd.f32 %v1941, %v1944
        %vm1946 = vweird.f32 %v1940
        %vm1947 = vweird.f32 %v1941
        %vm1948 = vmor %vm1946, %vm1947
        %v1949 = vsel %vm1948, %v1941, %v1945
        %v1950 = vand.u32 2147483647, %v1940
        %vm1951 = vcmp.eq.f32.partialorder %v1950, 8.507059e+37
        %v1952 = vand.u32 %v1940, 2147483648
        %v1953 = vor.u32 1.1754944e-38, %v1952
        %v1954 = vsel %vm1951, %v1953, %v1949
        %v1955 = vmul.f32 1.0, %v1954
        %v1956 = vxor.u32 %v1934, 2147483648
        %v1957 = vmul.f32 %v1956, 1.442695
        %v1958 = vpow.pop %v1957
        %v1959 = vadd.f32 %v1958, 1.0
        %v1960 = vrcp.pop %v1959
        %v1961 = vmul.f32 %v1959, %v1960
        %v1962 = vsub.f32 1.0, %v1961
        %v1963 = vmul.f32 %v1960, %v1962
        %v1964 = vadd.f32 %v1960, %v1963
        %vm1965 = vweird.f32 %v1959
        %vm1966 = vweird.f32 %v1960
        %vm1967 = vmor %vm1965, %vm1966
        %v1968 = vsel %vm1967, %v1960, %v1964
        %v1969 = vand.u32 2147483647, %v1959
        %vm1970 = vcmp.eq.f32.partialorder %v1969, 8.507059e+37
        %v1971 = vand.u32 %v1959, 2147483648
        %v1972 = vor.u32 1.1754944e-38, %v1971
        %v1973 = vsel %vm1970, %v1972, %v1968
        %v1974 = vmul.f32 1.0, %v1973
        %v1975 = vtanh.pop %v1935
        %v1976 = vxor.u32 %v1936, 2147483648
        %v1977 = vmul.f32 %v1976, 1.442695
        %v1978 = vpow.pop %v1977
        %v1979 = vadd.f32 %v1978, 1.0
        %v1980 = vrcp.pop %v1979
        %v1981 = vmul.f32 %v1979, %v1980
        %v1982 = vsub.f32 1.0, %v1981
        %v1983 = vmul.f32 %v1980, %v1982
        %v1984 = vadd.f32 %v1980, %v1983
        %vm1985 = vweird.f32 %v1979
        %vm1986 = vweird.f32 %v1980
        %vm1987 = vmor %vm1985, %vm1986
        %v1988 = vsel %vm1987, %v1980, %v1984
        %v1989 = vand.u32 2147483647, %v1979
        %vm1990 = vcmp.eq.f32.partialorder %v1989, 8.507059e+37
        %v1991 = vand.u32 %v1979, 2147483648
        %v1992 = vor.u32 1.1754944e-38, %v1991
        %v1993 = vsel %vm1990, %v1992, %v1988
        %v1994 = vmul.f32 1.0, %v1993
        %v1995 = vmul.f32 %v1974, %v1781
        %v1996 = vmul.f32 %v1955, %v1975
        %v1997 = vadd.f32 %v1995, %v1996
        %v1998 = vtanh.pop %v1997
        %v1999 = vmul.f32 %v1994, %v1998
        %v2000 = vstv %s1779
        %vm2001 = vcmp.gt.s32.totalorder %v346, %v2000
        %v2002 = vsel %vm2001, 1, 0
        %2003 = vset.pattern.permute.xlu0 0
        %2004 = vperm.xlu0 %2003, %v2002
        %v2005 = vpop.permute.xlu0 %2004
        %vm2006 = vcmp.eq.s32.totalorder %v2005, 1
        %v2007 = vsel %vm2006, %v1997, %v1781
        %2008 = vst [vmem:[#allocation3] sm:$0xff] %v2007
        %v2009 = vsel %vm2006, %v1999, %v1780
        %2010 = vst [vmem:[#allocation2] sm:$0xff] %v2009
        %v2011 = vsel %vm2006, %v1999, 0.0
        %s2012 = smul.u32 %s1778, 8
        %s2013 = scalar_lea.vmem %s327, %s2012 [#allocation7]
        %2014 = vst [vmem:[%s2013] sm:$0xff] %v2011
        %s2015 = smul.u32 %s21, 4294967289
        %s2016 = sadd.s32 %s2015, 7
        %s2017 = sadd.s32 %s352, %s2016
        %v2018 = vld [vmem:[#allocation2] sm:$0xff]
        %v2019 = vld [vmem:[#allocation3] sm:$0xff]
        %s2020 = smul.u32 %s2016, 4
        %s2021 = smul.addr %s2020, 8
        %s2022 = scalar_lea.vmem %s293, %s2021 [#allocation4]
        %v2023 = vld [vmem:[%s2022] sm:$0xff]
        %v2024 = vld [vmem:[%s2022 + $0x8] sm:$0xff]
        %v2025 = vld [vmem:[%s2022 + $0x10] sm:$0xff]
        %v2026 = vld [vmem:[%s2022 + $0x18] sm:$0xff]
        %v2027 = vld [vmem:[%s301] sm:$0xff]
        %v2028 = vld [vmem:[%s301 + $0x8] sm:$0xff]
        %v2029 = vld [vmem:[%s301 + $0x10] sm:$0xff]
        %v2030 = vld [vmem:[%s301 + $0x18] sm:$0xff]
        %v2031 = vld [vmem:[%s301 + $0x20] sm:$0xff]
        %v2032 = vld [vmem:[%s301 + $0x28] sm:$0xff]
        %v2033 = vld [vmem:[%s301 + $0x30] sm:$0xff]
        %v2034 = vld [vmem:[%s301 + $0x38] sm:$0xff]
        %v2035 = vld [vmem:[%s301 + $0x40] sm:$0xff]
        %v2036 = vld [vmem:[%s301 + $0x48] sm:$0xff]
        %v2037 = vld [vmem:[%s301 + $0x50] sm:$0xff]
        %v2038 = vld [vmem:[%s301 + $0x58] sm:$0xff]
        %v2039 = vld [vmem:[%s301 + $0x60] sm:$0xff]
        %v2040 = vld [vmem:[%s301 + $0x68] sm:$0xff]
        %v2041 = vld [vmem:[%s301 + $0x70] sm:$0xff]
        %v2042 = vld [vmem:[%s301 + $0x78] sm:$0xff]
        %v2043 = vld [vmem:[%s301 + $0x80] sm:$0xff]
        %v2044 = vld [vmem:[%s301 + $0x88] sm:$0xff]
        %v2045 = vld [vmem:[%s301 + $0x90] sm:$0xff]
        %v2046 = vld [vmem:[%s301 + $0x98] sm:$0xff]
        %v2047 = vld [vmem:[%s301 + $0xa0] sm:$0xff]
        %v2048 = vld [vmem:[%s301 + $0xa8] sm:$0xff]
        %v2049 = vld [vmem:[%s301 + $0xb0] sm:$0xff]
        %v2050 = vld [vmem:[%s301 + $0xb8] sm:$0xff]
        %v2051 = vld [vmem:[%s301 + $0xc0] sm:$0xff]
        %v2052 = vld [vmem:[%s301 + $0xc8] sm:$0xff]
        %v2053 = vld [vmem:[%s301 + $0xd0] sm:$0xff]
        %v2054 = vld [vmem:[%s301 + $0xd8] sm:$0xff]
        %v2055 = vld [vmem:[%s301 + $0xe0] sm:$0xff]
        %v2056 = vld [vmem:[%s301 + $0xe8] sm:$0xff]
        %v2057 = vld [vmem:[%s301 + $0xf0] sm:$0xff]
        %v2058 = vld [vmem:[%s301 + $0xf8] sm:$0xff]
        %v2059 = vld [vmem:[%s301 + $0x100] sm:$0xff]
        %v2060 = vld [vmem:[%s301 + $0x108] sm:$0xff]
        %v2061 = vld [vmem:[%s301 + $0x110] sm:$0xff]
        %v2062 = vld [vmem:[%s301 + $0x118] sm:$0xff]
        %v2063 = vld [vmem:[%s301 + $0x120] sm:$0xff]
        %v2064 = vld [vmem:[%s301 + $0x128] sm:$0xff]
        %v2065 = vld [vmem:[%s301 + $0x130] sm:$0xff]
        %v2066 = vld [vmem:[%s301 + $0x138] sm:$0xff]
        %v2067 = vld [vmem:[%s301 + $0x140] sm:$0xff]
        %v2068 = vld [vmem:[%s301 + $0x148] sm:$0xff]
        %v2069 = vld [vmem:[%s301 + $0x150] sm:$0xff]
        %v2070 = vld [vmem:[%s301 + $0x158] sm:$0xff]
        %v2071 = vld [vmem:[%s301 + $0x160] sm:$0xff]
        %v2072 = vld [vmem:[%s301 + $0x168] sm:$0xff]
        %v2073 = vld [vmem:[%s301 + $0x170] sm:$0xff]
        %v2074 = vld [vmem:[%s301 + $0x178] sm:$0xff]
        %v2075 = vld [vmem:[%s301 + $0x180] sm:$0xff]
        %v2076 = vld [vmem:[%s301 + $0x188] sm:$0xff]
        %v2077 = vld [vmem:[%s301 + $0x190] sm:$0xff]
        %v2078 = vld [vmem:[%s301 + $0x198] sm:$0xff]
        %v2079 = vld [vmem:[%s301 + $0x1a0] sm:$0xff]
        %v2080 = vld [vmem:[%s301 + $0x1a8] sm:$0xff]
        %v2081 = vld [vmem:[%s301 + $0x1b0] sm:$0xff]
        %v2082 = vld [vmem:[%s301 + $0x1b8] sm:$0xff]
        %v2083 = vld [vmem:[%s301 + $0x1c0] sm:$0xff]
        %v2084 = vld [vmem:[%s301 + $0x1c8] sm:$0xff]
        %v2085 = vld [vmem:[%s301 + $0x1d0] sm:$0xff]
        %v2086 = vld [vmem:[%s301 + $0x1d8] sm:$0xff]
        %v2087 = vld [vmem:[%s301 + $0x1e0] sm:$0xff]
        %v2088 = vld [vmem:[%s301 + $0x1e8] sm:$0xff]
        %v2089 = vld [vmem:[%s301 + $0x1f0] sm:$0xff]
        %v2090 = vld [vmem:[%s301 + $0x1f8] sm:$0xff]
        %2091 = vmatpush.msra.mxu0 %v2087
        %2092 = vmatpush.msra.mxu0 %v2083
        %2093 = vmatpush.msra.mxu0 %v2079
        %2094 = vmatpush.msra.mxu0 %v2075
        %2095 = vmatpush.msra.mxu0 %v2071
        %2096 = vmatpush.msra.mxu0 %v2067
        %2097 = vmatpush.msra.mxu0 %v2063
        %2098 = vmatpush.msra.mxu0 %v2059
        %2099 = vmatpush.msra.mxu0 %v2055
        %2100 = vmatpush.msra.mxu0 %v2051
        %2101 = vmatpush.msra.mxu0 %v2047
        %2102 = vmatpush.msra.mxu0 %v2043
        %2103 = vmatpush.msra.mxu0 %v2039
        %2104 = vmatpush.msra.mxu0 %v2035
        %2105 = vmatpush.msra.mxu0 %v2031
        %2106 = vmatpush.msra.mxu0 %v2027
        %2107 = vmatmul.f32.gmra.mxu0 %v2018
        %v2108 = vpop.f32.mrf.mxu0
        %v2109 = vadd.f32 0.0, %v2108
        %2110 = vdwg.mxu0
        %2111 = vmatpush.msra.mxu0 %v2088
        %2112 = vmatpush.msra.mxu0 %v2084
        %2113 = vmatpush.msra.mxu0 %v2080
        %2114 = vmatpush.msra.mxu0 %v2076
        %2115 = vmatpush.msra.mxu0 %v2072
        %2116 = vmatpush.msra.mxu0 %v2068
        %2117 = vmatpush.msra.mxu0 %v2064
        %2118 = vmatpush.msra.mxu0 %v2060
        %2119 = vmatpush.msra.mxu0 %v2056
        %2120 = vmatpush.msra.mxu0 %v2052
        %2121 = vmatpush.msra.mxu0 %v2048
        %2122 = vmatpush.msra.mxu0 %v2044
        %2123 = vmatpush.msra.mxu0 %v2040
        %2124 = vmatpush.msra.mxu0 %v2036
        %2125 = vmatpush.msra.mxu0 %v2032
        %2126 = vmatpush.msra.mxu0 %v2028
        %2127 = vmatmul.f32.gmra.mxu0 %v2018
        %v2128 = vpop.f32.mrf.mxu0
        %v2129 = vadd.f32 0.0, %v2128
        %2130 = vdwg.mxu0
        %2131 = vmatpush.msra.mxu0 %v2089
        %2132 = vmatpush.msra.mxu0 %v2085
        %2133 = vmatpush.msra.mxu0 %v2081
        %2134 = vmatpush.msra.mxu0 %v2077
        %2135 = vmatpush.msra.mxu0 %v2073
        %2136 = vmatpush.msra.mxu0 %v2069
        %2137 = vmatpush.msra.mxu0 %v2065
        %2138 = vmatpush.msra.mxu0 %v2061
        %2139 = vmatpush.msra.mxu0 %v2057
        %2140 = vmatpush.msra.mxu0 %v2053
        %2141 = vmatpush.msra.mxu0 %v2049
        %2142 = vmatpush.msra.mxu0 %v2045
        %2143 = vmatpush.msra.mxu0 %v2041
        %2144 = vmatpush.msra.mxu0 %v2037
        %2145 = vmatpush.msra.mxu0 %v2033
        %2146 = vmatpush.msra.mxu0 %v2029
        %2147 = vmatmul.f32.gmra.mxu0 %v2018
        %v2148 = vpop.f32.mrf.mxu0
        %v2149 = vadd.f32 0.0, %v2148
        %2150 = vdwg.mxu0
        %2151 = vmatpush.msra.mxu0 %v2090
        %2152 = vmatpush.msra.mxu0 %v2086
        %2153 = vmatpush.msra.mxu0 %v2082
        %2154 = vmatpush.msra.mxu0 %v2078
        %2155 = vmatpush.msra.mxu0 %v2074
        %2156 = vmatpush.msra.mxu0 %v2070
        %2157 = vmatpush.msra.mxu0 %v2066
        %2158 = vmatpush.msra.mxu0 %v2062
        %2159 = vmatpush.msra.mxu0 %v2058
        %2160 = vmatpush.msra.mxu0 %v2054
        %2161 = vmatpush.msra.mxu0 %v2050
        %2162 = vmatpush.msra.mxu0 %v2046
        %2163 = vmatpush.msra.mxu0 %v2042
        %2164 = vmatpush.msra.mxu0 %v2038
        %2165 = vmatpush.msra.mxu0 %v2034
        %2166 = vmatpush.msra.mxu0 %v2030
        %2167 = vmatmul.f32.gmra.mxu0 %v2018
        %v2168 = vpop.f32.mrf.mxu0
        %v2169 = vadd.f32 0.0, %v2168
        %2170 = vdwg.mxu0
        %v2171 = vadd.f32 %v2023, %v2109
        %v2172 = vadd.f32 %v2024, %v2129
        %v2173 = vadd.f32 %v2025, %v2149
        %v2174 = vadd.f32 %v2026, %v2169
        %v2175 = vxor.u32 %v2171, 2147483648
        %v2176 = vmul.f32 %v2175, 1.442695
        %v2177 = vpow.pop %v2176
        %v2178 = vadd.f32 %v2177, 1.0
        %v2179 = vrcp.pop %v2178
        %v2180 = vmul.f32 %v2178, %v2179
        %v2181 = vsub.f32 1.0, %v2180
        %v2182 = vmul.f32 %v2179, %v2181
        %v2183 = vadd.f32 %v2179, %v2182
        %vm2184 = vweird.f32 %v2178
        %vm2185 = vweird.f32 %v2179
        %vm2186 = vmor %vm2184, %vm2185
        %v2187 = vsel %vm2186, %v2179, %v2183
        %v2188 = vand.u32 2147483647, %v2178
        %vm2189 = vcmp.eq.f32.partialorder %v2188, 8.507059e+37
        %v2190 = vand.u32 %v2178, 2147483648
        %v2191 = vor.u32 1.1754944e-38, %v2190
        %v2192 = vsel %vm2189, %v2191, %v2187
        %v2193 = vmul.f32 1.0, %v2192
        %v2194 = vxor.u32 %v2172, 2147483648
        %v2195 = vmul.f32 %v2194, 1.442695
        %v2196 = vpow.pop %v2195
        %v2197 = vadd.f32 %v2196, 1.0
        %v2198 = vrcp.pop %v2197
        %v2199 = vmul.f32 %v2197, %v2198
        %v2200 = vsub.f32 1.0, %v2199
        %v2201 = vmul.f32 %v2198, %v2200
        %v2202 = vadd.f32 %v2198, %v2201
        %vm2203 = vweird.f32 %v2197
        %vm2204 = vweird.f32 %v2198
        %vm2205 = vmor %vm2203, %vm2204
        %v2206 = vsel %vm2205, %v2198, %v2202
        %v2207 = vand.u32 2147483647, %v2197
        %vm2208 = vcmp.eq.f32.partialorder %v2207, 8.507059e+37
        %v2209 = vand.u32 %v2197, 2147483648
        %v2210 = vor.u32 1.1754944e-38, %v2209
        %v2211 = vsel %vm2208, %v2210, %v2206
        %v2212 = vmul.f32 1.0, %v2211
        %v2213 = vtanh.pop %v2173
        %v2214 = vxor.u32 %v2174, 2147483648
        %v2215 = vmul.f32 %v2214, 1.442695
        %v2216 = vpow.pop %v2215
        %v2217 = vadd.f32 %v2216, 1.0
        %v2218 = vrcp.pop %v2217
        %v2219 = vmul.f32 %v2217, %v2218
        %v2220 = vsub.f32 1.0, %v2219
        %v2221 = vmul.f32 %v2218, %v2220
        %v2222 = vadd.f32 %v2218, %v2221
        %vm2223 = vweird.f32 %v2217
        %vm2224 = vweird.f32 %v2218
        %vm2225 = vmor %vm2223, %vm2224
        %v2226 = vsel %vm2225, %v2218, %v2222
        %v2227 = vand.u32 2147483647, %v2217
        %vm2228 = vcmp.eq.f32.partialorder %v2227, 8.507059e+37
        %v2229 = vand.u32 %v2217, 2147483648
        %v2230 = vor.u32 1.1754944e-38, %v2229
        %v2231 = vsel %vm2228, %v2230, %v2226
        %v2232 = vmul.f32 1.0, %v2231
        %v2233 = vmul.f32 %v2212, %v2019
        %v2234 = vmul.f32 %v2193, %v2213
        %v2235 = vadd.f32 %v2233, %v2234
        %v2236 = vtanh.pop %v2235
        %v2237 = vmul.f32 %v2232, %v2236
        %v2238 = vstv %s2017
        %vm2239 = vcmp.gt.s32.totalorder %v346, %v2238
        %v2240 = vsel %vm2239, 1, 0
        %2241 = vset.pattern.permute.xlu0 0
        %2242 = vperm.xlu0 %2241, %v2240
        %v2243 = vpop.permute.xlu0 %2242
        %vm2244 = vcmp.eq.s32.totalorder %v2243, 1
        %v2245 = vsel %vm2244, %v2235, %v2019
        %2246 = vst [vmem:[#allocation3] sm:$0xff] %v2245
        %v2247 = vsel %vm2244, %v2237, %v2018
        %2248 = vst [vmem:[#allocation2] sm:$0xff] %v2247
        %v2249 = vsel %vm2244, %v2237, 0.0
        %s2250 = smul.u32 %s2016, 8
        %s2251 = scalar_lea.vmem %s327, %s2250 [#allocation7]
        %2252 = vst [vmem:[%s2251] sm:$0xff] %v2249
        %s2253 = sand.u32 %s130, 1
        %s2254 = sand.u32 %s130, 1
        %s2255 = smul.addr %s2254, 64
        %s2256 = scalar_lea.vmem [#allocation7], %s2255
        // Predicated region
        $region64: #{encoder_forward.6} parent=50 // pred_check
          %p2257 = pneg %p140
        $region65: #{encoder_forward.6} parent=50 // pred_check_branch
          %2259 = sbr.rel (%p2257) target = $region67
        $region66: #{encoder_forward.6} parent=50 // pred_region
          %s2260 = smul.u32 %s22, 2
          %s2261 = ssub.s32 0, %s2260
          %s2262 = smul.u32 %s21, %s2261
          %s2263 = sadd.s32 %s22, %s2262
          %s2264 = smul.u32 8, %s2263
          %s2265 = smul.addr %s2264, 2
          %s2266 = sadd.s32 %s21, %s2265
          %s2267 = smul.addr %s2266, 8
          %s2268 = scalar_lea.vmem %s3, %s2267
          // Predicated region
          $region68: #{encoder_forward.6} parent=66 // pred_check
            _
          $region69: #{encoder_forward.6} parent=66 // pred_check_branch
            %2270 = sbr.rel (0) target = $region71
          $region70: #{encoder_forward.6} parent=66 // pred_region
            // Predicated region
            $region72: #{encoder_forward.6} parent=70 // pred_check
              _
            $region73: #{encoder_forward.6} parent=70 // pred_check_branch
              %2272 = sbr.rel (0) target = $region75
            $region74: #{encoder_forward.6} parent=70 // pred_region
              // Predicated region
              $region87: #{encoder_forward.6} parent=74 // pred_check
                _
              $region88: #{encoder_forward.6} parent=74 // pred_check_branch
                %2302 = sbr.rel (0) target = $region90
              $region89: #{encoder_forward.6} parent=74 // pred_region
                loop: start=0, step=1, limit=1
                $region91: #{encoder_forward.6} parent=89 // loop_pre_header
                  _
                $region92: #{encoder_forward.6} parent=89 // loop_header
                  %s2304 = sphi 0, %s2308
                  %p2305 = scmp.ge.s32.totalorder %s2304, 1
                  %s2309 = sphi %s2256, %s2256
                  %s2310 = sphi %s2268, %s2268
                $region93: #{encoder_forward.6} parent=89 // loop_header_branch
                  %2307 = sbr.rel (%p2305) target = $region97
                $region94: #{encoder_forward.6} parent=89 // loop_body
                  %v2311 = vld [vmem:[%s2309] sm:$0xff]
                  %2312 = vst [vmem:[%s2310] sm:$0xff] %v2311
                  %v2313 = vld [vmem:[%s2309 + $0x8] sm:$0xff]
                  %2314 = vst [vmem:[%s2310 + $0x10] sm:$0xff] %v2313
                  %v2315 = vld [vmem:[%s2309 + $0x10] sm:$0xff]
                  %2316 = vst [vmem:[%s2310 + $0x20] sm:$0xff] %v2315
                  %v2317 = vld [vmem:[%s2309 + $0x18] sm:$0xff]
                  %2318 = vst [vmem:[%s2310 + $0x30] sm:$0xff] %v2317
                  %v2319 = vld [vmem:[%s2309 + $0x20] sm:$0xff]
                  %2320 = vst [vmem:[%s2310 + $0x40] sm:$0xff] %v2319
                  %v2321 = vld [vmem:[%s2309 + $0x28] sm:$0xff]
                  %2322 = vst [vmem:[%s2310 + $0x50] sm:$0xff] %v2321
                  %v2323 = vld [vmem:[%s2309 + $0x30] sm:$0xff]
                  %2324 = vst [vmem:[%s2310 + $0x60] sm:$0xff] %v2323
                  %v2325 = vld [vmem:[%s2309 + $0x38] sm:$0xff]
                  %2326 = vst [vmem:[%s2310 + $0x70] sm:$0xff] %v2325
                $region95: #{encoder_forward.6} parent=89 // loop_footer
                  %s2308 = sadd.s32 1, %s2304
                $region96: #{encoder_forward.6} parent=89 // loop_footer_branch
                  %2303 = sbr.rel target = $region92
                $region97: #{encoder_forward.6} parent=89 // loop_exit
                  _
              $region90: #{encoder_forward.6} parent=74 // pred_fallthru
                _
              // Predicated region
              $region98: #{encoder_forward.6} parent=74 // pred_check
                _
              $region99: #{encoder_forward.6} parent=74 // pred_check_branch
                %2328 = sbr.rel target = $region101
              $region100: #{encoder_forward.6} parent=74 // pred_region
                _
              $region101: #{encoder_forward.6} parent=74 // pred_fallthru
                _
            $region75: #{encoder_forward.6} parent=70 // pred_fallthru
              _
            // Predicated region
            $region76: #{encoder_forward.6} parent=70 // pred_check
              _
            $region77: #{encoder_forward.6} parent=70 // pred_check_branch
              %2274 = sbr.rel target = $region79
            $region78: #{encoder_forward.6} parent=70 // pred_region
              %s2276 = ssub.s32 256, 1
              loop: start=0, step=1, limit=1
              $region80: #{encoder_forward.6} parent=78 // loop_pre_header
                _
              $region81: #{encoder_forward.6} parent=78 // loop_header
                %s2278 = sphi 0, %s2282
                %p2279 = scmp.ge.s32.totalorder %s2278, 1
                %s2283 = sphi %s2256, %s2256
                %s2284 = sphi %s2268, %s2268
              $region82: #{encoder_forward.6} parent=78 // loop_header_branch
                %2281 = sbr.rel (%p2279) target = $region86
              $region83: #{encoder_forward.6} parent=78 // loop_body
                %v2285 = vld [vmem:[%s2283] sm:%s2276]
                %2286 = vst [vmem:[%s2284] sm:%s2276] %v2285
                %v2287 = vld [vmem:[%s2283 + $0x8] sm:%s2276]
                %2288 = vst [vmem:[%s2284 + $0x10] sm:%s2276] %v2287
                %v2289 = vld [vmem:[%s2283 + $0x10] sm:%s2276]
                %2290 = vst [vmem:[%s2284 + $0x20] sm:%s2276] %v2289
                %v2291 = vld [vmem:[%s2283 + $0x18] sm:%s2276]
                %2292 = vst [vmem:[%s2284 + $0x30] sm:%s2276] %v2291
                %v2293 = vld [vmem:[%s2283 + $0x20] sm:%s2276]
                %2294 = vst [vmem:[%s2284 + $0x40] sm:%s2276] %v2293
                %v2295 = vld [vmem:[%s2283 + $0x28] sm:%s2276]
                %2296 = vst [vmem:[%s2284 + $0x50] sm:%s2276] %v2295
                %v2297 = vld [vmem:[%s2283 + $0x30] sm:%s2276]
                %2298 = vst [vmem:[%s2284 + $0x60] sm:%s2276] %v2297
                %v2299 = vld [vmem:[%s2283 + $0x38] sm:%s2276]
                %2300 = vst [vmem:[%s2284 + $0x70] sm:%s2276] %v2299
              $region84: #{encoder_forward.6} parent=78 // loop_footer
                %s2282 = sadd.s32 1, %s2278
              $region85: #{encoder_forward.6} parent=78 // loop_footer_branch
                %2277 = sbr.rel target = $region81
              $region86: #{encoder_forward.6} parent=78 // loop_exit
                _
            $region79: #{encoder_forward.6} parent=70 // pred_fallthru
              _
          $region71: #{encoder_forward.6} parent=66 // pred_fallthru
            _
          %2329 = vnop
        $region67: #{encoder_forward.6} parent=50 // pred_fallthru
          _
      $region51: #{encoder_forward.6} parent=5 // pred_fallthru
        _
      %p2330 = scmp.le.s32.totalorder 2, %s12
      // Predicated region
      $region102: #{encoder_forward.6} parent=5 // pred_check
        %p2331 = pneg %p2330
      $region103: #{encoder_forward.6} parent=5 // pred_check_branch
        %2333 = sbr.rel (%p2331) target = $region105
      $region104: #{encoder_forward.6} parent=5 // pred_region
        %s2334 = ssub.s32 %s12, 2
        // Predicated region
        $region106: #{encoder_forward.6} parent=104 // pred_check
          %p2335 = pneg %p146
        $region107: #{encoder_forward.6} parent=104 // pred_check_branch
          %2337 = sbr.rel (%p2335) target = $region109
        $region108: #{encoder_forward.6} parent=104 // pred_region
          %s2338 = sand.u32 %s131, 1
          %s2339 = sand.u32 %s131, 1
          %s2340 = smul.addr %s2339, 64
          %s2341 = scalar_lea.vmem [#allocation7], %s2340
        $region109: #{encoder_forward.6} parent=104 // pred_fallthru
          _
      $region105: #{encoder_forward.6} parent=5 // pred_fallthru
        _
    $region6: #{encoder_forward.6} parent=1 // loop_footer
      %s16 = sadd.s32 1, %s12
    $region7: #{encoder_forward.6} parent=1 // loop_footer_branch
      %11 = sbr.rel target = $region3
    $region8: #{encoder_forward.6} parent=1 // loop_exit
      _
    %2342 = vsyncpa [#allocation6], 1
    %s2343 = scalar_lea.sflag [#allocation6], 1
    %2344 = vsyncpa %s2343, 1

</llo_original>
